<compile_context>
chip_gen: v7x
topology: tpu7x:2x2x1
jax: 0.10.0
libtpu: 0.0.40
codegen_flags: <defaults>
</compile_context>

<pallas_src>
import numpy as np
import jax
import jax.numpy as jnp
from jax.experimental import pallas as pl
from jax.experimental.pallas import tpu as pltpu


def _round_up(a, m):
    return ((a + m - 1) // m) * m


def _nbytes(shape, dtype):
    return int(np.prod(shape)) * int(np.dtype(dtype).itemsize)


# ----------------------------- in-kernel math ------------------------------

def _erf_approx(x):
    # Abramowitz & Stegun 7.1.26 rational approximation, |err| <= 1.5e-7.
    # TODO(synk): lax.erf has no guaranteed Mosaic lowering; this approximates
    # nn.GELU()'s exact erf-GELU using exp only.  The EUP approx reciprocal
    # trades a little accuracy for a free VLIW slot (set approx=False if
    # closer-to-torch numerics are required).
    a1, a2, a3, a4, a5 = (0.254829592, -0.284496736, 1.421413741,
                          -1.453152027, 1.061405429)
    p = 0.3275911
    sign = jnp.where(x >= 0.0, 1.0, -1.0)
    ax = jnp.abs(x)
    t = pl.reciprocal(1.0 + p * ax, approx=True)      # EUP, not a VALU divide
    poly = ((((a5 * t + a4) * t + a3) * t + a2) * t + a1) * t
    return sign * (1.0 - poly * jnp.exp(-ax * ax))


def _gelu_exact(x):
    # 0.5 * x * (1 + erf(x / sqrt(2)))  == torch.nn.GELU() (approximate='none')
    return 0.5 * x * (1.0 + _erf_approx(x * np.float32(1.0 / np.sqrt(2.0))))


# ------------------------------ Pallas kernels -------------------------------

def _matmul_bias_gelu_kernel(x_ref, w_ref, b_ref, o_ref):
    # x_ref: (tm, K) bf16 patches    w_ref: (K, Cout) bf16 (resident)
    # b_ref: (1, Cout) f32           o_ref: (tm, Cout) f32
    acc = jnp.dot(x_ref[...], w_ref[...], preferred_element_type=jnp.float32)
    acc = acc + b_ref[...]
    o_ref[...] = _gelu_exact(acc).astype(o_ref.dtype)


def _make_head_kernel(k, th, Wo, Cout):
    """k x k stride-1 conv: W-taps pre-gathered in the slab's last dim, the k
    H-taps are contiguous sublane slices of the (rows*W)-flattened slab."""
    def kernel(x_ref, w_ref, b_ref, o_ref):
        # x_ref: (1, (th+k-1)*Wo, k*Cin) bf16 halo slab, rows flattened (h, w)
        # w_ref: (k, k*Cin, Cout) bf16   b_ref: (1, Cout) f32
        # o_ref: (1, th*Wo, Cout) f32
        acc = jnp.zeros((th * Wo, Cout), jnp.float32)
        for kh in range(k):
            tap = x_ref[0, kh * Wo:(kh + th) * Wo, :]       # (th*Wo, k*Cin)
            acc = acc + jnp.dot(tap, w_ref[kh],
                                preferred_element_type=jnp.float32)
        acc = acc + b_ref[...]
        o_ref[0] = _gelu_exact(acc).astype(o_ref.dtype)
    return kernel


# ------------------------- fused matmul+bias+GELU ---------------------------

def _fused_matmul_bias_gelu(patches, w, b, out_dtype, tm_target=512):
    """patches: (rows, K) bf16; w: (K, Cout) bf16; b: (1, Cout) f32."""
    rows, Kd = patches.shape
    Cout = w.shape[-1]

    # Fixed, resolution-independent row tile; aim for >= 2 grid steps so the
    # pipeline and (on v7x) both TensorCores are used.
    tm = tm_target
    if rows < 2 * tm:
        tm = max(16, _round_up(-(-rows // 2), 16))
    rows_p = _round_up(rows, tm)
    if rows_p != rows:
        patches = jnp.pad(patches, ((0, rows_p - rows), (0, 0)))
    grid = (rows_p // tm,)

    in_blk = tm * Kd * 2                     # bf16
    out_blk = tm * Cout * np.dtype(out_dtype).itemsize
    vmem = int(2 * (in_blk + out_blk) + _nbytes(w.shape, jnp.bfloat16)
               + _nbytes(b.shape, jnp.float32) + (2 << 20))
    cost = pl.CostEstimate(
        flops=int(2 * rows_p * Kd * Cout),
        transcendentals=int(rows_p * Cout),
        bytes_accessed=int(_nbytes((rows_p, Kd), jnp.bfloat16)
                           + _nbytes(w.shape, jnp.bfloat16)
                           + _nbytes(b.shape, jnp.float32)
                           + _nbytes((rows_p, Cout), out_dtype)))

    out = pl.pallas_call(
        _matmul_bias_gelu_kernel,
        out_shape=jax.ShapeDtypeStruct((rows_p, Cout), out_dtype),
        grid=grid,
        in_specs=[pl.BlockSpec((tm, Kd), lambda i: (i, 0)),
                  pl.BlockSpec((Kd, Cout), lambda i: (0, 0)),   # weight resident
                  pl.BlockSpec((1, Cout), lambda i: (0, 0))],
        # TODO(synk): Cout=64 -> half-lane (masked) stores; packing row pairs
        # into 128 lanes would need an in-kernel relayout (XLU copies), skipped.
        out_specs=pl.BlockSpec((tm, Cout), lambda i: (i, 0)),
        compiler_params=pltpu.CompilerParams(
            dimension_semantics=("parallel",), vmem_limit_bytes=vmem),
        cost_estimate=cost,
    )(patches, w, b)
    return out if rows_p == rows else out[:rows]


# ------------------------------- head conv -----------------------------------

def _pick_head_row_tile(Ho, Wo, target_rows=4096):
    if Ho % 8 != 0:
        return Ho                                  # tiny/odd heights: one block
    cap = max(target_rows, 8 * Wo)
    best, th = 8, 8
    while th <= Ho:
        if Ho % th == 0 and th * Wo <= cap:
            best = th
        th += 8
    return best


def head_conv2d_gelu_bhwc(x, w, b, k):
    """k x k stride-1 'same' conv + GELU.  x: (B, H, W, Cin) f32,
    w: (k, k*Cin, Cout) f32 (kh major, (kw, ci) flattened), b: (1, Cout)."""
    B, H, W, Cin = x.shape
    Cout = w.shape[-1]
    pad, halo = k // 2, k - 1
    Ho, Wo = H, W

    xpad = jnp.pad(x, ((0, 0), (pad, pad), (pad, pad), (0, 0)))     # (B,Hp,Wp,C)
    # Cheap W-direction im2col only (k*Cin columns); the H taps are handled
    # in-kernel, so no k*k-sized patches array ever hits HBM.
    xw = jnp.concatenate([xpad[:, :, kw:kw + Wo, :] for kw in range(k)],
                         axis=-1)                                   # (B,Hp,Wo,kC)

    th = _pick_head_row_tile(Ho, Wo)
    nrb = Ho // th
    if nrb == 1:
        slab = xw[:, None]                                          # (B,1,Hp,Wo,kC)
    else:
        slab = jnp.stack([xw[:, r * th:r * th + th + halo]
                          for r in range(nrb)], axis=1)             # halo'd blocks
    # Flatten (row, w) so each kh tap is a contiguous, aligned sublane slice.
    slab = slab.reshape(B * nrb, (th + halo) * Wo, k * Cin).astype(jnp.bfloat16)
    w_bf = w.astype(jnp.bfloat16)

    slab_blk = (th + halo) * Wo * k * Cin * 2
    out_blk = th * Wo * Cout * 4
    vmem = int(2 * (slab_blk + out_blk) + out_blk                   # + f32 acc
               + _nbytes(w_bf.shape, jnp.bfloat16)
               + _nbytes(b.shape, jnp.float32) + (2 << 20))
    cost = pl.CostEstimate(
        flops=int(2 * B * Ho * Wo * k * k * Cin * Cout),
        transcendentals=int(B * Ho * Wo * Cout),
        bytes_accessed=int(_nbytes(slab.shape, jnp.bfloat16)
                           + _nbytes(w_bf.shape, jnp.bfloat16)
                           + _nbytes(b.shape, jnp.float32)
                           + _nbytes((B, Ho, Wo, Cout), x.dtype)))

    out = pl.pallas_call(
        _make_head_kernel(k, th, Wo, Cout),
        out_shape=jax.ShapeDtypeStruct((B * nrb, th * Wo, Cout), x.dtype),
        grid=(B * nrb,),
        in_specs=[pl.BlockSpec((1, (th + halo) * Wo, k * Cin),
                               lambda i: (i, 0, 0)),
                  pl.BlockSpec((k, k * Cin, Cout), lambda i: (0, 0, 0)),
                  pl.BlockSpec((1, Cout), lambda i: (0, 0))],
        out_specs=pl.BlockSpec((1, th * Wo, Cout), lambda i: (i, 0, 0)),
        compiler_params=pltpu.CompilerParams(
            dimension_semantics=("parallel",), vmem_limit_bytes=vmem),
        cost_estimate=cost,
    )(slab, w_bf, b)
    return out.reshape(B, Ho, Wo, Cout)


# ------------------------------- body convs ----------------------------------

def body_conv2d_gelu_bhwc(x, w_flat, b, s):
    """Non-overlapping s x s / stride-s conv + GELU (stride == kernel).
    x: (B, H, W, C); w_flat: (s*s*C, Cout) in (kh, kw, ci) order; b: (1, Cout)."""
    B, H, W, C = x.shape
    Cout = w_flat.shape[-1]
    Ho, Wo = H // s, W // s
    # space-to-depth: pure relayout, no tap duplication, ordering (kh, kw, c)
    patches = (x.reshape(B, Ho, s, Wo, s, C)
                 .transpose(0, 1, 3, 2, 4, 5)
                 .reshape(B * Ho * Wo, s * s * C)
                 .astype(jnp.bfloat16))
    out = _fused_matmul_bias_gelu(patches, w_flat.astype(jnp.bfloat16), b,
                                  x.dtype)
    return out.reshape(B, Ho, Wo, Cout)


# ------------------------------ Encoder forward ------------------------------

def encoder_forward(x_ncdhw, params, kernel_size, stride_list):
    """Mirrors Encoder.forward: returns key_feature_list[::-1] in NCDHW."""
    N, C, D, H, W = x_ncdhw.shape
    key_feature_list = [x_ncdhw]

    # NCDHW -> BHWC (depth kernel is 1 everywhere, so depth folds into batch)
    xb = jnp.transpose(x_ncdhw, (0, 2, 3, 4, 1)).reshape(N * D, H, W, C)

    # head: Conv3d(3, 64, (1,k,k), stride 1, pad (0,k//2,k//2)) + GELU
    xb = head_conv2d_gelu_bhwc(xb, params["head_w"], params["head_b"],
                               kernel_size)

    # body: Conv3d(64, 64, (1,s,s), stride (1,s,s), pad 0) + GELU per stage
    for i, s in enumerate(stride_list):
        xb = body_conv2d_gelu_bhwc(xb, params["body_w"][i],
                                   params["body_b"][i], s)
        Bc, Hc, Wc, Cc = xb.shape
        feat = jnp.transpose(xb.reshape(N, D, Hc, Wc, Cc), (0, 4, 1, 2, 3))
        key_feature_list.append(feat)                       # NCDHW

    return key_feature_list[::-1]


# ------------------------------- param setup ---------------------------------

def init_params(key, kernel_size, stride_list):
    """Deterministic synthetic weights with PyTorch Conv3d shapes, converted to
    the flattened layouts used by the kernels."""
    n_keys = 2 + 2 * len(stride_list)
    keys = jax.random.split(key, n_keys)

    # head: weight (64, 3, 1, k, k), bias (64,)
    w_h = jax.random.normal(keys[0], (64, 3, 1, kernel_size, kernel_size),
                            jnp.float32) * 0.1
    b_h = jax.random.normal(keys[1], (64,), jnp.float32) * 0.1
    # (Cout, Cin, kh, kw) -> (kh, kw, Cin, Cout) -> (kh, kw*Cin, Cout)
    head_w = jnp.transpose(w_h[:, :, 0], (2, 3, 1, 0)).reshape(
        kernel_size, kernel_size * 3, 64)

    body_w, body_b = [], []
    for i, s in enumerate(stride_list):
        w = jax.random.normal(keys[2 + 2 * i], (64, 64, 1, s, s),
                              jnp.float32) * 0.05
        b = jax.random.normal(keys[3 + 2 * i], (64,), jnp.float32) * 0.05
        # (Cout, Cin, kh, kw) -> (kh, kw, Cin, Cout) -> (kh*kw*Cin, Cout)
        body_w.append(jnp.transpose(w[:, :, 0], (2, 3, 1, 0)).reshape(
            s * s * 64, 64))
        body_b.append(b.reshape(1, 64))

    return {"head_w": head_w, "head_b": b_h.reshape(1, 64),
            "body_w": body_w, "body_b": body_b}


# ----------------------------------- main ------------------------------------

if __name__ == "__main__":
    kernel_size = 3
    stride_list = [2, 2]          # two downsampling body stages
    N, C, D, H, W = 2, 3, 2, 16, 16

    key = jax.random.PRNGKey(0)
    kx, kp = jax.random.split(key)
    x = jax.random.normal(kx, (N, C, D, H, W), jnp.float32)
    params = init_params(kp, kernel_size, stride_list)

    fwd = jax.jit(lambda xx, pp: encoder_forward(xx, pp, kernel_size,
                                                 tuple(stride_list)))
    feats = fwd(x, params)
    feats = [jax.block_until_ready(f) for f in feats]

    expected = [(N, 64, D, H // 4, W // 4), (N, 64, D, H // 2, W // 2),
                (N, C, D, H, W)]
    assert [tuple(f.shape) for f in feats] == expected, \
        [tuple(f.shape) for f in feats]
    assert all(bool(jnp.all(jnp.isfinite(f))) for f in feats)

    print("KERNEL_OK")
</pallas_src>

<mosaic_0001>
module attributes {stable_mosaic.version = 11 : i64} {
  func.func @kernel(%arg0: i32, %arg1: memref<1x288x9xbf16, #tpu.memory_space<vmem>>, %arg2: memref<3x9x64xbf16, #tpu.memory_space<vmem>>, %arg3: memref<1x64xf32, #tpu.memory_space<vmem>>, %arg4: memref<1x256x64xf32, #tpu.memory_space<vmem>>) attributes {dimension_semantics = [#tpu.dimension_semantics<parallel>], iteration_bounds = array<i64: 4>, scalar_prefetch = 0 : i64, scratch_operands = 0 : i64, tpu.core_type = #tpu.core_type<tc>, window_params = [{transform_indices = @transform_0, window_bounds = array<i64: 1, 288, 9>}, {pipeline_mode = #tpu.pipeline_mode<synchronous>, transform_indices = @transform_1, window_bounds = array<i64: 3, 9, 64>}, {pipeline_mode = #tpu.pipeline_mode<synchronous>, transform_indices = @transform_2, window_bounds = array<i64: 1, 64>}, {transform_indices = @transform_3, window_bounds = array<i64: 1, 256, 64>}]} {
    %cst = arith.constant 0.000000e+00 : f32
    %0 = vector.broadcast %cst : f32 to vector<256x64xf32>
    %c0 = arith.constant 0 : index
    %c0_0 = arith.constant 0 : index
    %c0_1 = arith.constant 0 : index
    %1 = vector.load %arg1[%c0, %c0_0, %c0_1] : memref<1x288x9xbf16, #tpu.memory_space<vmem>>, vector<1x256x9xbf16>
    %2 = vector.shape_cast %1 : vector<1x256x9xbf16> to vector<256x9xbf16>
    %c0_2 = arith.constant 0 : index
    %c0_3 = arith.constant 0 : index
    %c0_4 = arith.constant 0 : index
    %3 = vector.load %arg2[%c0_2, %c0_3, %c0_4] : memref<3x9x64xbf16, #tpu.memory_space<vmem>>, vector<1x9x64xbf16>
    %4 = vector.shape_cast %3 : vector<1x9x64xbf16> to vector<9x64xbf16>
    %cst_5 = arith.constant dense<0.000000e+00> : vector<256x64xf32>
    %5 = tpu.matmul %2, %4, %cst_5 {dimension_numbers = #tpu.dot_dimension_numbers<[1], [0], [0], [1], [0, 0, 1, 1], [], []>} : vector<256x9xbf16>, vector<9x64xbf16>, vector<256x64xf32> -> vector<256x64xf32>
    %6 = arith.addf %0, %5 : vector<256x64xf32>
    %c0_6 = arith.constant 0 : index
    %c16 = arith.constant 16 : index
    %c0_7 = arith.constant 0 : index
    %7 = vector.load %arg1[%c0_6, %c16, %c0_7] : memref<1x288x9xbf16, #tpu.memory_space<vmem>>, vector<1x256x9xbf16>
    %8 = vector.shape_cast %7 : vector<1x256x9xbf16> to vector<256x9xbf16>
    %c1 = arith.constant 1 : index
    %c0_8 = arith.constant 0 : index
    %c0_9 = arith.constant 0 : index
    %9 = vector.load %arg2[%c1, %c0_8, %c0_9] : memref<3x9x64xbf16, #tpu.memory_space<vmem>>, vector<1x9x64xbf16>
    %10 = vector.shape_cast %9 : vector<1x9x64xbf16> to vector<9x64xbf16>
    %cst_10 = arith.constant dense<0.000000e+00> : vector<256x64xf32>
    %11 = tpu.matmul %8, %10, %cst_10 {dimension_numbers = #tpu.dot_dimension_numbers<[1], [0], [0], [1], [0, 0, 1, 1], [], []>} : vector<256x9xbf16>, vector<9x64xbf16>, vector<256x64xf32> -> vector<256x64xf32>
    %12 = arith.addf %6, %11 : vector<256x64xf32>
    %c0_11 = arith.constant 0 : index
    %c32 = arith.constant 32 : index
    %c0_12 = arith.constant 0 : index
    %13 = vector.load %arg1[%c0_11, %c32, %c0_12] : memref<1x288x9xbf16, #tpu.memory_space<vmem>>, vector<1x256x9xbf16>
    %14 = vector.shape_cast %13 : vector<1x256x9xbf16> to vector<256x9xbf16>
    %c2 = arith.constant 2 : index
    %c0_13 = arith.constant 0 : index
    %c0_14 = arith.constant 0 : index
    %15 = vector.load %arg2[%c2, %c0_13, %c0_14] : memref<3x9x64xbf16, #tpu.memory_space<vmem>>, vector<1x9x64xbf16>
    %16 = vector.shape_cast %15 : vector<1x9x64xbf16> to vector<9x64xbf16>
    %cst_15 = arith.constant dense<0.000000e+00> : vector<256x64xf32>
    %17 = tpu.matmul %14, %16, %cst_15 {dimension_numbers = #tpu.dot_dimension_numbers<[1], [0], [0], [1], [0, 0, 1, 1], [], []>} : vector<256x9xbf16>, vector<9x64xbf16>, vector<256x64xf32> -> vector<256x64xf32>
    %18 = arith.addf %12, %17 : vector<256x64xf32>
    %c0_16 = arith.constant 0 : index
    %c0_17 = arith.constant 0 : index
    %19 = vector.load %arg3[%c0_16, %c0_17] : memref<1x64xf32, #tpu.memory_space<vmem>>, vector<1x64xf32>
    %20 = vector.broadcast %19 : vector<1x64xf32> to vector<256x64xf32>
    %21 = arith.addf %18, %20 : vector<256x64xf32>
    %cst_18 = arith.constant 5.000000e-01 : f32
    %22 = vector.broadcast %cst_18 : f32 to vector<256x64xf32>
    %23 = arith.mulf %22, %21 : vector<256x64xf32>
    %cst_19 = arith.constant 0.707106769 : f32
    %24 = vector.broadcast %cst_19 : f32 to vector<256x64xf32>
    %25 = arith.mulf %21, %24 : vector<256x64xf32>
    %cst_20 = arith.constant 0.000000e+00 : f32
    %26 = vector.broadcast %cst_20 : f32 to vector<256x64xf32>
    %27 = arith.cmpf oge, %25, %26 : vector<256x64xf32>
    %cst_21 = arith.constant 1.000000e+00 : f32
    %cst_22 = arith.constant -1.000000e+00 : f32
    %28 = vector.broadcast %cst_21 : f32 to vector<256x64xf32>
    %29 = vector.broadcast %cst_22 : f32 to vector<256x64xf32>
    %30 = arith.select %27, %28, %29 : vector<256x64xi1>, vector<256x64xf32>
    %31 = math.absf %25 : vector<256x64xf32>
    %cst_23 = arith.constant 0.327591091 : f32
    %32 = vector.broadcast %cst_23 : f32 to vector<256x64xf32>
    %33 = arith.mulf %32, %31 : vector<256x64xf32>
    %cst_24 = arith.constant 1.000000e+00 : f32
    %34 = vector.broadcast %cst_24 : f32 to vector<256x64xf32>
    %35 = arith.addf %34, %33 : vector<256x64xf32>
    %36 = tpu.reciprocal %35 {approx = true} : vector<256x64xf32> -> vector<256x64xf32>
    %cst_25 = arith.constant 1.06140542 : f32
    %37 = vector.broadcast %cst_25 : f32 to vector<256x64xf32>
    %38 = arith.mulf %37, %36 : vector<256x64xf32>
    %cst_26 = arith.constant -1.45315206 : f32
    %39 = vector.broadcast %cst_26 : f32 to vector<256x64xf32>
    %40 = arith.addf %38, %39 : vector<256x64xf32>
    %41 = arith.mulf %40, %36 : vector<256x64xf32>
    %cst_27 = arith.constant 1.42141378 : f32
    %42 = vector.broadcast %cst_27 : f32 to vector<256x64xf32>
    %43 = arith.addf %41, %42 : vector<256x64xf32>
    %44 = arith.mulf %43, %36 : vector<256x64xf32>
    %cst_28 = arith.constant -0.284496725 : f32
    %45 = vector.broadcast %cst_28 : f32 to vector<256x64xf32>
    %46 = arith.addf %44, %45 : vector<256x64xf32>
    %47 = arith.mulf %46, %36 : vector<256x64xf32>
    %cst_29 = arith.constant 0.254829586 : f32
    %48 = vector.broadcast %cst_29 : f32 to vector<256x64xf32>
    %49 = arith.addf %47, %48 : vector<256x64xf32>
    %50 = arith.mulf %49, %36 : vector<256x64xf32>
    %cst_30 = arith.constant 0.000000e+00 : f32
    %51 = vector.broadcast %cst_30 : f32 to vector<256x64xf32>
    %52 = arith.subf %51, %31 : vector<256x64xf32>
    %53 = arith.mulf %52, %31 : vector<256x64xf32>
    %54 = math.exp %53 : vector<256x64xf32>
    %55 = arith.mulf %50, %54 : vector<256x64xf32>
    %cst_31 = arith.constant 1.000000e+00 : f32
    %56 = vector.broadcast %cst_31 : f32 to vector<256x64xf32>
    %57 = arith.subf %56, %55 : vector<256x64xf32>
    %58 = arith.mulf %30, %57 : vector<256x64xf32>
    %cst_32 = arith.constant 1.000000e+00 : f32
    %59 = vector.broadcast %cst_32 : f32 to vector<256x64xf32>
    %60 = arith.addf %59, %58 : vector<256x64xf32>
    %61 = arith.mulf %23, %60 : vector<256x64xf32>
    %c0_33 = arith.constant 0 : index
    %c0_34 = arith.constant 0 : index
    %c0_35 = arith.constant 0 : index
    %62 = vector.load %arg4[%c0_33, %c0_34, %c0_35] : memref<1x256x64xf32, #tpu.memory_space<vmem>>, vector<1x256x64xf32>
    %63 = vector.shape_cast %62 : vector<1x256x64xf32> to vector<256x64xf32>
    %64 = vector.shape_cast %61 : vector<256x64xf32> to vector<1x256x64xf32>
    tpu.vector_store %arg4[%c0_33, %c0_34, %c0_35], %64 {strides = array<i32>} : memref<1x256x64xf32, #tpu.memory_space<vmem>>, vector<1x256x64xf32>,
    return
  }
  func.func @transform_0(%arg0: i32) -> (i32, i32, i32) {
    %c0_i32 = arith.constant 0 : i32
    %c0_i32_0 = arith.constant 0 : i32
    %c0_i32_1 = arith.constant 0 : i32
    return %arg0, %c0_i32, %c0_i32_0 : i32, i32, i32
  }
  func.func @transform_1(%arg0: i32) -> (i32, i32, i32) {
    %c0_i32 = arith.constant 0 : i32
    %c0_i32_0 = arith.constant 0 : i32
    %c0_i32_1 = arith.constant 0 : i32
    %c0_i32_2 = arith.constant 0 : i32
    return %c0_i32, %c0_i32_0, %c0_i32_1 : i32, i32, i32
  }
  func.func @transform_2(%arg0: i32) -> (i32, i32) {
    %c0_i32 = arith.constant 0 : i32
    %c0_i32_0 = arith.constant 0 : i32
    %c0_i32_1 = arith.constant 0 : i32
    return %c0_i32, %c0_i32_0 : i32, i32
  }
  func.func @transform_3(%arg0: i32) -> (i32, i32, i32) {
    %c0_i32 = arith.constant 0 : i32
    %c0_i32_0 = arith.constant 0 : i32
    %c0_i32_1 = arith.constant 0 : i32
    return %arg0, %c0_i32, %c0_i32_0 : i32, i32, i32
  }
}

module attributes {stable_mosaic.version = 11 : i64} {
  func.func @_matmul_bias_gelu_kernel(%arg0: i32, %arg1: memref<128x256xbf16, #tpu.memory_space<vmem>>, %arg2: memref<256x64xbf16, #tpu.memory_space<vmem>>, %arg3: memref<1x64xf32, #tpu.memory_space<vmem>>, %arg4: memref<128x64xf32, #tpu.memory_space<vmem>>) attributes {dimension_semantics = [#tpu.dimension_semantics<parallel>], iteration_bounds = array<i64: 2>, scalar_prefetch = 0 : i64, scratch_operands = 0 : i64, tpu.core_type = #tpu.core_type<tc>, window_params = [{transform_indices = @transform_0, window_bounds = array<i64: 128, 256>}, {pipeline_mode = #tpu.pipeline_mode<synchronous>, transform_indices = @transform_1, window_bounds = array<i64: 256, 64>}, {pipeline_mode = #tpu.pipeline_mode<synchronous>, transform_indices = @transform_2, window_bounds = array<i64: 1, 64>}, {transform_indices = @transform_3, window_bounds = array<i64: 128, 64>}]} {
    %c0 = arith.constant 0 : index
    %c0_0 = arith.constant 0 : index
    %0 = vector.load %arg1[%c0, %c0_0] : memref<128x256xbf16, #tpu.memory_space<vmem>>, vector<128x256xbf16>
    %c0_1 = arith.constant 0 : index
    %c0_2 = arith.constant 0 : index
    %1 = vector.load %arg2[%c0_1, %c0_2] : memref<256x64xbf16, #tpu.memory_space<vmem>>, vector<256x64xbf16>
    %cst = arith.constant dense<0.000000e+00> : vector<128x64xf32>
    %2 = tpu.matmul %0, %1, %cst {dimension_numbers = #tpu.dot_dimension_numbers<[1], [0], [0], [1], [0, 0, 1, 1], [], []>} : vector<128x256xbf16>, vector<256x64xbf16>, vector<128x64xf32> -> vector<128x64xf32>
    %c0_3 = arith.constant 0 : index
    %c0_4 = arith.constant 0 : index
    %3 = vector.load %arg3[%c0_3, %c0_4] : memref<1x64xf32, #tpu.memory_space<vmem>>, vector<1x64xf32>
    %4 = vector.broadcast %3 : vector<1x64xf32> to vector<128x64xf32>
    %5 = arith.addf %2, %4 : vector<128x64xf32>
    %cst_5 = arith.constant 5.000000e-01 : f32
    %6 = vector.broadcast %cst_5 : f32 to vector<128x64xf32>
    %7 = arith.mulf %6, %5 : vector<128x64xf32>
    %cst_6 = arith.constant 0.707106769 : f32
    %8 = vector.broadcast %cst_6 : f32 to vector<128x64xf32>
    %9 = arith.mulf %5, %8 : vector<128x64xf32>
    %cst_7 = arith.constant 0.000000e+00 : f32
    %10 = vector.broadcast %cst_7 : f32 to vector<128x64xf32>
    %11 = arith.cmpf oge, %9, %10 : vector<128x64xf32>
    %cst_8 = arith.constant 1.000000e+00 : f32
    %cst_9 = arith.constant -1.000000e+00 : f32
    %12 = vector.broadcast %cst_8 : f32 to vector<128x64xf32>
    %13 = vector.broadcast %cst_9 : f32 to vector<128x64xf32>
    %14 = arith.select %11, %12, %13 : vector<128x64xi1>, vector<128x64xf32>
    %15 = math.absf %9 : vector<128x64xf32>
    %cst_10 = arith.constant 0.327591091 : f32
    %16 = vector.broadcast %cst_10 : f32 to vector<128x64xf32>
    %17 = arith.mulf %16, %15 : vector<128x64xf32>
    %cst_11 = arith.constant 1.000000e+00 : f32
    %18 = vector.broadcast %cst_11 : f32 to vector<128x64xf32>
    %19 = arith.addf %18, %17 : vector<128x64xf32>
    %20 = tpu.reciprocal %19 {approx = true} : vector<128x64xf32> -> vector<128x64xf32>
    %cst_12 = arith.constant 1.06140542 : f32
    %21 = vector.broadcast %cst_12 : f32 to vector<128x64xf32>
    %22 = arith.mulf %21, %20 : vector<128x64xf32>
    %cst_13 = arith.constant -1.45315206 : f32
    %23 = vector.broadcast %cst_13 : f32 to vector<128x64xf32>
    %24 = arith.addf %22, %23 : vector<128x64xf32>
    %25 = arith.mulf %24, %20 : vector<128x64xf32>
    %cst_14 = arith.constant 1.42141378 : f32
    %26 = vector.broadcast %cst_14 : f32 to vector<128x64xf32>
    %27 = arith.addf %25, %26 : vector<128x64xf32>
    %28 = arith.mulf %27, %20 : vector<128x64xf32>
    %cst_15 = arith.constant -0.284496725 : f32
    %29 = vector.broadcast %cst_15 : f32 to vector<128x64xf32>
    %30 = arith.addf %28, %29 : vector<128x64xf32>
    %31 = arith.mulf %30, %20 : vector<128x64xf32>
    %cst_16 = arith.constant 0.254829586 : f32
    %32 = vector.broadcast %cst_16 : f32 to vector<128x64xf32>
    %33 = arith.addf %31, %32 : vector<128x64xf32>
    %34 = arith.mulf %33, %20 : vector<128x64xf32>
    %cst_17 = arith.constant 0.000000e+00 : f32
    %35 = vector.broadcast %cst_17 : f32 to vector<128x64xf32>
    %36 = arith.subf %35, %15 : vector<128x64xf32>
    %37 = arith.mulf %36, %15 : vector<128x64xf32>
    %38 = math.exp %37 : vector<128x64xf32>
    %39 = arith.mulf %34, %38 : vector<128x64xf32>
    %cst_18 = arith.constant 1.000000e+00 : f32
    %40 = vector.broadcast %cst_18 : f32 to vector<128x64xf32>
    %41 = arith.subf %40, %39 : vector<128x64xf32>
    %42 = arith.mulf %14, %41 : vector<128x64xf32>
    %cst_19 = arith.constant 1.000000e+00 : f32
    %43 = vector.broadcast %cst_19 : f32 to vector<128x64xf32>
    %44 = arith.addf %43, %42 : vector<128x64xf32>
    %45 = arith.mulf %7, %44 : vector<128x64xf32>
    %c0_20 = arith.constant 0 : index
    %c0_21 = arith.constant 0 : index
    %46 = vector.load %arg4[%c0_20, %c0_21] : memref<128x64xf32, #tpu.memory_space<vmem>>, vector<128x64xf32>
    tpu.vector_store %arg4[%c0_20, %c0_21], %45 {strides = array<i32>} : memref<128x64xf32, #tpu.memory_space<vmem>>, vector<128x64xf32>,
    return
  }
  func.func @transform_0(%arg0: i32) -> (i32, i32) {
    %c0_i32 = arith.constant 0 : i32
    %c0_i32_0 = arith.constant 0 : i32
    return %arg0, %c0_i32 : i32, i32
  }
  func.func @transform_1(%arg0: i32) -> (i32, i32) {
    %c0_i32 = arith.constant 0 : i32
    %c0_i32_0 = arith.constant 0 : i32
    %c0_i32_1 = arith.constant 0 : i32
    return %c0_i32, %c0_i32_0 : i32, i32
  }
  func.func @transform_2(%arg0: i32) -> (i32, i32) {
    %c0_i32 = arith.constant 0 : i32
    %c0_i32_0 = arith.constant 0 : i32
    %c0_i32_1 = arith.constant 0 : i32
    return %c0_i32, %c0_i32_0 : i32, i32
  }
  func.func @transform_3(%arg0: i32) -> (i32, i32) {
    %c0_i32 = arith.constant 0 : i32
    %c0_i32_0 = arith.constant 0 : i32
    return %arg0, %c0_i32 : i32, i32
  }
}

module attributes {stable_mosaic.version = 11 : i64} {
  func.func @_matmul_bias_gelu_kernel(%arg0: i32, %arg1: memref<32x256xbf16, #tpu.memory_space<vmem>>, %arg2: memref<256x64xbf16, #tpu.memory_space<vmem>>, %arg3: memref<1x64xf32, #tpu.memory_space<vmem>>, %arg4: memref<32x64xf32, #tpu.memory_space<vmem>>) attributes {dimension_semantics = [#tpu.dimension_semantics<parallel>], iteration_bounds = array<i64: 2>, scalar_prefetch = 0 : i64, scratch_operands = 0 : i64, tpu.core_type = #tpu.core_type<tc>, window_params = [{transform_indices = @transform_0, window_bounds = array<i64: 32, 256>}, {pipeline_mode = #tpu.pipeline_mode<synchronous>, transform_indices = @transform_1, window_bounds = array<i64: 256, 64>}, {pipeline_mode = #tpu.pipeline_mode<synchronous>, transform_indices = @transform_2, window_bounds = array<i64: 1, 64>}, {transform_indices = @transform_3, window_bounds = array<i64: 32, 64>}]} {
    %c0 = arith.constant 0 : index
    %c0_0 = arith.constant 0 : index
    %0 = vector.load %arg1[%c0, %c0_0] : memref<32x256xbf16, #tpu.memory_space<vmem>>, vector<32x256xbf16>
    %c0_1 = arith.constant 0 : index
    %c0_2 = arith.constant 0 : index
    %1 = vector.load %arg2[%c0_1, %c0_2] : memref<256x64xbf16, #tpu.memory_space<vmem>>, vector<256x64xbf16>
    %cst = arith.constant dense<0.000000e+00> : vector<32x64xf32>
    %2 = tpu.matmul %0, %1, %cst {dimension_numbers = #tpu.dot_dimension_numbers<[1], [0], [0], [1], [0, 0, 1, 1], [], []>} : vector<32x256xbf16>, vector<256x64xbf16>, vector<32x64xf32> -> vector<32x64xf32>
    %c0_3 = arith.constant 0 : index
    %c0_4 = arith.constant 0 : index
    %3 = vector.load %arg3[%c0_3, %c0_4] : memref<1x64xf32, #tpu.memory_space<vmem>>, vector<1x64xf32>
    %4 = vector.broadcast %3 : vector<1x64xf32> to vector<32x64xf32>
    %5 = arith.addf %2, %4 : vector<32x64xf32>
    %cst_5 = arith.constant 5.000000e-01 : f32
    %6 = vector.broadcast %cst_5 : f32 to vector<32x64xf32>
    %7 = arith.mulf %6, %5 : vector<32x64xf32>
    %cst_6 = arith.constant 0.707106769 : f32
    %8 = vector.broadcast %cst_6 : f32 to vector<32x64xf32>
    %9 = arith.mulf %5, %8 : vector<32x64xf32>
    %cst_7 = arith.constant 0.000000e+00 : f32
    %10 = vector.broadcast %cst_7 : f32 to vector<32x64xf32>
    %11 = arith.cmpf oge, %9, %10 : vector<32x64xf32>
    %cst_8 = arith.constant 1.000000e+00 : f32
    %cst_9 = arith.constant -1.000000e+00 : f32
    %12 = vector.broadcast %cst_8 : f32 to vector<32x64xf32>
    %13 = vector.broadcast %cst_9 : f32 to vector<32x64xf32>
    %14 = arith.select %11, %12, %13 : vector<32x64xi1>, vector<32x64xf32>
    %15 = math.absf %9 : vector<32x64xf32>
    %cst_10 = arith.constant 0.327591091 : f32
    %16 = vector.broadcast %cst_10 : f32 to vector<32x64xf32>
    %17 = arith.mulf %16, %15 : vector<32x64xf32>
    %cst_11 = arith.constant 1.000000e+00 : f32
    %18 = vector.broadcast %cst_11 : f32 to vector<32x64xf32>
    %19 = arith.addf %18, %17 : vector<32x64xf32>
    %20 = tpu.reciprocal %19 {approx = true} : vector<32x64xf32> -> vector<32x64xf32>
    %cst_12 = arith.constant 1.06140542 : f32
    %21 = vector.broadcast %cst_12 : f32 to vector<32x64xf32>
    %22 = arith.mulf %21, %20 : vector<32x64xf32>
    %cst_13 = arith.constant -1.45315206 : f32
    %23 = vector.broadcast %cst_13 : f32 to vector<32x64xf32>
    %24 = arith.addf %22, %23 : vector<32x64xf32>
    %25 = arith.mulf %24, %20 : vector<32x64xf32>
    %cst_14 = arith.constant 1.42141378 : f32
    %26 = vector.broadcast %cst_14 : f32 to vector<32x64xf32>
    %27 = arith.addf %25, %26 : vector<32x64xf32>
    %28 = arith.mulf %27, %20 : vector<32x64xf32>
    %cst_15 = arith.constant -0.284496725 : f32
    %29 = vector.broadcast %cst_15 : f32 to vector<32x64xf32>
    %30 = arith.addf %28, %29 : vector<32x64xf32>
    %31 = arith.mulf %30, %20 : vector<32x64xf32>
    %cst_16 = arith.constant 0.254829586 : f32
    %32 = vector.broadcast %cst_16 : f32 to vector<32x64xf32>
    %33 = arith.addf %31, %32 : vector<32x64xf32>
    %34 = arith.mulf %33, %20 : vector<32x64xf32>
    %cst_17 = arith.constant 0.000000e+00 : f32
    %35 = vector.broadcast %cst_17 : f32 to vector<32x64xf32>
    %36 = arith.subf %35, %15 : vector<32x64xf32>
    %37 = arith.mulf %36, %15 : vector<32x64xf32>
    %38 = math.exp %37 : vector<32x64xf32>
    %39 = arith.mulf %34, %38 : vector<32x64xf32>
    %cst_18 = arith.constant 1.000000e+00 : f32
    %40 = vector.broadcast %cst_18 : f32 to vector<32x64xf32>
    %41 = arith.subf %40, %39 : vector<32x64xf32>
    %42 = arith.mulf %14, %41 : vector<32x64xf32>
    %cst_19 = arith.constant 1.000000e+00 : f32
    %43 = vector.broadcast %cst_19 : f32 to vector<32x64xf32>
    %44 = arith.addf %43, %42 : vector<32x64xf32>
    %45 = arith.mulf %7, %44 : vector<32x64xf32>
    %c0_20 = arith.constant 0 : index
    %c0_21 = arith.constant 0 : index
    %46 = vector.load %arg4[%c0_20, %c0_21] : memref<32x64xf32, #tpu.memory_space<vmem>>, vector<32x64xf32>
    tpu.vector_store %arg4[%c0_20, %c0_21], %45 {strides = array<i32>} : memref<32x64xf32, #tpu.memory_space<vmem>>, vector<32x64xf32>,
    return
  }
  func.func @transform_0(%arg0: i32) -> (i32, i32) {
    %c0_i32 = arith.constant 0 : i32
    %c0_i32_0 = arith.constant 0 : i32
    return %arg0, %c0_i32 : i32, i32
  }
  func.func @transform_1(%arg0: i32) -> (i32, i32) {
    %c0_i32 = arith.constant 0 : i32
    %c0_i32_0 = arith.constant 0 : i32
    %c0_i32_1 = arith.constant 0 : i32
    return %c0_i32, %c0_i32_0 : i32, i32
  }
  func.func @transform_2(%arg0: i32) -> (i32, i32) {
    %c0_i32 = arith.constant 0 : i32
    %c0_i32_0 = arith.constant 0 : i32
    %c0_i32_1 = arith.constant 0 : i32
    return %c0_i32, %c0_i32_0 : i32, i32
  }
  func.func @transform_3(%arg0: i32) -> (i32, i32) {
    %c0_i32 = arith.constant 0 : i32
    %c0_i32_0 = arith.constant 0 : i32
    return %arg0, %c0_i32 : i32, i32
  }
}

</mosaic_0001>

<llo_original>
// kernel: _lambda_.3
$region0: #{_lambda_.3}
  #allocation0 [shape = 'u32[]', space=smem, size = 0x4, offset = 0x4, fixed_abs, tag = 'smem constant byte address 0x4 - core index']
  #allocation1 [shape = 'u32[144,128]{1,0:T(1,128)}', space=vmem, size = 0x12000, scoped, tag = 'internal scratch']
  %s0 = inlined_call_operand.vmem [shape: bf16[4,288,9], index: 0, kind: input, shape index: {}]
  %s1 = inlined_call_operand.vmem [shape: bf16[3,9,64], index: 1, kind: input, shape index: {}]
  %s2 = inlined_call_operand.vmem [shape: f32[1,64], index: 2, kind: input, shape index: {}]
  %s3 = inlined_call_operand.vmem [shape: f32[4,256,64], index: 3, kind: output, shape index: {}]
  %s4 = sld [smem:[#allocation0]]
  $region45: #{_lambda_.3} parent=0
    _
  %s6 = ssub.s32 1, %s4
  %s7 = scalar_select 0, %s6, %s4
  loop: start=0, step=1, limit=6
  $region2: #{_lambda_.3} parent=0 // loop_pre_header
    _
  $region3: #{_lambda_.3} parent=0 // loop_header
    %s9 = sphi 0, %s13
    %p10 = scmp.ge.s32.totalorder %s9, 6
    %s19 = sphi 0, %s21
    %s22 = sphi 0, %s19
    %s23 = sphi 0, %s22
    %s39 = sphi 0, %s23
    %s43 = sphi 0, %s43
    %s45 = sphi 0, %s43
    %s46 = sphi 0, %s45
    %s60 = sphi 0, %s46
    %s64 = sphi 0, %s64
    %s66 = sphi 0, %s64
    %s67 = sphi 0, %s66
    %s81 = sphi 0, %s67
    %s87 = sphi 0, %s89
    %s90 = sphi 0, %s87
    %s91 = sphi 0, %s90
    %s107 = sphi 0, %s91
  $region4: #{_lambda_.3} parent=0 // loop_header_branch
    %12 = sbr.rel (%p10) target = $region8
  $region5: #{_lambda_.3} parent=0 // loop_body
    %s14 = ssub.s32 %s9, 1
    %s15 = ssub.s32 %s9, 2
    %s16 = sadd.s32 %s9, 1
    %s17 = ssub.s32 %s9, %s16
    %p18 = scmp.eq.s32.totalorder %s17, 0
    %s20 = sadd.s32 %s19, 1
    %s21 = scalar_select %p18, %s19, %s20
    %p24 = pneg %p18
    %p25 = scmp.eq.s32.totalorder %s9, 3
    %p26 = por %p24, %p25
    %p27 = scmp.ne.s32.totalorder %s19, %s22
    %p28 = scmp.eq.s32.totalorder %s9, 0
    %p29 = por %p27, %p28
    %p30 = scmp.ne.s32.totalorder %s19, %s22
    %p31 = scmp.eq.s32.totalorder %s14, 3
    %p32 = por %p30, %p31
    %p33 = scmp.ne.s32.totalorder %s22, %s23
    %p34 = scmp.eq.s32.totalorder %s14, 0
    %p35 = por %p33, %p34
    %p36 = scmp.ne.s32.totalorder %s22, %s23
    %p37 = scmp.eq.s32.totalorder %s15, 3
    %p38 = por %p36, %p37
    %p40 = scmp.ne.s32.totalorder %s23, %s39
    %p41 = scmp.eq.s32.totalorder %s15, 0
    %p42 = por %p40, %p41
    %s44 = sadd.s32 %s43, 1
    %p47 = scmp.eq.s32.totalorder %s9, 3
    %p48 = scmp.ne.s32.totalorder %s43, %s45
    %p49 = scmp.eq.s32.totalorder %s9, 0
    %p50 = por %p48, %p49
    %p51 = scmp.ne.s32.totalorder %s43, %s45
    %p52 = scmp.eq.s32.totalorder %s14, 3
    %p53 = por %p51, %p52
    %p54 = scmp.ne.s32.totalorder %s45, %s46
    %p55 = scmp.eq.s32.totalorder %s14, 0
    %p56 = por %p54, %p55
    %p57 = scmp.ne.s32.totalorder %s45, %s46
    %p58 = scmp.eq.s32.totalorder %s15, 3
    %p59 = por %p57, %p58
    %p61 = scmp.ne.s32.totalorder %s46, %s60
    %p62 = scmp.eq.s32.totalorder %s15, 0
    %p63 = por %p61, %p62
    %s65 = sadd.s32 %s64, 1
    %p68 = scmp.eq.s32.totalorder %s9, 3
    %p69 = scmp.ne.s32.totalorder %s64, %s66
    %p70 = scmp.eq.s32.totalorder %s9, 0
    %p71 = por %p69, %p70
    %p72 = scmp.ne.s32.totalorder %s64, %s66
    %p73 = scmp.eq.s32.totalorder %s14, 3
    %p74 = por %p72, %p73
    %p75 = scmp.ne.s32.totalorder %s66, %s67
    %p76 = scmp.eq.s32.totalorder %s14, 0
    %p77 = por %p75, %p76
    %p78 = scmp.ne.s32.totalorder %s66, %s67
    %p79 = scmp.eq.s32.totalorder %s15, 3
    %p80 = por %p78, %p79
    %p82 = scmp.ne.s32.totalorder %s67, %s81
    %p83 = scmp.eq.s32.totalorder %s15, 0
    %p84 = por %p82, %p83
    %s85 = ssub.s32 %s9, %s16
    %p86 = scmp.eq.s32.totalorder %s85, 0
    %s88 = sadd.s32 %s87, 1
    %s89 = scalar_select %p86, %s87, %s88
    %p92 = pneg %p86
    %p93 = scmp.eq.s32.totalorder %s9, 3
    %p94 = por %p92, %p93
    %p95 = scmp.ne.s32.totalorder %s87, %s90
    %p96 = scmp.eq.s32.totalorder %s9, 0
    %p97 = por %p95, %p96
    %p98 = scmp.ne.s32.totalorder %s87, %s90
    %p99 = scmp.eq.s32.totalorder %s14, 3
    %p100 = por %p98, %p99
    %p101 = scmp.ne.s32.totalorder %s90, %s91
    %p102 = scmp.eq.s32.totalorder %s14, 0
    %p103 = por %p101, %p102
    %p104 = scmp.ne.s32.totalorder %s90, %s91
    %p105 = scmp.eq.s32.totalorder %s15, 3
    %p106 = por %p104, %p105
    %p108 = scmp.ne.s32.totalorder %s91, %s107
    %p109 = scmp.eq.s32.totalorder %s15, 0
    %p110 = por %p108, %p109
    %p111 = scmp.le.s32.totalorder 1, %s9
    %p112 = scmp.lt.s32.totalorder %s9, 5
    %p113 = pnand %p111, %p112
    %p114 = pneg %p113
    // Predicated region
    $region9: #{_lambda_.3} parent=5 // pred_check
      _
    $region10: #{_lambda_.3} parent=5 // pred_check_branch
      %116 = sbr.rel (%p113) target = $region12
    $region11: #{_lambda_.3} parent=5 // pred_region
      %s117 = ssub.s32 %s9, 1
      // Predicated region
      $region13: #{_lambda_.3} parent=11 // pred_check
        %p118 = pneg %p56
      $region14: #{_lambda_.3} parent=11 // pred_check_branch
        %120 = sbr.rel (%p118) target = $region16
      $region15: #{_lambda_.3} parent=11 // pred_region
        _
      $region16: #{_lambda_.3} parent=11 // pred_fallthru
        _
      // Predicated region
      $region17: #{_lambda_.3} parent=11 // pred_check
        %p121 = pneg %p77
      $region18: #{_lambda_.3} parent=11 // pred_check_branch
        %123 = sbr.rel (%p121) target = $region20
      $region19: #{_lambda_.3} parent=11 // pred_region
        _
      $region20: #{_lambda_.3} parent=11 // pred_fallthru
        _
    $region12: #{_lambda_.3} parent=5 // pred_fallthru
      _
    %p124 = scmp.lt.s32.totalorder %s9, 4
    // Predicated region
    $region21: #{_lambda_.3} parent=5 // pred_check
      %p125 = pneg %p124
    $region22: #{_lambda_.3} parent=5 // pred_check_branch
      %127 = sbr.rel (%p125) target = $region24
    $region23: #{_lambda_.3} parent=5 // pred_region
      // Predicated region
      $region25: #{_lambda_.3} parent=23 // pred_check
        %p128 = pneg %p29
      $region26: #{_lambda_.3} parent=23 // pred_check_branch
        %130 = sbr.rel (%p128) target = $region28
      $region27: #{_lambda_.3} parent=23 // pred_region
        %p131 = scmp.lt.s32.totalorder %s9, 3
        %s132 = scalar_select %p131, %s9, 3
        %s133 = smul.addr %s132, 36
        %s134 = smul.addr %s133, 4
        %s135 = scalar_lea.vmem %s0, %s134
      $region28: #{_lambda_.3} parent=23 // pred_fallthru
        _
    $region24: #{_lambda_.3} parent=5 // pred_fallthru
      _
    %p136 = scmp.le.s32.totalorder 1, %s9
    %p137 = scmp.lt.s32.totalorder %s9, 5
    %p138 = pnand %p136, %p137
    %p139 = pneg %p138
    // Predicated region
    $region29: #{_lambda_.3} parent=5 // pred_check
      _
    $region30: #{_lambda_.3} parent=5 // pred_check_branch
      %141 = sbr.rel (%p138) target = $region32
    $region31: #{_lambda_.3} parent=5 // pred_region
      %s142 = ssub.s32 %s9, 1
      %p143 = scmp.lt.s32.totalorder %s14, 3
      %s144 = scalar_select %p143, %s14, 3
      %s145 = smul.addr %s144, 36
      %s146 = smul.addr %s145, 4
      %s147 = scalar_lea.vmem %s0, %s146
      %p148 = pneg %p35
      %p149 = pneg %p32
      %p150 = pneg %p56
      %p151 = pneg %p53
      %p152 = pneg %p77
      %p153 = pneg %p74
      %p154 = pneg %p103
      %p155 = pneg %p100
      %p156 = scmp.lt.s32.totalorder %s14, 3
      %s157 = scalar_select %p156, %s14, 3
      %s158 = smul.addr %s157, 32
      %s159 = smul.addr %s158, 8
      %s160 = scalar_lea.vmem %s3, %s159
      %p161 = scmp.lt.s32.totalorder %s14, 3
      %s162 = scalar_select %p161, %s14, 3
      %s163 = smul.addr %s162, 36
      %s164 = smul.addr %s163, 4
      %s165 = scalar_lea.vmem %s0, %s164
      %p166 = scmp.lt.s32.totalorder %s14, 3
      %s167 = scalar_select %p166, %s14, 3
      %s168 = smul.addr %s167, 32
      %s169 = smul.addr %s168, 8
      %s170 = scalar_lea.vmem %s3, %s169
      %v172 = vld [vmem:[%s165] sm:$0xf]
      %v173 = vld [vmem:[%s165 + $0x4] sm:$0xf]
      %v174 = vld [vmem:[%s165 + $0x8] sm:$0xf]
      %v175 = vld [vmem:[%s165 + $0xc] sm:$0xf]
      %v176 = vld [vmem:[%s165 + $0x10] sm:$0xf]
      %v177 = vld [vmem:[%s165 + $0x14] sm:$0xf]
      %v178 = vld [vmem:[%s165 + $0x18] sm:$0xf]
      %v179 = vld [vmem:[%s165 + $0x1c] sm:$0xf]
      %v180 = vld [vmem:[%s165 + $0x20] sm:$0xf]
      %v181 = vld [vmem:[%s165 + $0x24] sm:$0xf]
      %v182 = vld [vmem:[%s165 + $0x28] sm:$0xf]
      %v183 = vld [vmem:[%s165 + $0x2c] sm:$0xf]
      %v184 = vld [vmem:[%s165 + $0x30] sm:$0xf]
      %v185 = vld [vmem:[%s165 + $0x34] sm:$0xf]
      %v186 = vld [vmem:[%s165 + $0x38] sm:$0xf]
      %v187 = vld [vmem:[%s165 + $0x3c] sm:$0xf]
      %v188 = vld [vmem:[%s165 + $0x40] sm:$0xf]
      %v189 = vld [vmem:[%s165 + $0x44] sm:$0xf]
      %v190 = vld [vmem:[%s165 + $0x48] sm:$0xf]
      %v191 = vld [vmem:[%s165 + $0x4c] sm:$0xf]
      %v192 = vld [vmem:[%s165 + $0x50] sm:$0xf]
      %v193 = vld [vmem:[%s165 + $0x54] sm:$0xf]
      %v194 = vld [vmem:[%s165 + $0x58] sm:$0xf]
      %v195 = vld [vmem:[%s165 + $0x5c] sm:$0xf]
      %v196 = vld [vmem:[%s165 + $0x60] sm:$0xf]
      %v197 = vld [vmem:[%s165 + $0x64] sm:$0xf]
      %v198 = vld [vmem:[%s165 + $0x68] sm:$0xf]
      %v199 = vld [vmem:[%s165 + $0x6c] sm:$0xf]
      %v200 = vld [vmem:[%s165 + $0x70] sm:$0xf]
      %v201 = vld [vmem:[%s165 + $0x74] sm:$0xf]
      %v202 = vld [vmem:[%s165 + $0x78] sm:$0xf]
      %v203 = vld [vmem:[%s165 + $0x7c] sm:$0xf]
      %v204 = vld [vmem:[%s1] sm:$0xf]
      %v205 = vld [vmem:[%s1 + $0x4] sm:$0x1]
      %v206 = vld [vmem:[%s165 + $0x80] sm:$0xf]
      %v207 = vld [vmem:[%s165 + $0x84] sm:$0xf]
      %s208 = scalar_lea.vmem %s1, 8
      %v209 = vld [vmem:[%s208] sm:$0xf]
      %v210 = vld [vmem:[%s208 + $0x4] sm:$0x1]
      %v243 = vunpack.c.l.b16 %v174
      %v244 = vunpack.c.l.b16 %v175
      %v245 = vunpack.c.l.b16 %v176
      %v246 = vunpack.c.l.b16 %v177
      %v247 = vunpack.c.l.b16 %v178
      %v248 = vunpack.c.l.b16 %v179
      %v249 = vunpack.c.l.b16 %v180
      %v250 = vunpack.c.l.b16 %v181
      %v251 = vunpack.c.l.b16 %v182
      %v252 = vunpack.c.l.b16 %v183
      %v253 = vunpack.c.l.b16 %v184
      %v254 = vunpack.c.l.b16 %v185
      %v255 = vunpack.c.l.b16 %v186
      %v256 = vunpack.c.l.b16 %v187
      %v257 = vunpack.c.l.b16 %v188
      %v258 = vunpack.c.l.b16 %v189
      %v259 = vunpack.c.l.b16 %v190
      %v260 = vunpack.c.l.b16 %v191
      %v261 = vunpack.c.l.b16 %v192
      %v262 = vunpack.c.l.b16 %v193
      %v263 = vunpack.c.l.b16 %v194
      %v264 = vunpack.c.l.b16 %v195
      %v265 = vunpack.c.l.b16 %v196
      %v266 = vunpack.c.l.b16 %v197
      %v267 = vunpack.c.l.b16 %v198
      %v268 = vunpack.c.l.b16 %v199
      %v269 = vunpack.c.l.b16 %v200
      %v270 = vunpack.c.l.b16 %v201
      %v271 = vunpack.c.l.b16 %v202
      %v272 = vunpack.c.l.b16 %v203
      %v273 = vunpack.c.l.b16 %v206
      %v274 = vunpack.c.l.b16 %v207
      %v275 = vpack.c.b16 %v244, %v243
      %v276 = vpack.c.b16 %v246, %v245
      %v277 = vpack.c.b16 %v248, %v247
      %v278 = vpack.c.b16 %v250, %v249
      %v279 = vpack.c.b16 %v252, %v251
      %v280 = vpack.c.b16 %v254, %v253
      %v281 = vpack.c.b16 %v256, %v255
      %v282 = vpack.c.b16 %v258, %v257
      %v283 = vpack.c.b16 %v260, %v259
      %v284 = vpack.c.b16 %v262, %v261
      %v285 = vpack.c.b16 %v264, %v263
      %v286 = vpack.c.b16 %v266, %v265
      %v287 = vpack.c.b16 %v268, %v267
      %v288 = vpack.c.b16 %v270, %v269
      %v289 = vpack.c.b16 %v272, %v271
      %v290 = vpack.c.b16 %v274, %v273
      %v293 = vunpack.c.l.b16 %v209
      %v294 = vunpack.c.l.b16 %v210
      %v295 = vpack.c.b16 %v294, %v293
      %vm296 = vcmask 72704
      %v298 = vsel %vm296, %v275, 0
      %v301 = vsel %vm296, %v276, 0
      %v304 = vsel %vm296, %v277, 0
      %v307 = vsel %vm296, %v278, 0
      %v310 = vsel %vm296, %v279, 0
      %v313 = vsel %vm296, %v280, 0
      %v316 = vsel %vm296, %v281, 0
      %v319 = vsel %vm296, %v282, 0
      %v322 = vsel %vm296, %v283, 0
      %v325 = vsel %vm296, %v284, 0
      %v328 = vsel %vm296, %v285, 0
      %v331 = vsel %vm296, %v286, 0
      %v334 = vsel %vm296, %v287, 0
      %v337 = vsel %vm296, %v288, 0
      %v340 = vsel %vm296, %v289, 0
      %v343 = vsel %vm296, %v290, 0
      %vm345 = vcmask 1043456
      %vm346 = vcmask 1044480
      %v347 = vsel %vm345, 4294967295, 65535
      %v348 = vsel %vm346, %v347, 0
      %v350 = vand.u32 %v295, %v348
      %352 = vmatprep.subr.bf16.mxu0 0
      %353 = vmatpush1.bf16.msra.mxu0 %v350
      %354 = vmatprep.subr.bf16.mxu0 0
      %355 = vmatpush1.bf16.msra.mxu0 0
      %356 = vmatprep.subr.bf16.mxu0 0
      %357 = vmatpush1.bf16.msra.mxu0 0
      %358 = vmatprep.subr.bf16.mxu0 0
      %359 = vmatpush1.bf16.msra.mxu0 0
      %360 = vmatprep.subr.bf16.mxu0 0
      %361 = vmatpush1.bf16.msra.mxu0 0
      %362 = vmatprep.subr.bf16.mxu0 0
      %363 = vmatpush1.bf16.msra.mxu0 0
      %364 = vmatprep.subr.bf16.mxu0 0
      %365 = vmatpush1.bf16.msra.mxu0 0
      %366 = vmatprep.subr.bf16.mxu0 0
      %367 = vmatpush1.bf16.msra.mxu0 0
      %368 = vmatprep.subr.bf16.mxu0 0
      %369 = vmatpush1.bf16.msra.mxu0 0
      %370 = vmatprep.subr.bf16.mxu0 0
      %371 = vmatpush1.bf16.msra.mxu0 0
      %372 = vmatprep.subr.bf16.mxu0 0
      %373 = vmatpush1.bf16.msra.mxu0 0
      %374 = vmatprep.subr.bf16.mxu0 0
      %375 = vmatpush1.bf16.msra.mxu0 0
      %376 = vmatprep.subr.bf16.mxu0 0
      %377 = vmatpush1.bf16.msra.mxu0 0
      %378 = vmatprep.subr.bf16.mxu0 0
      %379 = vmatpush1.bf16.msra.mxu0 0
      %380 = vmatprep.subr.bf16.mxu0 0
      %381 = vmatpush1.bf16.msra.mxu0 0
      %382 = vmatprep.subr.bf16.mxu0 0
      %383 = vmatpush1.bf16.msra.mxu0 0
      %384 = vmatprep.mubr.bf16.mxu0 0
      %385 = vmatmul.mubr.bf16.gmra.mrb[0].mxu0 %v298
      %v386 = vpop.f32.mrb[0].mxu0
      %v387 = vadd.f32 0.0, %v386
      %v388 = vpop.f32.mrb[0].mxu0
      %v389 = vpop.f32.mrb[0].mxu0
      %v390 = vadd.f32 0.0, %v389
      %v391 = vpop.f32.mrb[0].mxu0
      %392 = vmatprep.mubr.bf16.mxu0 0
      %393 = vmatmul.mubr.bf16.gmra.mrb[0].mxu0 %v301
      %v394 = vpop.f32.mrb[0].mxu0
      %v395 = vadd.f32 0.0, %v394
      %v396 = vpop.f32.mrb[0].mxu0
      %v397 = vpop.f32.mrb[0].mxu0
      %v398 = vadd.f32 0.0, %v397
      %v399 = vpop.f32.mrb[0].mxu0
      %400 = vmatprep.mubr.bf16.mxu0 0
      %401 = vmatmul.mubr.bf16.gmra.mrb[0].mxu0 %v304
      %v402 = vpop.f32.mrb[0].mxu0
      %v403 = vadd.f32 0.0, %v402
      %v404 = vpop.f32.mrb[0].mxu0
      %v405 = vpop.f32.mrb[0].mxu0
      %v406 = vadd.f32 0.0, %v405
      %v407 = vpop.f32.mrb[0].mxu0
      %408 = vmatprep.mubr.bf16.mxu0 0
      %409 = vmatmul.mubr.bf16.gmra.mrb[0].mxu0 %v307
      %v410 = vpop.f32.mrb[0].mxu0
      %v411 = vadd.f32 0.0, %v410
      %v412 = vpop.f32.mrb[0].mxu0
      %v413 = vpop.f32.mrb[0].mxu0
      %v414 = vadd.f32 0.0, %v413
      %v415 = vpop.f32.mrb[0].mxu0
      %416 = vmatprep.mubr.bf16.mxu0 0
      %417 = vmatmul.mubr.bf16.gmra.mrb[0].mxu0 %v310
      %v418 = vpop.f32.mrb[0].mxu0
      %v419 = vadd.f32 0.0, %v418
      %v420 = vpop.f32.mrb[0].mxu0
      %v421 = vpop.f32.mrb[0].mxu0
      %v422 = vadd.f32 0.0, %v421
      %v423 = vpop.f32.mrb[0].mxu0
      %424 = vmatprep.mubr.bf16.mxu0 0
      %425 = vmatmul.mubr.bf16.gmra.mrb[0].mxu0 %v313
      %v426 = vpop.f32.mrb[0].mxu0
      %v427 = vadd.f32 0.0, %v426
      %v428 = vpop.f32.mrb[0].mxu0
      %v429 = vpop.f32.mrb[0].mxu0
      %v430 = vadd.f32 0.0, %v429
      %v431 = vpop.f32.mrb[0].mxu0
      %432 = vmatprep.mubr.bf16.mxu0 0
      %433 = vmatmul.mubr.bf16.gmra.mrb[0].mxu0 %v316
      %v434 = vpop.f32.mrb[0].mxu0
      %v435 = vadd.f32 0.0, %v434
      %v436 = vpop.f32.mrb[0].mxu0
      %v437 = vpop.f32.mrb[0].mxu0
      %v438 = vadd.f32 0.0, %v437
      %v439 = vpop.f32.mrb[0].mxu0
      %440 = vmatprep.mubr.bf16.mxu0 0
      %441 = vmatmul.mubr.bf16.gmra.mrb[0].mxu0 %v319
      %v442 = vpop.f32.mrb[0].mxu0
      %v443 = vadd.f32 0.0, %v442
      %v444 = vpop.f32.mrb[0].mxu0
      %v445 = vpop.f32.mrb[0].mxu0
      %v446 = vadd.f32 0.0, %v445
      %v447 = vpop.f32.mrb[0].mxu0
      %448 = vmatprep.mubr.bf16.mxu0 0
      %449 = vmatmul.mubr.bf16.gmra.mrb[0].mxu0 %v322
      %v450 = vpop.f32.mrb[0].mxu0
      %v451 = vadd.f32 0.0, %v450
      %v452 = vpop.f32.mrb[0].mxu0
      %v453 = vpop.f32.mrb[0].mxu0
      %v454 = vadd.f32 0.0, %v453
      %v455 = vpop.f32.mrb[0].mxu0
      %456 = vmatprep.mubr.bf16.mxu0 0
      %457 = vmatmul.mubr.bf16.gmra.mrb[0].mxu0 %v325
      %v458 = vpop.f32.mrb[0].mxu0
      %v459 = vadd.f32 0.0, %v458
      %v460 = vpop.f32.mrb[0].mxu0
      %v461 = vpop.f32.mrb[0].mxu0
      %v462 = vadd.f32 0.0, %v461
      %v463 = vpop.f32.mrb[0].mxu0
      %464 = vmatprep.mubr.bf16.mxu0 0
      %465 = vmatmul.mubr.bf16.gmra.mrb[0].mxu0 %v328
      %v466 = vpop.f32.mrb[0].mxu0
      %v467 = vadd.f32 0.0, %v466
      %v468 = vpop.f32.mrb[0].mxu0
      %v469 = vpop.f32.mrb[0].mxu0
      %v470 = vadd.f32 0.0, %v469
      %v471 = vpop.f32.mrb[0].mxu0
      %472 = vmatprep.mubr.bf16.mxu0 0
      %473 = vmatmul.mubr.bf16.gmra.mrb[0].mxu0 %v331
      %v474 = vpop.f32.mrb[0].mxu0
      %v475 = vadd.f32 0.0, %v474
      %v476 = vpop.f32.mrb[0].mxu0
      %v477 = vpop.f32.mrb[0].mxu0
      %v478 = vadd.f32 0.0, %v477
      %v479 = vpop.f32.mrb[0].mxu0
      %480 = vmatprep.mubr.bf16.mxu0 0
      %481 = vmatmul.mubr.bf16.gmra.mrb[0].mxu0 %v334
      %v482 = vpop.f32.mrb[0].mxu0
      %v483 = vadd.f32 0.0, %v482
      %v484 = vpop.f32.mrb[0].mxu0
      %v485 = vpop.f32.mrb[0].mxu0
      %v486 = vadd.f32 0.0, %v485
      %v487 = vpop.f32.mrb[0].mxu0
      %488 = vmatprep.mubr.bf16.mxu0 0
      %489 = vmatmul.mubr.bf16.gmra.mrb[0].mxu0 %v337
      %v490 = vpop.f32.mrb[0].mxu0
      %v491 = vadd.f32 0.0, %v490
      %v492 = vpop.f32.mrb[0].mxu0
      %v493 = vpop.f32.mrb[0].mxu0
      %v494 = vadd.f32 0.0, %v493
      %v495 = vpop.f32.mrb[0].mxu0
      %496 = vmatprep.mubr.bf16.mxu0 0
      %497 = vmatmul.mubr.bf16.gmra.mrb[0].mxu0 %v340
      %v498 = vpop.f32.mrb[0].mxu0
      %v499 = vadd.f32 0.0, %v498
      %v500 = vpop.f32.mrb[0].mxu0
      %v501 = vpop.f32.mrb[0].mxu0
      %v502 = vadd.f32 0.0, %v501
      %v503 = vpop.f32.mrb[0].mxu0
      %504 = vmatprep.mubr.bf16.mxu0 0
      %505 = vmatmul.mubr.bf16.gmra.mrb[0].mxu0 %v343
      %v506 = vpop.f32.mrb[0].mxu0
      %v507 = vadd.f32 0.0, %v506
      %v508 = vpop.f32.mrb[0].mxu0
      %v509 = vpop.f32.mrb[0].mxu0
      %v510 = vadd.f32 0.0, %v509
      %v511 = vpop.f32.mrb[0].mxu0
      %512 = vdwg.mxu0
      %v515 = vunpack.c.l.b16 %v172
      %v516 = vunpack.c.l.b16 %v173
      %v517 = vpack.c.b16 %v516, %v515
      %v520 = vunpack.c.l.b16 %v204
      %v521 = vunpack.c.l.b16 %v205
      %v522 = vpack.c.b16 %v521, %v520
      %v524 = vsel %vm296, %v517, 0
      %v527 = vand.u32 %v522, %v348
      %529 = vmatprep.subr.bf16.mxu0 0
      %530 = vmatpush1.bf16.msra.mxu0 %v527
      %531 = vmatprep.subr.bf16.mxu0 0
      %532 = vmatpush1.bf16.msra.mxu0 0
      %533 = vmatprep.subr.bf16.mxu0 0
      %534 = vmatpush1.bf16.msra.mxu0 0
      %535 = vmatprep.subr.bf16.mxu0 0
      %536 = vmatpush1.bf16.msra.mxu0 0
      %537 = vmatprep.subr.bf16.mxu0 0
      %538 = vmatpush1.bf16.msra.mxu0 0
      %539 = vmatprep.subr.bf16.mxu0 0
      %540 = vmatpush1.bf16.msra.mxu0 0
      %541 = vmatprep.subr.bf16.mxu0 0
      %542 = vmatpush1.bf16.msra.mxu0 0
      %543 = vmatprep.subr.bf16.mxu0 0
      %544 = vmatpush1.bf16.msra.mxu0 0
      %545 = vmatprep.subr.bf16.mxu0 0
      %546 = vmatpush1.bf16.msra.mxu0 0
      %547 = vmatprep.subr.bf16.mxu0 0
      %548 = vmatpush1.bf16.msra.mxu0 0
      %549 = vmatprep.subr.bf16.mxu0 0
      %550 = vmatpush1.bf16.msra.mxu0 0
      %551 = vmatprep.subr.bf16.mxu0 0
      %552 = vmatpush1.bf16.msra.mxu0 0
      %553 = vmatprep.subr.bf16.mxu0 0
      %554 = vmatpush1.bf16.msra.mxu0 0
      %555 = vmatprep.subr.bf16.mxu0 0
      %556 = vmatpush1.bf16.msra.mxu0 0
      %557 = vmatprep.subr.bf16.mxu0 0
      %558 = vmatpush1.bf16.msra.mxu0 0
      %559 = vmatprep.subr.bf16.mxu0 0
      %560 = vmatpush1.bf16.msra.mxu0 0
      %561 = vmatprep.mubr.bf16.mxu0 0
      %562 = vmatmul.mubr.bf16.gmra.mrb[0].mxu0 %v524
      %v563 = vpop.f32.mrb[0].mxu0
      %v564 = vadd.f32 %v387, %v563
      %v565 = vpop.f32.mrb[0].mxu0
      %v566 = vpop.f32.mrb[0].mxu0
      %v567 = vadd.f32 %v390, %v566
      %v568 = vpop.f32.mrb[0].mxu0
      %569 = vmatprep.mubr.bf16.mxu0 0
      %570 = vmatmul.mubr.bf16.gmra.mrb[0].mxu0 %v298
      %v571 = vpop.f32.mrb[0].mxu0
      %v572 = vadd.f32 %v395, %v571
      %v573 = vpop.f32.mrb[0].mxu0
      %v574 = vpop.f32.mrb[0].mxu0
      %v575 = vadd.f32 %v398, %v574
      %v576 = vpop.f32.mrb[0].mxu0
      %577 = vmatprep.mubr.bf16.mxu0 0
      %578 = vmatmul.mubr.bf16.gmra.mrb[0].mxu0 %v301
      %v579 = vpop.f32.mrb[0].mxu0
      %v580 = vadd.f32 %v403, %v579
      %v581 = vpop.f32.mrb[0].mxu0
      %v582 = vpop.f32.mrb[0].mxu0
      %v583 = vadd.f32 %v406, %v582
      %v584 = vpop.f32.mrb[0].mxu0
      %585 = vmatprep.mubr.bf16.mxu0 0
      %586 = vmatmul.mubr.bf16.gmra.mrb[0].mxu0 %v304
      %v587 = vpop.f32.mrb[0].mxu0
      %v588 = vadd.f32 %v411, %v587
      %v589 = vpop.f32.mrb[0].mxu0
      %v590 = vpop.f32.mrb[0].mxu0
      %v591 = vadd.f32 %v414, %v590
      %v592 = vpop.f32.mrb[0].mxu0
      %593 = vmatprep.mubr.bf16.mxu0 0
      %594 = vmatmul.mubr.bf16.gmra.mrb[0].mxu0 %v307
      %v595 = vpop.f32.mrb[0].mxu0
      %v596 = vadd.f32 %v419, %v595
      %v597 = vpop.f32.mrb[0].mxu0
      %v598 = vpop.f32.mrb[0].mxu0
      %v599 = vadd.f32 %v422, %v598
      %v600 = vpop.f32.mrb[0].mxu0
      %601 = vmatprep.mubr.bf16.mxu0 0
      %602 = vmatmul.mubr.bf16.gmra.mrb[0].mxu0 %v310
      %v603 = vpop.f32.mrb[0].mxu0
      %v604 = vadd.f32 %v427, %v603
      %v605 = vpop.f32.mrb[0].mxu0
      %v606 = vpop.f32.mrb[0].mxu0
      %v607 = vadd.f32 %v430, %v606
      %v608 = vpop.f32.mrb[0].mxu0
      %609 = vmatprep.mubr.bf16.mxu0 0
      %610 = vmatmul.mubr.bf16.gmra.mrb[0].mxu0 %v313
      %v611 = vpop.f32.mrb[0].mxu0
      %v612 = vadd.f32 %v435, %v611
      %v613 = vpop.f32.mrb[0].mxu0
      %v614 = vpop.f32.mrb[0].mxu0
      %v615 = vadd.f32 %v438, %v614
      %v616 = vpop.f32.mrb[0].mxu0
      %617 = vmatprep.mubr.bf16.mxu0 0
      %618 = vmatmul.mubr.bf16.gmra.mrb[0].mxu0 %v316
      %v619 = vpop.f32.mrb[0].mxu0
      %v620 = vadd.f32 %v443, %v619
      %v621 = vpop.f32.mrb[0].mxu0
      %v622 = vpop.f32.mrb[0].mxu0
      %v623 = vadd.f32 %v446, %v622
      %v624 = vpop.f32.mrb[0].mxu0
      %625 = vmatprep.mubr.bf16.mxu0 0
      %626 = vmatmul.mubr.bf16.gmra.mrb[0].mxu0 %v319
      %v627 = vpop.f32.mrb[0].mxu0
      %v628 = vadd.f32 %v451, %v627
      %v629 = vpop.f32.mrb[0].mxu0
      %v630 = vpop.f32.mrb[0].mxu0
      %v631 = vadd.f32 %v454, %v630
      %v632 = vpop.f32.mrb[0].mxu0
      %633 = vmatprep.mubr.bf16.mxu0 0
      %634 = vmatmul.mubr.bf16.gmra.mrb[0].mxu0 %v322
      %v635 = vpop.f32.mrb[0].mxu0
      %v636 = vadd.f32 %v459, %v635
      %v637 = vpop.f32.mrb[0].mxu0
      %v638 = vpop.f32.mrb[0].mxu0
      %v639 = vadd.f32 %v462, %v638
      %v640 = vpop.f32.mrb[0].mxu0
      %641 = vmatprep.mubr.bf16.mxu0 0
      %642 = vmatmul.mubr.bf16.gmra.mrb[0].mxu0 %v325
      %v643 = vpop.f32.mrb[0].mxu0
      %v644 = vadd.f32 %v467, %v643
      %v645 = vpop.f32.mrb[0].mxu0
      %v646 = vpop.f32.mrb[0].mxu0
      %v647 = vadd.f32 %v470, %v646
      %v648 = vpop.f32.mrb[0].mxu0
      %649 = vmatprep.mubr.bf16.mxu0 0
      %650 = vmatmul.mubr.bf16.gmra.mrb[0].mxu0 %v328
      %v651 = vpop.f32.mrb[0].mxu0
      %v652 = vadd.f32 %v475, %v651
      %v653 = vpop.f32.mrb[0].mxu0
      %v654 = vpop.f32.mrb[0].mxu0
      %v655 = vadd.f32 %v478, %v654
      %v656 = vpop.f32.mrb[0].mxu0
      %657 = vmatprep.mubr.bf16.mxu0 0
      %658 = vmatmul.mubr.bf16.gmra.mrb[0].mxu0 %v331
      %v659 = vpop.f32.mrb[0].mxu0
      %v660 = vadd.f32 %v483, %v659
      %v661 = vpop.f32.mrb[0].mxu0
      %v662 = vpop.f32.mrb[0].mxu0
      %v663 = vadd.f32 %v486, %v662
      %v664 = vpop.f32.mrb[0].mxu0
      %665 = vmatprep.mubr.bf16.mxu0 0
      %666 = vmatmul.mubr.bf16.gmra.mrb[0].mxu0 %v334
      %v667 = vpop.f32.mrb[0].mxu0
      %v668 = vadd.f32 %v491, %v667
      %v669 = vpop.f32.mrb[0].mxu0
      %v670 = vpop.f32.mrb[0].mxu0
      %v671 = vadd.f32 %v494, %v670
      %v672 = vpop.f32.mrb[0].mxu0
      %673 = vmatprep.mubr.bf16.mxu0 0
      %674 = vmatmul.mubr.bf16.gmra.mrb[0].mxu0 %v337
      %v675 = vpop.f32.mrb[0].mxu0
      %v676 = vadd.f32 %v499, %v675
      %v677 = vpop.f32.mrb[0].mxu0
      %v678 = vpop.f32.mrb[0].mxu0
      %v679 = vadd.f32 %v502, %v678
      %v680 = vpop.f32.mrb[0].mxu0
      %681 = vmatprep.mubr.bf16.mxu0 0
      %682 = vmatmul.mubr.bf16.gmra.mrb[0].mxu0 %v340
      %v683 = vpop.f32.mrb[0].mxu0
      %v684 = vadd.f32 %v507, %v683
      %v685 = vpop.f32.mrb[0].mxu0
      %v686 = vpop.f32.mrb[0].mxu0
      %v687 = vadd.f32 %v510, %v686
      %v688 = vpop.f32.mrb[0].mxu0
      %689 = vdwg.mxu0
      %v690 = vld [vmem:[%s165 + $0x10] sm:$0xf]
      %v691 = vld [vmem:[%s165 + $0x14] sm:$0xf]
      %v692 = vld [vmem:[%s165 + $0x18] sm:$0xf]
      %v693 = vld [vmem:[%s165 + $0x1c] sm:$0xf]
      %v694 = vld [vmem:[%s165 + $0x20] sm:$0xf]
      %v695 = vld [vmem:[%s165 + $0x24] sm:$0xf]
      %v696 = vld [vmem:[%s165 + $0x28] sm:$0xf]
      %v697 = vld [vmem:[%s165 + $0x2c] sm:$0xf]
      %v698 = vld [vmem:[%s165 + $0x30] sm:$0xf]
      %v699 = vld [vmem:[%s165 + $0x34] sm:$0xf]
      %v700 = vld [vmem:[%s165 + $0x38] sm:$0xf]
      %v701 = vld [vmem:[%s165 + $0x3c] sm:$0xf]
      %v702 = vld [vmem:[%s165 + $0x40] sm:$0xf]
      %v703 = vld [vmem:[%s165 + $0x44] sm:$0xf]
      %v704 = vld [vmem:[%s165 + $0x48] sm:$0xf]
      %v705 = vld [vmem:[%s165 + $0x4c] sm:$0xf]
      %v706 = vld [vmem:[%s165 + $0x50] sm:$0xf]
      %v707 = vld [vmem:[%s165 + $0x54] sm:$0xf]
      %v708 = vld [vmem:[%s165 + $0x58] sm:$0xf]
      %v709 = vld [vmem:[%s165 + $0x5c] sm:$0xf]
      %v710 = vld [vmem:[%s165 + $0x60] sm:$0xf]
      %v711 = vld [vmem:[%s165 + $0x64] sm:$0xf]
      %v712 = vld [vmem:[%s165 + $0x68] sm:$0xf]
      %v713 = vld [vmem:[%s165 + $0x6c] sm:$0xf]
      %v714 = vld [vmem:[%s165 + $0x70] sm:$0xf]
      %v715 = vld [vmem:[%s165 + $0x74] sm:$0xf]
      %v716 = vld [vmem:[%s165 + $0x78] sm:$0xf]
      %v717 = vld [vmem:[%s165 + $0x7c] sm:$0xf]
      %v718 = vld [vmem:[%s165 + $0x80] sm:$0xf]
      %v719 = vld [vmem:[%s165 + $0x84] sm:$0xf]
      %v720 = vld [vmem:[%s165 + $0x88] sm:$0xf]
      %v721 = vld [vmem:[%s165 + $0x8c] sm:$0xf]
      %s722 = scalar_lea.vmem %s1, 16
      %v723 = vld [vmem:[%s722] sm:$0xf]
      %v724 = vld [vmem:[%s722 + $0x4] sm:$0x1]
      %v757 = vunpack.c.l.b16 %v690
      %v758 = vunpack.c.l.b16 %v691
      %v759 = vunpack.c.l.b16 %v692
      %v760 = vunpack.c.l.b16 %v693
      %v761 = vunpack.c.l.b16 %v694
      %v762 = vunpack.c.l.b16 %v695
      %v763 = vunpack.c.l.b16 %v696
      %v764 = vunpack.c.l.b16 %v697
      %v765 = vunpack.c.l.b16 %v698
      %v766 = vunpack.c.l.b16 %v699
      %v767 = vunpack.c.l.b16 %v700
      %v768 = vunpack.c.l.b16 %v701
      %v769 = vunpack.c.l.b16 %v702
      %v770 = vunpack.c.l.b16 %v703
      %v771 = vunpack.c.l.b16 %v704
      %v772 = vunpack.c.l.b16 %v705
      %v773 = vunpack.c.l.b16 %v706
      %v774 = vunpack.c.l.b16 %v707
      %v775 = vunpack.c.l.b16 %v708
      %v776 = vunpack.c.l.b16 %v709
      %v777 = vunpack.c.l.b16 %v710
      %v778 = vunpack.c.l.b16 %v711
      %v779 = vunpack.c.l.b16 %v712
      %v780 = vunpack.c.l.b16 %v713
      %v781 = vunpack.c.l.b16 %v714
      %v782 = vunpack.c.l.b16 %v715
      %v783 = vunpack.c.l.b16 %v716
      %v784 = vunpack.c.l.b16 %v717
      %v785 = vunpack.c.l.b16 %v718
      %v786 = vunpack.c.l.b16 %v719
      %v787 = vunpack.c.l.b16 %v720
      %v788 = vunpack.c.l.b16 %v721
      %v789 = vpack.c.b16 %v758, %v757
      %v790 = vpack.c.b16 %v760, %v759
      %v791 = vpack.c.b16 %v762, %v761
      %v792 = vpack.c.b16 %v764, %v763
      %v793 = vpack.c.b16 %v766, %v765
      %v794 = vpack.c.b16 %v768, %v767
      %v795 = vpack.c.b16 %v770, %v769
      %v796 = vpack.c.b16 %v772, %v771
      %v797 = vpack.c.b16 %v774, %v773
      %v798 = vpack.c.b16 %v776, %v775
      %v799 = vpack.c.b16 %v778, %v777
      %v800 = vpack.c.b16 %v780, %v779
      %v801 = vpack.c.b16 %v782, %v781
      %v802 = vpack.c.b16 %v784, %v783
      %v803 = vpack.c.b16 %v786, %v785
      %v804 = vpack.c.b16 %v788, %v787
      %v807 = vunpack.c.l.b16 %v723
      %v808 = vunpack.c.l.b16 %v724
      %v809 = vpack.c.b16 %v808, %v807
      %v811 = vsel %vm296, %v789, 0
      %v814 = vsel %vm296, %v790, 0
      %v817 = vsel %vm296, %v791, 0
      %v820 = vsel %vm296, %v792, 0
      %v823 = vsel %vm296, %v793, 0
      %v826 = vsel %vm296, %v794, 0
      %v829 = vsel %vm296, %v795, 0
      %v832 = vsel %vm296, %v796, 0
      %v835 = vsel %vm296, %v797, 0
      %v838 = vsel %vm296, %v798, 0
      %v841 = vsel %vm296, %v799, 0
      %v844 = vsel %vm296, %v800, 0
      %v847 = vsel %vm296, %v801, 0
      %v850 = vsel %vm296, %v802, 0
      %v853 = vsel %vm296, %v803, 0
      %v856 = vsel %vm296, %v804, 0
      %v859 = vand.u32 %v809, %v348
      %861 = vmatprep.subr.bf16.mxu0 0
      %862 = vmatpush1.bf16.msra.mxu0 %v859
      %863 = vmatprep.subr.bf16.mxu0 0
      %864 = vmatpush1.bf16.msra.mxu0 0
      %865 = vmatprep.subr.bf16.mxu0 0
      %866 = vmatpush1.bf16.msra.mxu0 0
      %867 = vmatprep.subr.bf16.mxu0 0
      %868 = vmatpush1.bf16.msra.mxu0 0
      %869 = vmatprep.subr.bf16.mxu0 0
      %870 = vmatpush1.bf16.msra.mxu0 0
      %871 = vmatprep.subr.bf16.mxu0 0
      %872 = vmatpush1.bf16.msra.mxu0 0
      %873 = vmatprep.subr.bf16.mxu0 0
      %874 = vmatpush1.bf16.msra.mxu0 0
      %875 = vmatprep.subr.bf16.mxu0 0
      %876 = vmatpush1.bf16.msra.mxu0 0
      %877 = vmatprep.subr.bf16.mxu0 0
      %878 = vmatpush1.bf16.msra.mxu0 0
      %879 = vmatprep.subr.bf16.mxu0 0
      %880 = vmatpush1.bf16.msra.mxu0 0
      %881 = vmatprep.subr.bf16.mxu0 0
      %882 = vmatpush1.bf16.msra.mxu0 0
      %883 = vmatprep.subr.bf16.mxu0 0
      %884 = vmatpush1.bf16.msra.mxu0 0
      %885 = vmatprep.subr.bf16.mxu0 0
      %886 = vmatpush1.bf16.msra.mxu0 0
      %887 = vmatprep.subr.bf16.mxu0 0
      %888 = vmatpush1.bf16.msra.mxu0 0
      %889 = vmatprep.subr.bf16.mxu0 0
      %890 = vmatpush1.bf16.msra.mxu0 0
      %891 = vmatprep.subr.bf16.mxu0 0
      %892 = vmatpush1.bf16.msra.mxu0 0
      %893 = vmatprep.mubr.bf16.mxu0 0
      %894 = vmatmul.mubr.bf16.gmra.mrb[0].mxu0 %v811
      %v895 = vpop.f32.mrb[0].mxu0
      %v896 = vadd.f32 0.0, %v895
      %v897 = vpop.f32.mrb[0].mxu0
      %v898 = vpop.f32.mrb[0].mxu0
      %v899 = vadd.f32 0.0, %v898
      %v900 = vpop.f32.mrb[0].mxu0
      %901 = vmatprep.mubr.bf16.mxu0 0
      %902 = vmatmul.mubr.bf16.gmra.mrb[0].mxu0 %v814
      %v903 = vpop.f32.mrb[0].mxu0
      %v904 = vadd.f32 0.0, %v903
      %v905 = vpop.f32.mrb[0].mxu0
      %v906 = vpop.f32.mrb[0].mxu0
      %v907 = vadd.f32 0.0, %v906
      %v908 = vpop.f32.mrb[0].mxu0
      %909 = vmatprep.mubr.bf16.mxu0 0
      %910 = vmatmul.mubr.bf16.gmra.mrb[0].mxu0 %v817
      %v911 = vpop.f32.mrb[0].mxu0
      %v912 = vadd.f32 0.0, %v911
      %v913 = vpop.f32.mrb[0].mxu0
      %v914 = vpop.f32.mrb[0].mxu0
      %v915 = vadd.f32 0.0, %v914
      %v916 = vpop.f32.mrb[0].mxu0
      %917 = vmatprep.mubr.bf16.mxu0 0
      %918 = vmatmul.mubr.bf16.gmra.mrb[0].mxu0 %v820
      %v919 = vpop.f32.mrb[0].mxu0
      %v920 = vadd.f32 0.0, %v919
      %v921 = vpop.f32.mrb[0].mxu0
      %v922 = vpop.f32.mrb[0].mxu0
      %v923 = vadd.f32 0.0, %v922
      %v924 = vpop.f32.mrb[0].mxu0
      %925 = vmatprep.mubr.bf16.mxu0 0
      %926 = vmatmul.mubr.bf16.gmra.mrb[0].mxu0 %v823
      %v927 = vpop.f32.mrb[0].mxu0
      %v928 = vadd.f32 0.0, %v927
      %v929 = vpop.f32.mrb[0].mxu0
      %v930 = vpop.f32.mrb[0].mxu0
      %v931 = vadd.f32 0.0, %v930
      %v932 = vpop.f32.mrb[0].mxu0
      %933 = vmatprep.mubr.bf16.mxu0 0
      %934 = vmatmul.mubr.bf16.gmra.mrb[0].mxu0 %v826
      %v935 = vpop.f32.mrb[0].mxu0
      %v936 = vadd.f32 0.0, %v935
      %v937 = vpop.f32.mrb[0].mxu0
      %v938 = vpop.f32.mrb[0].mxu0
      %v939 = vadd.f32 0.0, %v938
      %v940 = vpop.f32.mrb[0].mxu0
      %941 = vmatprep.mubr.bf16.mxu0 0
      %942 = vmatmul.mubr.bf16.gmra.mrb[0].mxu0 %v829
      %v943 = vpop.f32.mrb[0].mxu0
      %v944 = vadd.f32 0.0, %v943
      %v945 = vpop.f32.mrb[0].mxu0
      %v946 = vpop.f32.mrb[0].mxu0
      %v947 = vadd.f32 0.0, %v946
      %v948 = vpop.f32.mrb[0].mxu0
      %949 = vmatprep.mubr.bf16.mxu0 0
      %950 = vmatmul.mubr.bf16.gmra.mrb[0].mxu0 %v832
      %v951 = vpop.f32.mrb[0].mxu0
      %v952 = vadd.f32 0.0, %v951
      %v953 = vpop.f32.mrb[0].mxu0
      %v954 = vpop.f32.mrb[0].mxu0
      %v955 = vadd.f32 0.0, %v954
      %v956 = vpop.f32.mrb[0].mxu0
      %957 = vmatprep.mubr.bf16.mxu0 0
      %958 = vmatmul.mubr.bf16.gmra.mrb[0].mxu0 %v835
      %v959 = vpop.f32.mrb[0].mxu0
      %v960 = vadd.f32 0.0, %v959
      %v961 = vpop.f32.mrb[0].mxu0
      %v962 = vpop.f32.mrb[0].mxu0
      %v963 = vadd.f32 0.0, %v962
      %v964 = vpop.f32.mrb[0].mxu0
      %965 = vmatprep.mubr.bf16.mxu0 0
      %966 = vmatmul.mubr.bf16.gmra.mrb[0].mxu0 %v838
      %v967 = vpop.f32.mrb[0].mxu0
      %v968 = vadd.f32 0.0, %v967
      %v969 = vpop.f32.mrb[0].mxu0
      %v970 = vpop.f32.mrb[0].mxu0
      %v971 = vadd.f32 0.0, %v970
      %v972 = vpop.f32.mrb[0].mxu0
      %973 = vmatprep.mubr.bf16.mxu0 0
      %974 = vmatmul.mubr.bf16.gmra.mrb[0].mxu0 %v841
      %v975 = vpop.f32.mrb[0].mxu0
      %v976 = vadd.f32 0.0, %v975
      %v977 = vpop.f32.mrb[0].mxu0
      %v978 = vpop.f32.mrb[0].mxu0
      %v979 = vadd.f32 0.0, %v978
      %v980 = vpop.f32.mrb[0].mxu0
      %981 = vmatprep.mubr.bf16.mxu0 0
      %982 = vmatmul.mubr.bf16.gmra.mrb[0].mxu0 %v844
      %v983 = vpop.f32.mrb[0].mxu0
      %v984 = vadd.f32 0.0, %v983
      %v985 = vpop.f32.mrb[0].mxu0
      %v986 = vpop.f32.mrb[0].mxu0
      %v987 = vadd.f32 0.0, %v986
      %v988 = vpop.f32.mrb[0].mxu0
      %989 = vmatprep.mubr.bf16.mxu0 0
      %990 = vmatmul.mubr.bf16.gmra.mrb[0].mxu0 %v847
      %v991 = vpop.f32.mrb[0].mxu0
      %v992 = vadd.f32 0.0, %v991
      %v993 = vpop.f32.mrb[0].mxu0
      %v994 = vpop.f32.mrb[0].mxu0
      %v995 = vadd.f32 0.0, %v994
      %v996 = vpop.f32.mrb[0].mxu0
      %997 = vmatprep.mubr.bf16.mxu0 0
      %998 = vmatmul.mubr.bf16.gmra.mrb[0].mxu0 %v850
      %v999 = vpop.f32.mrb[0].mxu0
      %v1000 = vadd.f32 0.0, %v999
      %v1001 = vpop.f32.mrb[0].mxu0
      %v1002 = vpop.f32.mrb[0].mxu0
      %v1003 = vadd.f32 0.0, %v1002
      %v1004 = vpop.f32.mrb[0].mxu0
      %1005 = vmatprep.mubr.bf16.mxu0 0
      %1006 = vmatmul.mubr.bf16.gmra.mrb[0].mxu0 %v853
      %v1007 = vpop.f32.mrb[0].mxu0
      %v1008 = vadd.f32 0.0, %v1007
      %v1009 = vpop.f32.mrb[0].mxu0
      %v1010 = vpop.f32.mrb[0].mxu0
      %v1011 = vadd.f32 0.0, %v1010
      %v1012 = vpop.f32.mrb[0].mxu0
      %1013 = vmatprep.mubr.bf16.mxu0 0
      %1014 = vmatmul.mubr.bf16.gmra.mrb[0].mxu0 %v856
      %v1015 = vpop.f32.mrb[0].mxu0
      %v1016 = vadd.f32 0.0, %v1015
      %v1017 = vpop.f32.mrb[0].mxu0
      %v1018 = vpop.f32.mrb[0].mxu0
      %v1019 = vadd.f32 0.0, %v1018
      %v1020 = vpop.f32.mrb[0].mxu0
      %1021 = vdwg.mxu0
      %v1022 = vadd.f32 %v564, %v896
      %v1023 = vadd.f32 %v567, %v899
      %v1024 = vadd.f32 %v572, %v904
      %v1025 = vadd.f32 %v575, %v907
      %v1026 = vadd.f32 %v580, %v912
      %v1027 = vadd.f32 %v583, %v915
      %v1028 = vadd.f32 %v588, %v920
      %v1029 = vadd.f32 %v591, %v923
      %v1030 = vadd.f32 %v596, %v928
      %v1031 = vadd.f32 %v599, %v931
      %v1032 = vadd.f32 %v604, %v936
      %v1033 = vadd.f32 %v607, %v939
      %v1034 = vadd.f32 %v612, %v944
      %v1035 = vadd.f32 %v615, %v947
      %v1036 = vadd.f32 %v620, %v952
      %v1037 = vadd.f32 %v623, %v955
      %v1038 = vadd.f32 %v628, %v960
      %v1039 = vadd.f32 %v631, %v963
      %v1040 = vadd.f32 %v636, %v968
      %v1041 = vadd.f32 %v639, %v971
      %v1042 = vadd.f32 %v644, %v976
      %v1043 = vadd.f32 %v647, %v979
      %v1044 = vadd.f32 %v652, %v984
      %v1045 = vadd.f32 %v655, %v987
      %v1046 = vadd.f32 %v660, %v992
      %v1047 = vadd.f32 %v663, %v995
      %v1048 = vadd.f32 %v668, %v1000
      %v1049 = vadd.f32 %v671, %v1003
      %v1050 = vadd.f32 %v676, %v1008
      %v1051 = vadd.f32 %v679, %v1011
      %v1052 = vadd.f32 %v684, %v1016
      %v1053 = vadd.f32 %v687, %v1019
      %v1054 = vld [vmem:[%s2] sm:$0x1]
      %v1056 = vlaneseq
      %v1057 = vshrl.u32 %v1056, 7
      %v1058 = vsub.s32 0, %v1057
      %v1059 = vrot.slane %v1054, %v1058
      %v1061 = vadd.f32 %v1022, %v1059
      %v1062 = vadd.f32 %v1023, %v1059
      %v1063 = vadd.f32 %v1024, %v1059
      %v1064 = vadd.f32 %v1025, %v1059
      %v1065 = vadd.f32 %v1026, %v1059
      %v1066 = vadd.f32 %v1027, %v1059
      %v1067 = vadd.f32 %v1028, %v1059
      %v1068 = vadd.f32 %v1029, %v1059
      %v1069 = vadd.f32 %v1030, %v1059
      %v1070 = vadd.f32 %v1031, %v1059
      %v1071 = vadd.f32 %v1032, %v1059
      %v1072 = vadd.f32 %v1033, %v1059
      %v1073 = vadd.f32 %v1034, %v1059
      %v1074 = vadd.f32 %v1035, %v1059
      %v1075 = vadd.f32 %v1036, %v1059
      %v1076 = vadd.f32 %v1037, %v1059
      %v1077 = vadd.f32 %v1038, %v1059
      %v1078 = vadd.f32 %v1039, %v1059
      %v1079 = vadd.f32 %v1040, %v1059
      %v1080 = vadd.f32 %v1041, %v1059
      %v1081 = vadd.f32 %v1042, %v1059
      %v1082 = vadd.f32 %v1043, %v1059
      %v1083 = vadd.f32 %v1044, %v1059
      %v1084 = vadd.f32 %v1045, %v1059
      %v1085 = vadd.f32 %v1046, %v1059
      %v1086 = vadd.f32 %v1047, %v1059
      %v1087 = vadd.f32 %v1048, %v1059
      %v1088 = vadd.f32 %v1049, %v1059
      %v1089 = vadd.f32 %v1050, %v1059
      %v1090 = vadd.f32 %v1051, %v1059
      %v1091 = vadd.f32 %v1052, %v1059
      %v1092 = vadd.f32 %v1053, %v1059
      %v1093 = vmul.f32 %v1061, 0.5
      %v1094 = vmul.f32 %v1062, 0.5
      %v1095 = vmul.f32 %v1063, 0.5
      %v1096 = vmul.f32 %v1064, 0.5
      %v1097 = vmul.f32 %v1065, 0.5
      %v1098 = vmul.f32 %v1066, 0.5
      %v1099 = vmul.f32 %v1067, 0.5
      %v1100 = vmul.f32 %v1068, 0.5
      %v1101 = vmul.f32 %v1069, 0.5
      %v1102 = vmul.f32 %v1070, 0.5
      %v1103 = vmul.f32 %v1071, 0.5
      %v1104 = vmul.f32 %v1072, 0.5
      %v1105 = vmul.f32 %v1073, 0.5
      %v1106 = vmul.f32 %v1074, 0.5
      %v1107 = vmul.f32 %v1075, 0.5
      %v1108 = vmul.f32 %v1076, 0.5
      %v1109 = vmul.f32 %v1077, 0.5
      %v1110 = vmul.f32 %v1078, 0.5
      %v1111 = vmul.f32 %v1079, 0.5
      %v1112 = vmul.f32 %v1080, 0.5
      %v1113 = vmul.f32 %v1081, 0.5
      %v1114 = vmul.f32 %v1082, 0.5
      %v1115 = vmul.f32 %v1083, 0.5
      %v1116 = vmul.f32 %v1084, 0.5
      %v1117 = vmul.f32 %v1085, 0.5
      %v1118 = vmul.f32 %v1086, 0.5
      %v1119 = vmul.f32 %v1087, 0.5
      %v1120 = vmul.f32 %v1088, 0.5
      %v1121 = vmul.f32 %v1089, 0.5
      %v1122 = vmul.f32 %v1090, 0.5
      %v1123 = vmul.f32 %v1091, 0.5
      %v1124 = vmul.f32 %v1092, 0.5
      %v1125 = vmul.f32 %v1061, 0.70710677
      %v1126 = vmul.f32 %v1062, 0.70710677
      %v1127 = vmul.f32 %v1063, 0.70710677
      %v1128 = vmul.f32 %v1064, 0.70710677
      %v1129 = vmul.f32 %v1065, 0.70710677
      %v1130 = vmul.f32 %v1066, 0.70710677
      %v1131 = vmul.f32 %v1067, 0.70710677
      %v1132 = vmul.f32 %v1068, 0.70710677
      %v1133 = vmul.f32 %v1069, 0.70710677
      %v1134 = vmul.f32 %v1070, 0.70710677
      %v1135 = vmul.f32 %v1071, 0.70710677
      %v1136 = vmul.f32 %v1072, 0.70710677
      %v1137 = vmul.f32 %v1073, 0.70710677
      %v1138 = vmul.f32 %v1074, 0.70710677
      %v1139 = vmul.f32 %v1075, 0.70710677
      %v1140 = vmul.f32 %v1076, 0.70710677
      %v1141 = vmul.f32 %v1077, 0.70710677
      %v1142 = vmul.f32 %v1078, 0.70710677
      %v1143 = vmul.f32 %v1079, 0.70710677
      %v1144 = vmul.f32 %v1080, 0.70710677
      %v1145 = vmul.f32 %v1081, 0.70710677
      %v1146 = vmul.f32 %v1082, 0.70710677
      %v1147 = vmul.f32 %v1083, 0.70710677
      %v1148 = vmul.f32 %v1084, 0.70710677
      %v1149 = vmul.f32 %v1085, 0.70710677
      %v1150 = vmul.f32 %v1086, 0.70710677
      %v1151 = vmul.f32 %v1087, 0.70710677
      %v1152 = vmul.f32 %v1088, 0.70710677
      %v1153 = vmul.f32 %v1089, 0.70710677
      %v1154 = vmul.f32 %v1090, 0.70710677
      %v1155 = vmul.f32 %v1091, 0.70710677
      %v1156 = vmul.f32 %v1092, 0.70710677
      %vm1157 = vcmp.ge.f32.partialorder %v1125, 0.0
      %vm1158 = vcmp.ge.f32.partialorder %v1126, 0.0
      %vm1159 = vcmp.ge.f32.partialorder %v1127, 0.0
      %vm1160 = vcmp.ge.f32.partialorder %v1128, 0.0
      %vm1161 = vcmp.ge.f32.partialorder %v1129, 0.0
      %vm1162 = vcmp.ge.f32.partialorder %v1130, 0.0
      %vm1163 = vcmp.ge.f32.partialorder %v1131, 0.0
      %vm1164 = vcmp.ge.f32.partialorder %v1132, 0.0
      %vm1165 = vcmp.ge.f32.partialorder %v1133, 0.0
      %vm1166 = vcmp.ge.f32.partialorder %v1134, 0.0
      %vm1167 = vcmp.ge.f32.partialorder %v1135, 0.0
      %vm1168 = vcmp.ge.f32.partialorder %v1136, 0.0
      %vm1169 = vcmp.ge.f32.partialorder %v1137, 0.0
      %vm1170 = vcmp.ge.f32.partialorder %v1138, 0.0
      %vm1171 = vcmp.ge.f32.partialorder %v1139, 0.0
      %vm1172 = vcmp.ge.f32.partialorder %v1140, 0.0
      %vm1173 = vcmp.ge.f32.partialorder %v1141, 0.0
      %vm1174 = vcmp.ge.f32.partialorder %v1142, 0.0
      %vm1175 = vcmp.ge.f32.partialorder %v1143, 0.0
      %vm1176 = vcmp.ge.f32.partialorder %v1144, 0.0
      %vm1177 = vcmp.ge.f32.partialorder %v1145, 0.0
      %vm1178 = vcmp.ge.f32.partialorder %v1146, 0.0
      %vm1179 = vcmp.ge.f32.partialorder %v1147, 0.0
      %vm1180 = vcmp.ge.f32.partialorder %v1148, 0.0
      %vm1181 = vcmp.ge.f32.partialorder %v1149, 0.0
      %vm1182 = vcmp.ge.f32.partialorder %v1150, 0.0
      %vm1183 = vcmp.ge.f32.partialorder %v1151, 0.0
      %vm1184 = vcmp.ge.f32.partialorder %v1152, 0.0
      %vm1185 = vcmp.ge.f32.partialorder %v1153, 0.0
      %vm1186 = vcmp.ge.f32.partialorder %v1154, 0.0
      %vm1187 = vcmp.ge.f32.partialorder %v1155, 0.0
      %vm1188 = vcmp.ge.f32.partialorder %v1156, 0.0
      %v1189 = vsel %vm1157, 1.0, -1.0
      %v1190 = vsel %vm1158, 1.0, -1.0
      %v1191 = vsel %vm1159, 1.0, -1.0
      %v1192 = vsel %vm1160, 1.0, -1.0
      %v1193 = vsel %vm1161, 1.0, -1.0
      %v1194 = vsel %vm1162, 1.0, -1.0
      %v1195 = vsel %vm1163, 1.0, -1.0
      %v1196 = vsel %vm1164, 1.0, -1.0
      %v1197 = vsel %vm1165, 1.0, -1.0
      %v1198 = vsel %vm1166, 1.0, -1.0
      %v1199 = vsel %vm1167, 1.0, -1.0
      %v1200 = vsel %vm1168, 1.0, -1.0
      %v1201 = vsel %vm1169, 1.0, -1.0
      %v1202 = vsel %vm1170, 1.0, -1.0
      %v1203 = vsel %vm1171, 1.0, -1.0
      %v1204 = vsel %vm1172, 1.0, -1.0
      %v1205 = vsel %vm1173, 1.0, -1.0
      %v1206 = vsel %vm1174, 1.0, -1.0
      %v1207 = vsel %vm1175, 1.0, -1.0
      %v1208 = vsel %vm1176, 1.0, -1.0
      %v1209 = vsel %vm1177, 1.0, -1.0
      %v1210 = vsel %vm1178, 1.0, -1.0
      %v1211 = vsel %vm1179, 1.0, -1.0
      %v1212 = vsel %vm1180, 1.0, -1.0
      %v1213 = vsel %vm1181, 1.0, -1.0
      %v1214 = vsel %vm1182, 1.0, -1.0
      %v1215 = vsel %vm1183, 1.0, -1.0
      %v1216 = vsel %vm1184, 1.0, -1.0
      %v1217 = vsel %vm1185, 1.0, -1.0
      %v1218 = vsel %vm1186, 1.0, -1.0
      %v1219 = vsel %vm1187, 1.0, -1.0
      %v1220 = vsel %vm1188, 1.0, -1.0
      %v1221 = vand.u32 2147483647, %v1125
      %v1222 = vand.u32 2147483647, %v1126
      %v1223 = vand.u32 2147483647, %v1127
      %v1224 = vand.u32 2147483647, %v1128
      %v1225 = vand.u32 2147483647, %v1129
      %v1226 = vand.u32 2147483647, %v1130
      %v1227 = vand.u32 2147483647, %v1131
      %v1228 = vand.u32 2147483647, %v1132
      %v1229 = vand.u32 2147483647, %v1133
      %v1230 = vand.u32 2147483647, %v1134
      %v1231 = vand.u32 2147483647, %v1135
      %v1232 = vand.u32 2147483647, %v1136
      %v1233 = vand.u32 2147483647, %v1137
      %v1234 = vand.u32 2147483647, %v1138
      %v1235 = vand.u32 2147483647, %v1139
      %v1236 = vand.u32 2147483647, %v1140
      %v1237 = vand.u32 2147483647, %v1141
      %v1238 = vand.u32 2147483647, %v1142
      %v1239 = vand.u32 2147483647, %v1143
      %v1240 = vand.u32 2147483647, %v1144
      %v1241 = vand.u32 2147483647, %v1145
      %v1242 = vand.u32 2147483647, %v1146
      %v1243 = vand.u32 2147483647, %v1147
      %v1244 = vand.u32 2147483647, %v1148
      %v1245 = vand.u32 2147483647, %v1149
      %v1246 = vand.u32 2147483647, %v1150
      %v1247 = vand.u32 2147483647, %v1151
      %v1248 = vand.u32 2147483647, %v1152
      %v1249 = vand.u32 2147483647, %v1153
      %v1250 = vand.u32 2147483647, %v1154
      %v1251 = vand.u32 2147483647, %v1155
      %v1252 = vand.u32 2147483647, %v1156
      %v1253 = vmul.f32 %v1221, 0.3275911
      %v1254 = vmul.f32 %v1222, 0.3275911
      %v1255 = vmul.f32 %v1223, 0.3275911
      %v1256 = vmul.f32 %v1224, 0.3275911
      %v1257 = vmul.f32 %v1225, 0.3275911
      %v1258 = vmul.f32 %v1226, 0.3275911
      %v1259 = vmul.f32 %v1227, 0.3275911
      %v1260 = vmul.f32 %v1228, 0.3275911
      %v1261 = vmul.f32 %v1229, 0.3275911
      %v1262 = vmul.f32 %v1230, 0.3275911
      %v1263 = vmul.f32 %v1231, 0.3275911
      %v1264 = vmul.f32 %v1232, 0.3275911
      %v1265 = vmul.f32 %v1233, 0.3275911
      %v1266 = vmul.f32 %v1234, 0.3275911
      %v1267 = vmul.f32 %v1235, 0.3275911
      %v1268 = vmul.f32 %v1236, 0.3275911
      %v1269 = vmul.f32 %v1237, 0.3275911
      %v1270 = vmul.f32 %v1238, 0.3275911
      %v1271 = vmul.f32 %v1239, 0.3275911
      %v1272 = vmul.f32 %v1240, 0.3275911
      %v1273 = vmul.f32 %v1241, 0.3275911
      %v1274 = vmul.f32 %v1242, 0.3275911
      %v1275 = vmul.f32 %v1243, 0.3275911
      %v1276 = vmul.f32 %v1244, 0.3275911
      %v1277 = vmul.f32 %v1245, 0.3275911
      %v1278 = vmul.f32 %v1246, 0.3275911
      %v1279 = vmul.f32 %v1247, 0.3275911
      %v1280 = vmul.f32 %v1248, 0.3275911
      %v1281 = vmul.f32 %v1249, 0.3275911
      %v1282 = vmul.f32 %v1250, 0.3275911
      %v1283 = vmul.f32 %v1251, 0.3275911
      %v1284 = vmul.f32 %v1252, 0.3275911
      %v1285 = vadd.f32 %v1253, 1.0
      %v1286 = vadd.f32 %v1254, 1.0
      %v1287 = vadd.f32 %v1255, 1.0
      %v1288 = vadd.f32 %v1256, 1.0
      %v1289 = vadd.f32 %v1257, 1.0
      %v1290 = vadd.f32 %v1258, 1.0
      %v1291 = vadd.f32 %v1259, 1.0
      %v1292 = vadd.f32 %v1260, 1.0
      %v1293 = vadd.f32 %v1261, 1.0
      %v1294 = vadd.f32 %v1262, 1.0
      %v1295 = vadd.f32 %v1263, 1.0
      %v1296 = vadd.f32 %v1264, 1.0
      %v1297 = vadd.f32 %v1265, 1.0
      %v1298 = vadd.f32 %v1266, 1.0
      %v1299 = vadd.f32 %v1267, 1.0
      %v1300 = vadd.f32 %v1268, 1.0
      %v1301 = vadd.f32 %v1269, 1.0
      %v1302 = vadd.f32 %v1270, 1.0
      %v1303 = vadd.f32 %v1271, 1.0
      %v1304 = vadd.f32 %v1272, 1.0
      %v1305 = vadd.f32 %v1273, 1.0
      %v1306 = vadd.f32 %v1274, 1.0
      %v1307 = vadd.f32 %v1275, 1.0
      %v1308 = vadd.f32 %v1276, 1.0
      %v1309 = vadd.f32 %v1277, 1.0
      %v1310 = vadd.f32 %v1278, 1.0
      %v1311 = vadd.f32 %v1279, 1.0
      %v1312 = vadd.f32 %v1280, 1.0
      %v1313 = vadd.f32 %v1281, 1.0
      %v1314 = vadd.f32 %v1282, 1.0
      %v1315 = vadd.f32 %v1283, 1.0
      %v1316 = vadd.f32 %v1284, 1.0
      %v1317 = vrcp.pop %v1285
      %v1318 = vrcp.pop %v1286
      %v1319 = vrcp.pop %v1287
      %v1320 = vrcp.pop %v1288
      %v1321 = vrcp.pop %v1289
      %v1322 = vrcp.pop %v1290
      %v1323 = vrcp.pop %v1291
      %v1324 = vrcp.pop %v1292
      %v1325 = vrcp.pop %v1293
      %v1326 = vrcp.pop %v1294
      %v1327 = vrcp.pop %v1295
      %v1328 = vrcp.pop %v1296
      %v1329 = vrcp.pop %v1297
      %v1330 = vrcp.pop %v1298
      %v1331 = vrcp.pop %v1299
      %v1332 = vrcp.pop %v1300
      %v1333 = vrcp.pop %v1301
      %v1334 = vrcp.pop %v1302
      %v1335 = vrcp.pop %v1303
      %v1336 = vrcp.pop %v1304
      %v1337 = vrcp.pop %v1305
      %v1338 = vrcp.pop %v1306
      %v1339 = vrcp.pop %v1307
      %v1340 = vrcp.pop %v1308
      %v1341 = vrcp.pop %v1309
      %v1342 = vrcp.pop %v1310
      %v1343 = vrcp.pop %v1311
      %v1344 = vrcp.pop %v1312
      %v1345 = vrcp.pop %v1313
      %v1346 = vrcp.pop %v1314
      %v1347 = vrcp.pop %v1315
      %v1348 = vrcp.pop %v1316
      %v1349 = vmul.f32 %v1317, 1.0614054
      %v1350 = vmul.f32 %v1318, 1.0614054
      %v1351 = vmul.f32 %v1319, 1.0614054
      %v1352 = vmul.f32 %v1320, 1.0614054
      %v1353 = vmul.f32 %v1321, 1.0614054
      %v1354 = vmul.f32 %v1322, 1.0614054
      %v1355 = vmul.f32 %v1323, 1.0614054
      %v1356 = vmul.f32 %v1324, 1.0614054
      %v1357 = vmul.f32 %v1325, 1.0614054
      %v1358 = vmul.f32 %v1326, 1.0614054
      %v1359 = vmul.f32 %v1327, 1.0614054
      %v1360 = vmul.f32 %v1328, 1.0614054
      %v1361 = vmul.f32 %v1329, 1.0614054
      %v1362 = vmul.f32 %v1330, 1.0614054
      %v1363 = vmul.f32 %v1331, 1.0614054
      %v1364 = vmul.f32 %v1332, 1.0614054
      %v1365 = vmul.f32 %v1333, 1.0614054
      %v1366 = vmul.f32 %v1334, 1.0614054
      %v1367 = vmul.f32 %v1335, 1.0614054
      %v1368 = vmul.f32 %v1336, 1.0614054
      %v1369 = vmul.f32 %v1337, 1.0614054
      %v1370 = vmul.f32 %v1338, 1.0614054
      %v1371 = vmul.f32 %v1339, 1.0614054
      %v1372 = vmul.f32 %v1340, 1.0614054
      %v1373 = vmul.f32 %v1341, 1.0614054
      %v1374 = vmul.f32 %v1342, 1.0614054
      %v1375 = vmul.f32 %v1343, 1.0614054
      %v1376 = vmul.f32 %v1344, 1.0614054
      %v1377 = vmul.f32 %v1345, 1.0614054
      %v1378 = vmul.f32 %v1346, 1.0614054
      %v1379 = vmul.f32 %v1347, 1.0614054
      %v1380 = vmul.f32 %v1348, 1.0614054
      %v1381 = vadd.f32 %v1349, -1.4531521
      %v1382 = vadd.f32 %v1350, -1.4531521
      %v1383 = vadd.f32 %v1351, -1.4531521
      %v1384 = vadd.f32 %v1352, -1.4531521
      %v1385 = vadd.f32 %v1353, -1.4531521
      %v1386 = vadd.f32 %v1354, -1.4531521
      %v1387 = vadd.f32 %v1355, -1.4531521
      %v1388 = vadd.f32 %v1356, -1.4531521
      %v1389 = vadd.f32 %v1357, -1.4531521
      %v1390 = vadd.f32 %v1358, -1.4531521
      %v1391 = vadd.f32 %v1359, -1.4531521
      %v1392 = vadd.f32 %v1360, -1.4531521
      %v1393 = vadd.f32 %v1361, -1.4531521
      %v1394 = vadd.f32 %v1362, -1.4531521
      %v1395 = vadd.f32 %v1363, -1.4531521
      %v1396 = vadd.f32 %v1364, -1.4531521
      %v1397 = vadd.f32 %v1365, -1.4531521
      %v1398 = vadd.f32 %v1366, -1.4531521
      %v1399 = vadd.f32 %v1367, -1.4531521
      %v1400 = vadd.f32 %v1368, -1.4531521
      %v1401 = vadd.f32 %v1369, -1.4531521
      %v1402 = vadd.f32 %v1370, -1.4531521
      %v1403 = vadd.f32 %v1371, -1.4531521
      %v1404 = vadd.f32 %v1372, -1.4531521
      %v1405 = vadd.f32 %v1373, -1.4531521
      %v1406 = vadd.f32 %v1374, -1.4531521
      %v1407 = vadd.f32 %v1375, -1.4531521
      %v1408 = vadd.f32 %v1376, -1.4531521
      %v1409 = vadd.f32 %v1377, -1.4531521
      %v1410 = vadd.f32 %v1378, -1.4531521
      %v1411 = vadd.f32 %v1379, -1.4531521
      %v1412 = vadd.f32 %v1380, -1.4531521
      %v1413 = vmul.f32 %v1381, %v1317
      %v1414 = vmul.f32 %v1382, %v1318
      %v1415 = vmul.f32 %v1383, %v1319
      %v1416 = vmul.f32 %v1384, %v1320
      %v1417 = vmul.f32 %v1385, %v1321
      %v1418 = vmul.f32 %v1386, %v1322
      %v1419 = vmul.f32 %v1387, %v1323
      %v1420 = vmul.f32 %v1388, %v1324
      %v1421 = vmul.f32 %v1389, %v1325
      %v1422 = vmul.f32 %v1390, %v1326
      %v1423 = vmul.f32 %v1391, %v1327
      %v1424 = vmul.f32 %v1392, %v1328
      %v1425 = vmul.f32 %v1393, %v1329
      %v1426 = vmul.f32 %v1394, %v1330
      %v1427 = vmul.f32 %v1395, %v1331
      %v1428 = vmul.f32 %v1396, %v1332
      %v1429 = vmul.f32 %v1397, %v1333
      %v1430 = vmul.f32 %v1398, %v1334
      %v1431 = vmul.f32 %v1399, %v1335
      %v1432 = vmul.f32 %v1400, %v1336
      %v1433 = vmul.f32 %v1401, %v1337
      %v1434 = vmul.f32 %v1402, %v1338
      %v1435 = vmul.f32 %v1403, %v1339
      %v1436 = vmul.f32 %v1404, %v1340
      %v1437 = vmul.f32 %v1405, %v1341
      %v1438 = vmul.f32 %v1406, %v1342
      %v1439 = vmul.f32 %v1407, %v1343
      %v1440 = vmul.f32 %v1408, %v1344
      %v1441 = vmul.f32 %v1409, %v1345
      %v1442 = vmul.f32 %v1410, %v1346
      %v1443 = vmul.f32 %v1411, %v1347
      %v1444 = vmul.f32 %v1412, %v1348
      %v1445 = vadd.f32 %v1413, 1.4214138
      %v1446 = vadd.f32 %v1414, 1.4214138
      %v1447 = vadd.f32 %v1415, 1.4214138
      %v1448 = vadd.f32 %v1416, 1.4214138
      %v1449 = vadd.f32 %v1417, 1.4214138
      %v1450 = vadd.f32 %v1418, 1.4214138
      %v1451 = vadd.f32 %v1419, 1.4214138
      %v1452 = vadd.f32 %v1420, 1.4214138
      %v1453 = vadd.f32 %v1421, 1.4214138
      %v1454 = vadd.f32 %v1422, 1.4214138
      %v1455 = vadd.f32 %v1423, 1.4214138
      %v1456 = vadd.f32 %v1424, 1.4214138
      %v1457 = vadd.f32 %v1425, 1.4214138
      %v1458 = vadd.f32 %v1426, 1.4214138
      %v1459 = vadd.f32 %v1427, 1.4214138
      %v1460 = vadd.f32 %v1428, 1.4214138
      %v1461 = vadd.f32 %v1429, 1.4214138
      %v1462 = vadd.f32 %v1430, 1.4214138
      %v1463 = vadd.f32 %v1431, 1.4214138
      %v1464 = vadd.f32 %v1432, 1.4214138
      %v1465 = vadd.f32 %v1433, 1.4214138
      %v1466 = vadd.f32 %v1434, 1.4214138
      %v1467 = vadd.f32 %v1435, 1.4214138
      %v1468 = vadd.f32 %v1436, 1.4214138
      %v1469 = vadd.f32 %v1437, 1.4214138
      %v1470 = vadd.f32 %v1438, 1.4214138
      %v1471 = vadd.f32 %v1439, 1.4214138
      %v1472 = vadd.f32 %v1440, 1.4214138
      %v1473 = vadd.f32 %v1441, 1.4214138
      %v1474 = vadd.f32 %v1442, 1.4214138
      %v1475 = vadd.f32 %v1443, 1.4214138
      %v1476 = vadd.f32 %v1444, 1.4214138
      %v1477 = vmul.f32 %v1445, %v1317
      %v1478 = vmul.f32 %v1446, %v1318
      %v1479 = vmul.f32 %v1447, %v1319
      %v1480 = vmul.f32 %v1448, %v1320
      %v1481 = vmul.f32 %v1449, %v1321
      %v1482 = vmul.f32 %v1450, %v1322
      %v1483 = vmul.f32 %v1451, %v1323
      %v1484 = vmul.f32 %v1452, %v1324
      %v1485 = vmul.f32 %v1453, %v1325
      %v1486 = vmul.f32 %v1454, %v1326
      %v1487 = vmul.f32 %v1455, %v1327
      %v1488 = vmul.f32 %v1456, %v1328
      %v1489 = vmul.f32 %v1457, %v1329
      %v1490 = vmul.f32 %v1458, %v1330
      %v1491 = vmul.f32 %v1459, %v1331
      %v1492 = vmul.f32 %v1460, %v1332
      %v1493 = vmul.f32 %v1461, %v1333
      %v1494 = vmul.f32 %v1462, %v1334
      %v1495 = vmul.f32 %v1463, %v1335
      %v1496 = vmul.f32 %v1464, %v1336
      %v1497 = vmul.f32 %v1465, %v1337
      %v1498 = vmul.f32 %v1466, %v1338
      %v1499 = vmul.f32 %v1467, %v1339
      %v1500 = vmul.f32 %v1468, %v1340
      %v1501 = vmul.f32 %v1469, %v1341
      %v1502 = vmul.f32 %v1470, %v1342
      %v1503 = vmul.f32 %v1471, %v1343
      %v1504 = vmul.f32 %v1472, %v1344
      %v1505 = vmul.f32 %v1473, %v1345
      %v1506 = vmul.f32 %v1474, %v1346
      %v1507 = vmul.f32 %v1475, %v1347
      %v1508 = vmul.f32 %v1476, %v1348
      %v1509 = vadd.f32 %v1477, -0.28449672
      %v1510 = vadd.f32 %v1478, -0.28449672
      %v1511 = vadd.f32 %v1479, -0.28449672
      %v1512 = vadd.f32 %v1480, -0.28449672
      %v1513 = vadd.f32 %v1481, -0.28449672
      %v1514 = vadd.f32 %v1482, -0.28449672
      %v1515 = vadd.f32 %v1483, -0.28449672
      %v1516 = vadd.f32 %v1484, -0.28449672
      %v1517 = vadd.f32 %v1485, -0.28449672
      %v1518 = vadd.f32 %v1486, -0.28449672
      %v1519 = vadd.f32 %v1487, -0.28449672
      %v1520 = vadd.f32 %v1488, -0.28449672
      %v1521 = vadd.f32 %v1489, -0.28449672
      %v1522 = vadd.f32 %v1490, -0.28449672
      %v1523 = vadd.f32 %v1491, -0.28449672
      %v1524 = vadd.f32 %v1492, -0.28449672
      %v1525 = vadd.f32 %v1493, -0.28449672
      %v1526 = vadd.f32 %v1494, -0.28449672
      %v1527 = vadd.f32 %v1495, -0.28449672
      %v1528 = vadd.f32 %v1496, -0.28449672
      %v1529 = vadd.f32 %v1497, -0.28449672
      %v1530 = vadd.f32 %v1498, -0.28449672
      %v1531 = vadd.f32 %v1499, -0.28449672
      %v1532 = vadd.f32 %v1500, -0.28449672
      %v1533 = vadd.f32 %v1501, -0.28449672
      %v1534 = vadd.f32 %v1502, -0.28449672
      %v1535 = vadd.f32 %v1503, -0.28449672
      %v1536 = vadd.f32 %v1504, -0.28449672
      %v1537 = vadd.f32 %v1505, -0.28449672
      %v1538 = vadd.f32 %v1506, -0.28449672
      %v1539 = vadd.f32 %v1507, -0.28449672
      %v1540 = vadd.f32 %v1508, -0.28449672
      %v1541 = vmul.f32 %v1509, %v1317
      %v1542 = vmul.f32 %v1510, %v1318
      %v1543 = vmul.f32 %v1511, %v1319
      %v1544 = vmul.f32 %v1512, %v1320
      %v1545 = vmul.f32 %v1513, %v1321
      %v1546 = vmul.f32 %v1514, %v1322
      %v1547 = vmul.f32 %v1515, %v1323
      %v1548 = vmul.f32 %v1516, %v1324
      %v1549 = vmul.f32 %v1517, %v1325
      %v1550 = vmul.f32 %v1518, %v1326
      %v1551 = vmul.f32 %v1519, %v1327
      %v1552 = vmul.f32 %v1520, %v1328
      %v1553 = vmul.f32 %v1521, %v1329
      %v1554 = vmul.f32 %v1522, %v1330
      %v1555 = vmul.f32 %v1523, %v1331
      %v1556 = vmul.f32 %v1524, %v1332
      %v1557 = vmul.f32 %v1525, %v1333
      %v1558 = vmul.f32 %v1526, %v1334
      %v1559 = vmul.f32 %v1527, %v1335
      %v1560 = vmul.f32 %v1528, %v1336
      %v1561 = vmul.f32 %v1529, %v1337
      %v1562 = vmul.f32 %v1530, %v1338
      %v1563 = vmul.f32 %v1531, %v1339
      %v1564 = vmul.f32 %v1532, %v1340
      %v1565 = vmul.f32 %v1533, %v1341
      %v1566 = vmul.f32 %v1534, %v1342
      %v1567 = vmul.f32 %v1535, %v1343
      %v1568 = vmul.f32 %v1536, %v1344
      %v1569 = vmul.f32 %v1537, %v1345
      %v1570 = vmul.f32 %v1538, %v1346
      %v1571 = vmul.f32 %v1539, %v1347
      %v1572 = vmul.f32 %v1540, %v1348
      %v1573 = vadd.f32 %v1541, 0.2548296
      %v1574 = vadd.f32 %v1542, 0.2548296
      %v1575 = vadd.f32 %v1543, 0.2548296
      %v1576 = vadd.f32 %v1544, 0.2548296
      %v1577 = vadd.f32 %v1545, 0.2548296
      %v1578 = vadd.f32 %v1546, 0.2548296
      %v1579 = vadd.f32 %v1547, 0.2548296
      %v1580 = vadd.f32 %v1548, 0.2548296
      %v1581 = vadd.f32 %v1549, 0.2548296
      %v1582 = vadd.f32 %v1550, 0.2548296
      %v1583 = vadd.f32 %v1551, 0.2548296
      %v1584 = vadd.f32 %v1552, 0.2548296
      %v1585 = vadd.f32 %v1553, 0.2548296
      %v1586 = vadd.f32 %v1554, 0.2548296
      %v1587 = vadd.f32 %v1555, 0.2548296
      %v1588 = vadd.f32 %v1556, 0.2548296
      %v1589 = vadd.f32 %v1557, 0.2548296
      %v1590 = vadd.f32 %v1558, 0.2548296
      %v1591 = vadd.f32 %v1559, 0.2548296
      %v1592 = vadd.f32 %v1560, 0.2548296
      %v1593 = vadd.f32 %v1561, 0.2548296
      %v1594 = vadd.f32 %v1562, 0.2548296
      %v1595 = vadd.f32 %v1563, 0.2548296
      %v1596 = vadd.f32 %v1564, 0.2548296
      %v1597 = vadd.f32 %v1565, 0.2548296
      %v1598 = vadd.f32 %v1566, 0.2548296
      %v1599 = vadd.f32 %v1567, 0.2548296
      %v1600 = vadd.f32 %v1568, 0.2548296
      %v1601 = vadd.f32 %v1569, 0.2548296
      %v1602 = vadd.f32 %v1570, 0.2548296
      %v1603 = vadd.f32 %v1571, 0.2548296
      %v1604 = vadd.f32 %v1572, 0.2548296
      %v1605 = vmul.f32 %v1573, %v1317
      %v1606 = vmul.f32 %v1574, %v1318
      %v1607 = vmul.f32 %v1575, %v1319
      %v1608 = vmul.f32 %v1576, %v1320
      %v1609 = vmul.f32 %v1577, %v1321
      %v1610 = vmul.f32 %v1578, %v1322
      %v1611 = vmul.f32 %v1579, %v1323
      %v1612 = vmul.f32 %v1580, %v1324
      %v1613 = vmul.f32 %v1581, %v1325
      %v1614 = vmul.f32 %v1582, %v1326
      %v1615 = vmul.f32 %v1583, %v1327
      %v1616 = vmul.f32 %v1584, %v1328
      %v1617 = vmul.f32 %v1585, %v1329
      %v1618 = vmul.f32 %v1586, %v1330
      %v1619 = vmul.f32 %v1587, %v1331
      %v1620 = vmul.f32 %v1588, %v1332
      %v1621 = vmul.f32 %v1589, %v1333
      %v1622 = vmul.f32 %v1590, %v1334
      %v1623 = vmul.f32 %v1591, %v1335
      %v1624 = vmul.f32 %v1592, %v1336
      %v1625 = vmul.f32 %v1593, %v1337
      %v1626 = vmul.f32 %v1594, %v1338
      %v1627 = vmul.f32 %v1595, %v1339
      %v1628 = vmul.f32 %v1596, %v1340
      %v1629 = vmul.f32 %v1597, %v1341
      %v1630 = vmul.f32 %v1598, %v1342
      %v1631 = vmul.f32 %v1599, %v1343
      %v1632 = vmul.f32 %v1600, %v1344
      %v1633 = vmul.f32 %v1601, %v1345
      %v1634 = vmul.f32 %v1602, %v1346
      %v1635 = vmul.f32 %v1603, %v1347
      %v1636 = vmul.f32 %v1604, %v1348
      %v1637 = vsub.f32 0.0, %v1221
      %v1638 = vsub.f32 0.0, %v1222
      %v1639 = vsub.f32 0.0, %v1223
      %v1640 = vsub.f32 0.0, %v1224
      %v1641 = vsub.f32 0.0, %v1225
      %v1642 = vsub.f32 0.0, %v1226
      %v1643 = vsub.f32 0.0, %v1227
      %v1644 = vsub.f32 0.0, %v1228
      %v1645 = vsub.f32 0.0, %v1229
      %v1646 = vsub.f32 0.0, %v1230
      %v1647 = vsub.f32 0.0, %v1231
      %v1648 = vsub.f32 0.0, %v1232
      %v1649 = vsub.f32 0.0, %v1233
      %v1650 = vsub.f32 0.0, %v1234
      %v1651 = vsub.f32 0.0, %v1235
      %v1652 = vsub.f32 0.0, %v1236
      %v1653 = vsub.f32 0.0, %v1237
      %v1654 = vsub.f32 0.0, %v1238
      %v1655 = vsub.f32 0.0, %v1239
      %v1656 = vsub.f32 0.0, %v1240
      %v1657 = vsub.f32 0.0, %v1241
      %v1658 = vsub.f32 0.0, %v1242
      %v1659 = vsub.f32 0.0, %v1243
      %v1660 = vsub.f32 0.0, %v1244
      %v1661 = vsub.f32 0.0, %v1245
      %v1662 = vsub.f32 0.0, %v1246
      %v1663 = vsub.f32 0.0, %v1247
      %v1664 = vsub.f32 0.0, %v1248
      %v1665 = vsub.f32 0.0, %v1249
      %v1666 = vsub.f32 0.0, %v1250
      %v1667 = vsub.f32 0.0, %v1251
      %v1668 = vsub.f32 0.0, %v1252
      %v1669 = vmul.f32 %v1637, %v1221
      %v1670 = vmul.f32 %v1638, %v1222
      %v1671 = vmul.f32 %v1639, %v1223
      %v1672 = vmul.f32 %v1640, %v1224
      %v1673 = vmul.f32 %v1641, %v1225
      %v1674 = vmul.f32 %v1642, %v1226
      %v1675 = vmul.f32 %v1643, %v1227
      %v1676 = vmul.f32 %v1644, %v1228
      %v1677 = vmul.f32 %v1645, %v1229
      %v1678 = vmul.f32 %v1646, %v1230
      %v1679 = vmul.f32 %v1647, %v1231
      %v1680 = vmul.f32 %v1648, %v1232
      %v1681 = vmul.f32 %v1649, %v1233
      %v1682 = vmul.f32 %v1650, %v1234
      %v1683 = vmul.f32 %v1651, %v1235
      %v1684 = vmul.f32 %v1652, %v1236
      %v1685 = vmul.f32 %v1653, %v1237
      %v1686 = vmul.f32 %v1654, %v1238
      %v1687 = vmul.f32 %v1655, %v1239
      %v1688 = vmul.f32 %v1656, %v1240
      %v1689 = vmul.f32 %v1657, %v1241
      %v1690 = vmul.f32 %v1658, %v1242
      %v1691 = vmul.f32 %v1659, %v1243
      %v1692 = vmul.f32 %v1660, %v1244
      %v1693 = vmul.f32 %v1661, %v1245
      %v1694 = vmul.f32 %v1662, %v1246
      %v1695 = vmul.f32 %v1663, %v1247
      %v1696 = vmul.f32 %v1664, %v1248
      %v1697 = vmul.f32 %v1665, %v1249
      %v1698 = vmul.f32 %v1666, %v1250
      %v1699 = vmul.f32 %v1667, %v1251
      %v1700 = vmul.f32 %v1668, %v1252
      %v1701 = vmul.f32 %v1669, 1.442695
      %v1702 = vpow.pop %v1701
      %v1703 = vmul.f32 %v1670, 1.442695
      %v1704 = vpow.pop %v1703
      %v1705 = vmul.f32 %v1671, 1.442695
      %v1706 = vpow.pop %v1705
      %v1707 = vmul.f32 %v1672, 1.442695
      %v1708 = vpow.pop %v1707
      %v1709 = vmul.f32 %v1673, 1.442695
      %v1710 = vpow.pop %v1709
      %v1711 = vmul.f32 %v1674, 1.442695
      %v1712 = vpow.pop %v1711
      %v1713 = vmul.f32 %v1675, 1.442695
      %v1714 = vpow.pop %v1713
      %v1715 = vmul.f32 %v1676, 1.442695
      %v1716 = vpow.pop %v1715
      %v1717 = vmul.f32 %v1677, 1.442695
      %v1718 = vpow.pop %v1717
      %v1719 = vmul.f32 %v1678, 1.442695
      %v1720 = vpow.pop %v1719
      %v1721 = vmul.f32 %v1679, 1.442695
      %v1722 = vpow.pop %v1721
      %v1723 = vmul.f32 %v1680, 1.442695
      %v1724 = vpow.pop %v1723
      %v1725 = vmul.f32 %v1681, 1.442695
      %v1726 = vpow.pop %v1725
      %v1727 = vmul.f32 %v1682, 1.442695
      %v1728 = vpow.pop %v1727
      %v1729 = vmul.f32 %v1683, 1.442695
      %v1730 = vpow.pop %v1729
      %v1731 = vmul.f32 %v1684, 1.442695
      %v1732 = vpow.pop %v1731
      %v1733 = vmul.f32 %v1685, 1.442695
      %v1734 = vpow.pop %v1733
      %v1735 = vmul.f32 %v1686, 1.442695
      %v1736 = vpow.pop %v1735
      %v1737 = vmul.f32 %v1687, 1.442695
      %v1738 = vpow.pop %v1737
      %v1739 = vmul.f32 %v1688, 1.442695
      %v1740 = vpow.pop %v1739
      %v1741 = vmul.f32 %v1689, 1.442695
      %v1742 = vpow.pop %v1741
      %v1743 = vmul.f32 %v1690, 1.442695
      %v1744 = vpow.pop %v1743
      %v1745 = vmul.f32 %v1691, 1.442695
      %v1746 = vpow.pop %v1745
      %v1747 = vmul.f32 %v1692, 1.442695
      %v1748 = vpow.pop %v1747
      %v1749 = vmul.f32 %v1693, 1.442695
      %v1750 = vpow.pop %v1749
      %v1751 = vmul.f32 %v1694, 1.442695
      %v1752 = vpow.pop %v1751
      %v1753 = vmul.f32 %v1695, 1.442695
      %v1754 = vpow.pop %v1753
      %v1755 = vmul.f32 %v1696, 1.442695
      %v1756 = vpow.pop %v1755
      %v1757 = vmul.f32 %v1697, 1.442695
      %v1758 = vpow.pop %v1757
      %v1759 = vmul.f32 %v1698, 1.442695
      %v1760 = vpow.pop %v1759
      %v1761 = vmul.f32 %v1699, 1.442695
      %v1762 = vpow.pop %v1761
      %v1763 = vmul.f32 %v1700, 1.442695
      %v1764 = vpow.pop %v1763
      %v1765 = vmul.f32 %v1605, %v1702
      %v1766 = vmul.f32 %v1606, %v1704
      %v1767 = vmul.f32 %v1607, %v1706
      %v1768 = vmul.f32 %v1608, %v1708
      %v1769 = vmul.f32 %v1609, %v1710
      %v1770 = vmul.f32 %v1610, %v1712
      %v1771 = vmul.f32 %v1611, %v1714
      %v1772 = vmul.f32 %v1612, %v1716
      %v1773 = vmul.f32 %v1613, %v1718
      %v1774 = vmul.f32 %v1614, %v1720
      %v1775 = vmul.f32 %v1615, %v1722
      %v1776 = vmul.f32 %v1616, %v1724
      %v1777 = vmul.f32 %v1617, %v1726
      %v1778 = vmul.f32 %v1618, %v1728
      %v1779 = vmul.f32 %v1619, %v1730
      %v1780 = vmul.f32 %v1620, %v1732
      %v1781 = vmul.f32 %v1621, %v1734
      %v1782 = vmul.f32 %v1622, %v1736
      %v1783 = vmul.f32 %v1623, %v1738
      %v1784 = vmul.f32 %v1624, %v1740
      %v1785 = vmul.f32 %v1625, %v1742
      %v1786 = vmul.f32 %v1626, %v1744
      %v1787 = vmul.f32 %v1627, %v1746
      %v1788 = vmul.f32 %v1628, %v1748
      %v1789 = vmul.f32 %v1629, %v1750
      %v1790 = vmul.f32 %v1630, %v1752
      %v1791 = vmul.f32 %v1631, %v1754
      %v1792 = vmul.f32 %v1632, %v1756
      %v1793 = vmul.f32 %v1633, %v1758
      %v1794 = vmul.f32 %v1634, %v1760
      %v1795 = vmul.f32 %v1635, %v1762
      %v1796 = vmul.f32 %v1636, %v1764
      %v1797 = vsub.f32 1.0, %v1765
      %v1798 = vsub.f32 1.0, %v1766
      %v1799 = vsub.f32 1.0, %v1767
      %v1800 = vsub.f32 1.0, %v1768
      %v1801 = vsub.f32 1.0, %v1769
      %v1802 = vsub.f32 1.0, %v1770
      %v1803 = vsub.f32 1.0, %v1771
      %v1804 = vsub.f32 1.0, %v1772
      %v1805 = vsub.f32 1.0, %v1773
      %v1806 = vsub.f32 1.0, %v1774
      %v1807 = vsub.f32 1.0, %v1775
      %v1808 = vsub.f32 1.0, %v1776
      %v1809 = vsub.f32 1.0, %v1777
      %v1810 = vsub.f32 1.0, %v1778
      %v1811 = vsub.f32 1.0, %v1779
      %v1812 = vsub.f32 1.0, %v1780
      %v1813 = vsub.f32 1.0, %v1781
      %v1814 = vsub.f32 1.0, %v1782
      %v1815 = vsub.f32 1.0, %v1783
      %v1816 = vsub.f32 1.0, %v1784
      %v1817 = vsub.f32 1.0, %v1785
      %v1818 = vsub.f32 1.0, %v1786
      %v1819 = vsub.f32 1.0, %v1787
      %v1820 = vsub.f32 1.0, %v1788
      %v1821 = vsub.f32 1.0, %v1789
      %v1822 = vsub.f32 1.0, %v1790
      %v1823 = vsub.f32 1.0, %v1791
      %v1824 = vsub.f32 1.0, %v1792
      %v1825 = vsub.f32 1.0, %v1793
      %v1826 = vsub.f32 1.0, %v1794
      %v1827 = vsub.f32 1.0, %v1795
      %v1828 = vsub.f32 1.0, %v1796
      %v1829 = vmul.f32 %v1189, %v1797
      %v1830 = vmul.f32 %v1190, %v1798
      %v1831 = vmul.f32 %v1191, %v1799
      %v1832 = vmul.f32 %v1192, %v1800
      %v1833 = vmul.f32 %v1193, %v1801
      %v1834 = vmul.f32 %v1194, %v1802
      %v1835 = vmul.f32 %v1195, %v1803
      %v1836 = vmul.f32 %v1196, %v1804
      %v1837 = vmul.f32 %v1197, %v1805
      %v1838 = vmul.f32 %v1198, %v1806
      %v1839 = vmul.f32 %v1199, %v1807
      %v1840 = vmul.f32 %v1200, %v1808
      %v1841 = vmul.f32 %v1201, %v1809
      %v1842 = vmul.f32 %v1202, %v1810
      %v1843 = vmul.f32 %v1203, %v1811
      %v1844 = vmul.f32 %v1204, %v1812
      %v1845 = vmul.f32 %v1205, %v1813
      %v1846 = vmul.f32 %v1206, %v1814
      %v1847 = vmul.f32 %v1207, %v1815
      %v1848 = vmul.f32 %v1208, %v1816
      %v1849 = vmul.f32 %v1209, %v1817
      %v1850 = vmul.f32 %v1210, %v1818
      %v1851 = vmul.f32 %v1211, %v1819
      %v1852 = vmul.f32 %v1212, %v1820
      %v1853 = vmul.f32 %v1213, %v1821
      %v1854 = vmul.f32 %v1214, %v1822
      %v1855 = vmul.f32 %v1215, %v1823
      %v1856 = vmul.f32 %v1216, %v1824
      %v1857 = vmul.f32 %v1217, %v1825
      %v1858 = vmul.f32 %v1218, %v1826
      %v1859 = vmul.f32 %v1219, %v1827
      %v1860 = vmul.f32 %v1220, %v1828
      %v1861 = vadd.f32 %v1829, 1.0
      %v1862 = vadd.f32 %v1830, 1.0
      %v1863 = vadd.f32 %v1831, 1.0
      %v1864 = vadd.f32 %v1832, 1.0
      %v1865 = vadd.f32 %v1833, 1.0
      %v1866 = vadd.f32 %v1834, 1.0
      %v1867 = vadd.f32 %v1835, 1.0
      %v1868 = vadd.f32 %v1836, 1.0
      %v1869 = vadd.f32 %v1837, 1.0
      %v1870 = vadd.f32 %v1838, 1.0
      %v1871 = vadd.f32 %v1839, 1.0
      %v1872 = vadd.f32 %v1840, 1.0
      %v1873 = vadd.f32 %v1841, 1.0
      %v1874 = vadd.f32 %v1842, 1.0
      %v1875 = vadd.f32 %v1843, 1.0
      %v1876 = vadd.f32 %v1844, 1.0
      %v1877 = vadd.f32 %v1845, 1.0
      %v1878 = vadd.f32 %v1846, 1.0
      %v1879 = vadd.f32 %v1847, 1.0
      %v1880 = vadd.f32 %v1848, 1.0
      %v1881 = vadd.f32 %v1849, 1.0
      %v1882 = vadd.f32 %v1850, 1.0
      %v1883 = vadd.f32 %v1851, 1.0
      %v1884 = vadd.f32 %v1852, 1.0
      %v1885 = vadd.f32 %v1853, 1.0
      %v1886 = vadd.f32 %v1854, 1.0
      %v1887 = vadd.f32 %v1855, 1.0
      %v1888 = vadd.f32 %v1856, 1.0
      %v1889 = vadd.f32 %v1857, 1.0
      %v1890 = vadd.f32 %v1858, 1.0
      %v1891 = vadd.f32 %v1859, 1.0
      %v1892 = vadd.f32 %v1860, 1.0
      %v1893 = vmul.f32 %v1093, %v1861
      %v1894 = vmul.f32 %v1094, %v1862
      %v1895 = vmul.f32 %v1095, %v1863
      %v1896 = vmul.f32 %v1096, %v1864
      %v1897 = vmul.f32 %v1097, %v1865
      %v1898 = vmul.f32 %v1098, %v1866
      %v1899 = vmul.f32 %v1099, %v1867
      %v1900 = vmul.f32 %v1100, %v1868
      %v1901 = vmul.f32 %v1101, %v1869
      %v1902 = vmul.f32 %v1102, %v1870
      %v1903 = vmul.f32 %v1103, %v1871
      %v1904 = vmul.f32 %v1104, %v1872
      %v1905 = vmul.f32 %v1105, %v1873
      %v1906 = vmul.f32 %v1106, %v1874
      %v1907 = vmul.f32 %v1107, %v1875
      %v1908 = vmul.f32 %v1108, %v1876
      %v1909 = vmul.f32 %v1109, %v1877
      %v1910 = vmul.f32 %v1110, %v1878
      %v1911 = vmul.f32 %v1111, %v1879
      %v1912 = vmul.f32 %v1112, %v1880
      %v1913 = vmul.f32 %v1113, %v1881
      %v1914 = vmul.f32 %v1114, %v1882
      %v1915 = vmul.f32 %v1115, %v1883
      %v1916 = vmul.f32 %v1116, %v1884
      %v1917 = vmul.f32 %v1117, %v1885
      %v1918 = vmul.f32 %v1118, %v1886
      %v1919 = vmul.f32 %v1119, %v1887
      %v1920 = vmul.f32 %v1120, %v1888
      %v1921 = vmul.f32 %v1121, %v1889
      %v1922 = vmul.f32 %v1122, %v1890
      %v1923 = vmul.f32 %v1123, %v1891
      %v1924 = vmul.f32 %v1124, %v1892
      %vm1925 = vcmask 523264
      %1926 = vst.msk [vmem:[%s170] sm:$0xff] %vm1925, %v1893
      %1927 = vst.msk [vmem:[%s170 + $0x8] sm:$0xff] %vm1925, %v1894
      %1928 = vst.msk [vmem:[%s170 + $0x10] sm:$0xff] %vm1925, %v1895
      %1929 = vst.msk [vmem:[%s170 + $0x18] sm:$0xff] %vm1925, %v1896
      %1930 = vst.msk [vmem:[%s170 + $0x20] sm:$0xff] %vm1925, %v1897
      %1931 = vst.msk [vmem:[%s170 + $0x28] sm:$0xff] %vm1925, %v1898
      %1932 = vst.msk [vmem:[%s170 + $0x30] sm:$0xff] %vm1925, %v1899
      %1933 = vst.msk [vmem:[%s170 + $0x38] sm:$0xff] %vm1925, %v1900
      %1934 = vst.msk [vmem:[%s170 + $0x40] sm:$0xff] %vm1925, %v1901
      %1935 = vst.msk [vmem:[%s170 + $0x48] sm:$0xff] %vm1925, %v1902
      %1936 = vst.msk [vmem:[%s170 + $0x50] sm:$0xff] %vm1925, %v1903
      %1937 = vst.msk [vmem:[%s170 + $0x58] sm:$0xff] %vm1925, %v1904
      %1938 = vst.msk [vmem:[%s170 + $0x60] sm:$0xff] %vm1925, %v1905
      %1939 = vst.msk [vmem:[%s170 + $0x68] sm:$0xff] %vm1925, %v1906
      %1940 = vst.msk [vmem:[%s170 + $0x70] sm:$0xff] %vm1925, %v1907
      %1941 = vst.msk [vmem:[%s170 + $0x78] sm:$0xff] %vm1925, %v1908
      %1942 = vst.msk [vmem:[%s170 + $0x80] sm:$0xff] %vm1925, %v1909
      %1943 = vst.msk [vmem:[%s170 + $0x88] sm:$0xff] %vm1925, %v1910
      %1944 = vst.msk [vmem:[%s170 + $0x90] sm:$0xff] %vm1925, %v1911
      %1945 = vst.msk [vmem:[%s170 + $0x98] sm:$0xff] %vm1925, %v1912
      %1946 = vst.msk [vmem:[%s170 + $0xa0] sm:$0xff] %vm1925, %v1913
      %1947 = vst.msk [vmem:[%s170 + $0xa8] sm:$0xff] %vm1925, %v1914
      %1948 = vst.msk [vmem:[%s170 + $0xb0] sm:$0xff] %vm1925, %v1915
      %1949 = vst.msk [vmem:[%s170 + $0xb8] sm:$0xff] %vm1925, %v1916
      %1950 = vst.msk [vmem:[%s170 + $0xc0] sm:$0xff] %vm1925, %v1917
      %1951 = vst.msk [vmem:[%s170 + $0xc8] sm:$0xff] %vm1925, %v1918
      %1952 = vst.msk [vmem:[%s170 + $0xd0] sm:$0xff] %vm1925, %v1919
      %1953 = vst.msk [vmem:[%s170 + $0xd8] sm:$0xff] %vm1925, %v1920
      %1954 = vst.msk [vmem:[%s170 + $0xe0] sm:$0xff] %vm1925, %v1921
      %1955 = vst.msk [vmem:[%s170 + $0xe8] sm:$0xff] %vm1925, %v1922
      %1956 = vst.msk [vmem:[%s170 + $0xf0] sm:$0xff] %vm1925, %v1923
      %1957 = vst.msk [vmem:[%s170 + $0xf8] sm:$0xff] %vm1925, %v1924
      %p1958 = scmp.lt.s32.totalorder %s14, 3
      %s1959 = scalar_select %p1958, %s14, 3
      %s1960 = smul.addr %s1959, 32
      %s1961 = smul.addr %s1960, 8
      %s1962 = scalar_lea.vmem %s3, %s1961
      // Predicated region
      $region33: #{_lambda_.3} parent=31 // pred_check
        %p1963 = pneg %p100
      $region34: #{_lambda_.3} parent=31 // pred_check_branch
        %1965 = sbr.rel (%p1963) target = $region36
      $region35: #{_lambda_.3} parent=31 // pred_region
        _
      $region36: #{_lambda_.3} parent=31 // pred_fallthru
        _
    $region32: #{_lambda_.3} parent=5 // pred_fallthru
      _
    %p1966 = scmp.le.s32.totalorder 2, %s9
    // Predicated region
    $region37: #{_lambda_.3} parent=5 // pred_check
      %p1967 = pneg %p1966
    $region38: #{_lambda_.3} parent=5 // pred_check_branch
      %1969 = sbr.rel (%p1967) target = $region40
    $region39: #{_lambda_.3} parent=5 // pred_region
      %s1970 = ssub.s32 %s9, 2
      // Predicated region
      $region41: #{_lambda_.3} parent=39 // pred_check
        %p1971 = pneg %p106
      $region42: #{_lambda_.3} parent=39 // pred_check_branch
        %1973 = sbr.rel (%p1971) target = $region44
      $region43: #{_lambda_.3} parent=39 // pred_region
        %p1974 = scmp.lt.s32.totalorder %s15, 3
        %s1975 = scalar_select %p1974, %s15, 3
        %s1976 = smul.addr %s1975, 32
        %s1977 = smul.addr %s1976, 8
        %s1978 = scalar_lea.vmem %s3, %s1977
      $region44: #{_lambda_.3} parent=39 // pred_fallthru
        _
    $region40: #{_lambda_.3} parent=5 // pred_fallthru
      _
  $region6: #{_lambda_.3} parent=0 // loop_footer
    %s13 = sadd.s32 1, %s9
  $region7: #{_lambda_.3} parent=0 // loop_footer_branch
    %8 = sbr.rel target = $region3
  $region8: #{_lambda_.3} parent=0 // loop_exit
    _

// kernel: _lambda_.4
$region0: #{_lambda_.4}
  #allocation0 [shape = 'u32[]', space=smem, size = 0x4, offset = 0x4, fixed_abs, tag = 'smem constant byte address 0x4 - core index']
  #allocation1 [shape = 'u32[144,128]{1,0:T(1,128)}', space=vmem, size = 0x12000, scoped, tag = 'internal scratch']
  %s0 = inlined_call_operand.vmem [shape: bf16[256,256], index: 0, kind: input, shape index: {}]
  %s1 = inlined_call_operand.vmem [shape: bf16[256,64], index: 1, kind: input, shape index: {}]
  %s2 = inlined_call_operand.vmem [shape: f32[1,64], index: 2, kind: input, shape index: {}]
  %s3 = inlined_call_operand.vmem [shape: f32[256,64], index: 3, kind: output, shape index: {}]
  %s4 = sld [smem:[#allocation0]]
  $region45: #{_lambda_.4} parent=0
    _
  %s6 = ssub.s32 1, %s4
  %s7 = scalar_select 0, %s6, %s4
  loop: start=0, step=1, limit=4
  $region2: #{_lambda_.4} parent=0 // loop_pre_header
    _
  $region3: #{_lambda_.4} parent=0 // loop_header
    %s9 = sphi 0, %s13
    %p10 = scmp.ge.s32.totalorder %s9, 4
    %s19 = sphi 0, %s21
    %s22 = sphi 0, %s19
    %s23 = sphi 0, %s22
    %s39 = sphi 0, %s23
    %s43 = sphi 0, %s43
    %s45 = sphi 0, %s43
    %s46 = sphi 0, %s45
    %s60 = sphi 0, %s46
    %s64 = sphi 0, %s64
    %s66 = sphi 0, %s64
    %s67 = sphi 0, %s66
    %s81 = sphi 0, %s67
    %s87 = sphi 0, %s89
    %s90 = sphi 0, %s87
    %s91 = sphi 0, %s90
    %s107 = sphi 0, %s91
  $region4: #{_lambda_.4} parent=0 // loop_header_branch
    %12 = sbr.rel (%p10) target = $region8
  $region5: #{_lambda_.4} parent=0 // loop_body
    %s14 = ssub.s32 %s9, 1
    %s15 = ssub.s32 %s9, 2
    %s16 = sadd.s32 %s9, 1
    %s17 = ssub.s32 %s9, %s16
    %p18 = scmp.eq.s32.totalorder %s17, 0
    %s20 = sadd.s32 %s19, 1
    %s21 = scalar_select %p18, %s19, %s20
    %p24 = pneg %p18
    %p25 = scmp.eq.s32.totalorder %s9, 1
    %p26 = por %p24, %p25
    %p27 = scmp.ne.s32.totalorder %s19, %s22
    %p28 = scmp.eq.s32.totalorder %s9, 0
    %p29 = por %p27, %p28
    %p30 = scmp.ne.s32.totalorder %s19, %s22
    %p31 = scmp.eq.s32.totalorder %s14, 1
    %p32 = por %p30, %p31
    %p33 = scmp.ne.s32.totalorder %s22, %s23
    %p34 = scmp.eq.s32.totalorder %s14, 0
    %p35 = por %p33, %p34
    %p36 = scmp.ne.s32.totalorder %s22, %s23
    %p37 = scmp.eq.s32.totalorder %s15, 1
    %p38 = por %p36, %p37
    %p40 = scmp.ne.s32.totalorder %s23, %s39
    %p41 = scmp.eq.s32.totalorder %s15, 0
    %p42 = por %p40, %p41
    %s44 = sadd.s32 %s43, 1
    %p47 = scmp.eq.s32.totalorder %s9, 1
    %p48 = scmp.ne.s32.totalorder %s43, %s45
    %p49 = scmp.eq.s32.totalorder %s9, 0
    %p50 = por %p48, %p49
    %p51 = scmp.ne.s32.totalorder %s43, %s45
    %p52 = scmp.eq.s32.totalorder %s14, 1
    %p53 = por %p51, %p52
    %p54 = scmp.ne.s32.totalorder %s45, %s46
    %p55 = scmp.eq.s32.totalorder %s14, 0
    %p56 = por %p54, %p55
    %p57 = scmp.ne.s32.totalorder %s45, %s46
    %p58 = scmp.eq.s32.totalorder %s15, 1
    %p59 = por %p57, %p58
    %p61 = scmp.ne.s32.totalorder %s46, %s60
    %p62 = scmp.eq.s32.totalorder %s15, 0
    %p63 = por %p61, %p62
    %s65 = sadd.s32 %s64, 1
    %p68 = scmp.eq.s32.totalorder %s9, 1
    %p69 = scmp.ne.s32.totalorder %s64, %s66
    %p70 = scmp.eq.s32.totalorder %s9, 0
    %p71 = por %p69, %p70
    %p72 = scmp.ne.s32.totalorder %s64, %s66
    %p73 = scmp.eq.s32.totalorder %s14, 1
    %p74 = por %p72, %p73
    %p75 = scmp.ne.s32.totalorder %s66, %s67
    %p76 = scmp.eq.s32.totalorder %s14, 0
    %p77 = por %p75, %p76
    %p78 = scmp.ne.s32.totalorder %s66, %s67
    %p79 = scmp.eq.s32.totalorder %s15, 1
    %p80 = por %p78, %p79
    %p82 = scmp.ne.s32.totalorder %s67, %s81
    %p83 = scmp.eq.s32.totalorder %s15, 0
    %p84 = por %p82, %p83
    %s85 = ssub.s32 %s9, %s16
    %p86 = scmp.eq.s32.totalorder %s85, 0
    %s88 = sadd.s32 %s87, 1
    %s89 = scalar_select %p86, %s87, %s88
    %p92 = pneg %p86
    %p93 = scmp.eq.s32.totalorder %s9, 1
    %p94 = por %p92, %p93
    %p95 = scmp.ne.s32.totalorder %s87, %s90
    %p96 = scmp.eq.s32.totalorder %s9, 0
    %p97 = por %p95, %p96
    %p98 = scmp.ne.s32.totalorder %s87, %s90
    %p99 = scmp.eq.s32.totalorder %s14, 1
    %p100 = por %p98, %p99
    %p101 = scmp.ne.s32.totalorder %s90, %s91
    %p102 = scmp.eq.s32.totalorder %s14, 0
    %p103 = por %p101, %p102
    %p104 = scmp.ne.s32.totalorder %s90, %s91
    %p105 = scmp.eq.s32.totalorder %s15, 1
    %p106 = por %p104, %p105
    %p108 = scmp.ne.s32.totalorder %s91, %s107
    %p109 = scmp.eq.s32.totalorder %s15, 0
    %p110 = por %p108, %p109
    %p111 = scmp.le.s32.totalorder 1, %s9
    %p112 = scmp.lt.s32.totalorder %s9, 3
    %p113 = pnand %p111, %p112
    %p114 = pneg %p113
    // Predicated region
    $region9: #{_lambda_.4} parent=5 // pred_check
      _
    $region10: #{_lambda_.4} parent=5 // pred_check_branch
      %116 = sbr.rel (%p113) target = $region12
    $region11: #{_lambda_.4} parent=5 // pred_region
      %s117 = ssub.s32 %s9, 1
      // Predicated region
      $region13: #{_lambda_.4} parent=11 // pred_check
        %p118 = pneg %p56
      $region14: #{_lambda_.4} parent=11 // pred_check_branch
        %120 = sbr.rel (%p118) target = $region16
      $region15: #{_lambda_.4} parent=11 // pred_region
        _
      $region16: #{_lambda_.4} parent=11 // pred_fallthru
        _
      // Predicated region
      $region17: #{_lambda_.4} parent=11 // pred_check
        %p121 = pneg %p77
      $region18: #{_lambda_.4} parent=11 // pred_check_branch
        %123 = sbr.rel (%p121) target = $region20
      $region19: #{_lambda_.4} parent=11 // pred_region
        _
      $region20: #{_lambda_.4} parent=11 // pred_fallthru
        _
    $region12: #{_lambda_.4} parent=5 // pred_fallthru
      _
    %p124 = scmp.lt.s32.totalorder %s9, 2
    // Predicated region
    $region21: #{_lambda_.4} parent=5 // pred_check
      %p125 = pneg %p124
    $region22: #{_lambda_.4} parent=5 // pred_check_branch
      %127 = sbr.rel (%p125) target = $region24
    $region23: #{_lambda_.4} parent=5 // pred_region
      // Predicated region
      $region25: #{_lambda_.4} parent=23 // pred_check
        %p128 = pneg %p29
      $region26: #{_lambda_.4} parent=23 // pred_check_branch
        %130 = sbr.rel (%p128) target = $region28
      $region27: #{_lambda_.4} parent=23 // pred_region
        %s131 = smul.u32 16, %s9
        %p132 = scmp.lt.s32.totalorder %s131, 31
        %s133 = scalar_select %p132, %s131, 31
        %s134 = smul.addr %s133, 2
        %s135 = smul.addr %s134, 4
        %s136 = scalar_lea.vmem %s0, %s135
        %s137 = smul.u32 16, %s9
      $region28: #{_lambda_.4} parent=23 // pred_fallthru
        _
    $region24: #{_lambda_.4} parent=5 // pred_fallthru
      _
    %p138 = scmp.le.s32.totalorder 1, %s9
    %p139 = scmp.lt.s32.totalorder %s9, 3
    %p140 = pnand %p138, %p139
    %p141 = pneg %p140
    // Predicated region
    $region29: #{_lambda_.4} parent=5 // pred_check
      _
    $region30: #{_lambda_.4} parent=5 // pred_check_branch
      %143 = sbr.rel (%p140) target = $region32
    $region31: #{_lambda_.4} parent=5 // pred_region
      %s144 = ssub.s32 %s9, 1
      %s145 = smul.u32 16, %s14
      %p146 = scmp.lt.s32.totalorder %s145, 31
      %s147 = scalar_select %p146, %s145, 31
      %s148 = smul.addr %s147, 2
      %s149 = smul.addr %s148, 4
      %s150 = scalar_lea.vmem %s0, %s149
      %p151 = pneg %p35
      %p152 = pneg %p32
      %p153 = pneg %p56
      %p154 = pneg %p53
      %p155 = pneg %p77
      %p156 = pneg %p74
      %p157 = pneg %p103
      %p158 = pneg %p100
      %s159 = smul.u32 16, %s14
      %p160 = scmp.lt.s32.totalorder %s159, 31
      %s161 = scalar_select %p160, %s159, 31
      %s162 = smul.addr %s161, 8
      %s163 = scalar_lea.vmem %s3, %s162
      %s164 = smul.u32 16, %s14
      %p165 = scmp.lt.s32.totalorder %s164, 31
      %s166 = scalar_select %p165, %s164, 31
      %s167 = smul.addr %s166, 2
      %s168 = smul.addr %s167, 4
      %s169 = scalar_lea.vmem %s0, %s168
      %s170 = smul.u32 16, %s14
      %s171 = smul.u32 16, %s14
      %p172 = scmp.lt.s32.totalorder %s171, 31
      %s173 = scalar_select %p172, %s171, 31
      %s174 = smul.addr %s173, 8
      %s175 = scalar_lea.vmem %s3, %s174
      %s176 = smul.u32 16, %s14
      %v178 = vld [vmem:[%s169] sm:$0xff]
      %v179 = vld [vmem:[%s169 + $0x8] sm:$0xff]
      %v180 = vld [vmem:[%s169 + $0x10] sm:$0xff]
      %v181 = vld [vmem:[%s169 + $0x18] sm:$0xff]
      %v182 = vld [vmem:[%s169 + $0x20] sm:$0xff]
      %v183 = vld [vmem:[%s169 + $0x28] sm:$0xff]
      %v184 = vld [vmem:[%s169 + $0x30] sm:$0xff]
      %v185 = vld [vmem:[%s169 + $0x38] sm:$0xff]
      %v186 = vld [vmem:[%s169 + $0x40] sm:$0xff]
      %v187 = vld [vmem:[%s169 + $0x48] sm:$0xff]
      %v188 = vld [vmem:[%s169 + $0x50] sm:$0xff]
      %v189 = vld [vmem:[%s169 + $0x58] sm:$0xff]
      %v190 = vld [vmem:[%s169 + $0x60] sm:$0xff]
      %v191 = vld [vmem:[%s169 + $0x68] sm:$0xff]
      %v192 = vld [vmem:[%s169 + $0x70] sm:$0xff]
      %v193 = vld [vmem:[%s169 + $0x78] sm:$0xff]
      %v194 = vld [vmem:[%s1] sm:$0xf]
      %v195 = vld [vmem:[%s1 + $0x4] sm:$0xf]
      %v196 = vld [vmem:[%s1 + $0x8] sm:$0xf]
      %v197 = vld [vmem:[%s1 + $0xc] sm:$0xf]
      %v198 = vld [vmem:[%s1 + $0x10] sm:$0xf]
      %v199 = vld [vmem:[%s1 + $0x14] sm:$0xf]
      %v200 = vld [vmem:[%s1 + $0x18] sm:$0xf]
      %v201 = vld [vmem:[%s1 + $0x1c] sm:$0xf]
      %v202 = vld [vmem:[%s1 + $0x20] sm:$0xf]
      %v203 = vld [vmem:[%s1 + $0x24] sm:$0xf]
      %v204 = vld [vmem:[%s1 + $0x28] sm:$0xf]
      %v205 = vld [vmem:[%s1 + $0x2c] sm:$0xf]
      %v206 = vld [vmem:[%s1 + $0x30] sm:$0xf]
      %v207 = vld [vmem:[%s1 + $0x34] sm:$0xf]
      %v208 = vld [vmem:[%s1 + $0x38] sm:$0xf]
      %v209 = vld [vmem:[%s1 + $0x3c] sm:$0xf]
      %v210 = vld [vmem:[%s1 + $0x40] sm:$0xf]
      %v211 = vld [vmem:[%s1 + $0x44] sm:$0xf]
      %v212 = vld [vmem:[%s1 + $0x48] sm:$0xf]
      %v213 = vld [vmem:[%s1 + $0x4c] sm:$0xf]
      %v214 = vld [vmem:[%s1 + $0x50] sm:$0xf]
      %v215 = vld [vmem:[%s1 + $0x54] sm:$0xf]
      %v216 = vld [vmem:[%s1 + $0x58] sm:$0xf]
      %v217 = vld [vmem:[%s1 + $0x5c] sm:$0xf]
      %v218 = vld [vmem:[%s1 + $0x60] sm:$0xf]
      %v219 = vld [vmem:[%s1 + $0x64] sm:$0xf]
      %v220 = vld [vmem:[%s1 + $0x68] sm:$0xf]
      %v221 = vld [vmem:[%s1 + $0x6c] sm:$0xf]
      %v222 = vld [vmem:[%s1 + $0x70] sm:$0xf]
      %v223 = vld [vmem:[%s1 + $0x74] sm:$0xf]
      %v224 = vld [vmem:[%s1 + $0x78] sm:$0xf]
      %v225 = vld [vmem:[%s1 + $0x7c] sm:$0xf]
      %v226 = vld [vmem:[%s2] sm:$0x1]
      %v228 = vlaneseq
      %v229 = vshrl.u32 %v228, 7
      %v230 = vsub.s32 0, %v229
      %v231 = vrot.slane %v226, %v230
      %v249 = vunpack.c.l.b16 %v178
      %v250 = vunpack.c.h.b16 %v178
      %v251 = vunpack.c.l.b16 %v179
      %v252 = vunpack.c.h.b16 %v179
      %v253 = vunpack.c.l.b16 %v180
      %v254 = vunpack.c.h.b16 %v180
      %v255 = vunpack.c.l.b16 %v181
      %v256 = vunpack.c.h.b16 %v181
      %v257 = vunpack.c.l.b16 %v182
      %v258 = vunpack.c.h.b16 %v182
      %v259 = vunpack.c.l.b16 %v183
      %v260 = vunpack.c.h.b16 %v183
      %v261 = vunpack.c.l.b16 %v184
      %v262 = vunpack.c.h.b16 %v184
      %v263 = vunpack.c.l.b16 %v185
      %v264 = vunpack.c.h.b16 %v185
      %v265 = vunpack.c.l.b16 %v186
      %v266 = vunpack.c.h.b16 %v186
      %v267 = vunpack.c.l.b16 %v187
      %v268 = vunpack.c.h.b16 %v187
      %v269 = vunpack.c.l.b16 %v188
      %v270 = vunpack.c.h.b16 %v188
      %v271 = vunpack.c.l.b16 %v189
      %v272 = vunpack.c.h.b16 %v189
      %v273 = vunpack.c.l.b16 %v190
      %v274 = vunpack.c.h.b16 %v190
      %v275 = vunpack.c.l.b16 %v191
      %v276 = vunpack.c.h.b16 %v191
      %v277 = vunpack.c.l.b16 %v192
      %v278 = vunpack.c.h.b16 %v192
      %v279 = vunpack.c.l.b16 %v193
      %v280 = vunpack.c.h.b16 %v193
      %v281 = vpack.c.b16 %v251, %v249
      %v282 = vpack.c.b16 %v252, %v250
      %v283 = vpack.c.b16 %v255, %v253
      %v284 = vpack.c.b16 %v256, %v254
      %v285 = vpack.c.b16 %v259, %v257
      %v286 = vpack.c.b16 %v260, %v258
      %v287 = vpack.c.b16 %v263, %v261
      %v288 = vpack.c.b16 %v264, %v262
      %v289 = vpack.c.b16 %v267, %v265
      %v290 = vpack.c.b16 %v268, %v266
      %v291 = vpack.c.b16 %v271, %v269
      %v292 = vpack.c.b16 %v272, %v270
      %v293 = vpack.c.b16 %v275, %v273
      %v294 = vpack.c.b16 %v276, %v274
      %v295 = vpack.c.b16 %v279, %v277
      %v296 = vpack.c.b16 %v280, %v278
      %v345 = vunpack.c.l.b16 %v194
      %v346 = vunpack.c.l.b16 %v195
      %v347 = vunpack.c.l.b16 %v196
      %v348 = vunpack.c.l.b16 %v197
      %v349 = vunpack.c.l.b16 %v198
      %v350 = vunpack.c.l.b16 %v199
      %v351 = vunpack.c.l.b16 %v200
      %v352 = vunpack.c.l.b16 %v201
      %v353 = vunpack.c.l.b16 %v202
      %v354 = vunpack.c.l.b16 %v203
      %v355 = vunpack.c.l.b16 %v204
      %v356 = vunpack.c.l.b16 %v205
      %v357 = vunpack.c.l.b16 %v206
      %v358 = vunpack.c.l.b16 %v207
      %v359 = vunpack.c.l.b16 %v208
      %v360 = vunpack.c.l.b16 %v209
      %v361 = vunpack.c.l.b16 %v210
      %v362 = vunpack.c.l.b16 %v211
      %v363 = vunpack.c.l.b16 %v212
      %v364 = vunpack.c.l.b16 %v213
      %v365 = vunpack.c.l.b16 %v214
      %v366 = vunpack.c.l.b16 %v215
      %v367 = vunpack.c.l.b16 %v216
      %v368 = vunpack.c.l.b16 %v217
      %v369 = vunpack.c.l.b16 %v218
      %v370 = vunpack.c.l.b16 %v219
      %v371 = vunpack.c.l.b16 %v220
      %v372 = vunpack.c.l.b16 %v221
      %v373 = vunpack.c.l.b16 %v222
      %v374 = vunpack.c.l.b16 %v223
      %v375 = vunpack.c.l.b16 %v224
      %v376 = vunpack.c.l.b16 %v225
      %v377 = vpack.c.b16 %v346, %v345
      %v378 = vpack.c.b16 %v348, %v347
      %v379 = vpack.c.b16 %v350, %v349
      %v380 = vpack.c.b16 %v352, %v351
      %v381 = vpack.c.b16 %v354, %v353
      %v382 = vpack.c.b16 %v356, %v355
      %v383 = vpack.c.b16 %v358, %v357
      %v384 = vpack.c.b16 %v360, %v359
      %v385 = vpack.c.b16 %v362, %v361
      %v386 = vpack.c.b16 %v364, %v363
      %v387 = vpack.c.b16 %v366, %v365
      %v388 = vpack.c.b16 %v368, %v367
      %v389 = vpack.c.b16 %v370, %v369
      %v390 = vpack.c.b16 %v372, %v371
      %v391 = vpack.c.b16 %v374, %v373
      %v392 = vpack.c.b16 %v376, %v375
      %409 = vmatprep.subr.bf16.mxu0 0
      %410 = vmatpush1.bf16.msra.mxu0 %v377
      %411 = vmatprep.subr.bf16.mxu0 0
      %412 = vmatpush1.bf16.msra.mxu0 %v378
      %413 = vmatprep.subr.bf16.mxu0 0
      %414 = vmatpush1.bf16.msra.mxu0 %v379
      %415 = vmatprep.subr.bf16.mxu0 0
      %416 = vmatpush1.bf16.msra.mxu0 %v380
      %417 = vmatprep.subr.bf16.mxu0 0
      %418 = vmatpush1.bf16.msra.mxu0 %v381
      %419 = vmatprep.subr.bf16.mxu0 0
      %420 = vmatpush1.bf16.msra.mxu0 %v382
      %421 = vmatprep.subr.bf16.mxu0 0
      %422 = vmatpush1.bf16.msra.mxu0 %v383
      %423 = vmatprep.subr.bf16.mxu0 0
      %424 = vmatpush1.bf16.msra.mxu0 %v384
      %425 = vmatprep.subr.bf16.mxu0 0
      %426 = vmatpush1.bf16.msra.mxu0 %v385
      %427 = vmatprep.subr.bf16.mxu0 0
      %428 = vmatpush1.bf16.msra.mxu0 %v386
      %429 = vmatprep.subr.bf16.mxu0 0
      %430 = vmatpush1.bf16.msra.mxu0 %v387
      %431 = vmatprep.subr.bf16.mxu0 0
      %432 = vmatpush1.bf16.msra.mxu0 %v388
      %433 = vmatprep.subr.bf16.mxu0 0
      %434 = vmatpush1.bf16.msra.mxu0 %v389
      %435 = vmatprep.subr.bf16.mxu0 0
      %436 = vmatpush1.bf16.msra.mxu0 %v390
      %437 = vmatprep.subr.bf16.mxu0 0
      %438 = vmatpush1.bf16.msra.mxu0 %v391
      %439 = vmatprep.subr.bf16.mxu0 0
      %440 = vmatpush1.bf16.msra.mxu0 %v392
      %441 = vmatprep.mubr.bf16.mxu0 %v282
      %442 = vmatmul.mubr.bf16.gmra.mrb[0].mxu0 %v281
      %v443 = vpop.f32.mrb[0].mxu0
      %v444 = vadd.f32 %v231, %v443
      %v445 = vpop.f32.mrb[0].mxu0
      %v446 = vpop.f32.mrb[0].mxu0
      %v447 = vadd.f32 %v231, %v446
      %v448 = vpop.f32.mrb[0].mxu0
      %449 = vmatprep.mubr.bf16.mxu0 %v284
      %450 = vmatmul.mubr.bf16.gmra.mrb[0].mxu0 %v283
      %v451 = vpop.f32.mrb[0].mxu0
      %v452 = vadd.f32 %v231, %v451
      %v453 = vpop.f32.mrb[0].mxu0
      %v454 = vpop.f32.mrb[0].mxu0
      %v455 = vadd.f32 %v231, %v454
      %v456 = vpop.f32.mrb[0].mxu0
      %457 = vmatprep.mubr.bf16.mxu0 %v286
      %458 = vmatmul.mubr.bf16.gmra.mrb[0].mxu0 %v285
      %v459 = vpop.f32.mrb[0].mxu0
      %v460 = vadd.f32 %v231, %v459
      %v461 = vpop.f32.mrb[0].mxu0
      %v462 = vpop.f32.mrb[0].mxu0
      %v463 = vadd.f32 %v231, %v462
      %v464 = vpop.f32.mrb[0].mxu0
      %465 = vmatprep.mubr.bf16.mxu0 %v288
      %466 = vmatmul.mubr.bf16.gmra.mrb[0].mxu0 %v287
      %v467 = vpop.f32.mrb[0].mxu0
      %v468 = vadd.f32 %v231, %v467
      %v469 = vpop.f32.mrb[0].mxu0
      %v470 = vpop.f32.mrb[0].mxu0
      %v471 = vadd.f32 %v231, %v470
      %v472 = vpop.f32.mrb[0].mxu0
      %473 = vmatprep.mubr.bf16.mxu0 %v290
      %474 = vmatmul.mubr.bf16.gmra.mrb[0].mxu0 %v289
      %v475 = vpop.f32.mrb[0].mxu0
      %v476 = vadd.f32 %v231, %v475
      %v477 = vpop.f32.mrb[0].mxu0
      %v478 = vpop.f32.mrb[0].mxu0
      %v479 = vadd.f32 %v231, %v478
      %v480 = vpop.f32.mrb[0].mxu0
      %481 = vmatprep.mubr.bf16.mxu0 %v292
      %482 = vmatmul.mubr.bf16.gmra.mrb[0].mxu0 %v291
      %v483 = vpop.f32.mrb[0].mxu0
      %v484 = vadd.f32 %v231, %v483
      %v485 = vpop.f32.mrb[0].mxu0
      %v486 = vpop.f32.mrb[0].mxu0
      %v487 = vadd.f32 %v231, %v486
      %v488 = vpop.f32.mrb[0].mxu0
      %489 = vmatprep.mubr.bf16.mxu0 %v294
      %490 = vmatmul.mubr.bf16.gmra.mrb[0].mxu0 %v293
      %v491 = vpop.f32.mrb[0].mxu0
      %v492 = vadd.f32 %v231, %v491
      %v493 = vpop.f32.mrb[0].mxu0
      %v494 = vpop.f32.mrb[0].mxu0
      %v495 = vadd.f32 %v231, %v494
      %v496 = vpop.f32.mrb[0].mxu0
      %497 = vmatprep.mubr.bf16.mxu0 %v296
      %498 = vmatmul.mubr.bf16.gmra.mrb[0].mxu0 %v295
      %v499 = vpop.f32.mrb[0].mxu0
      %v500 = vadd.f32 %v231, %v499
      %v501 = vpop.f32.mrb[0].mxu0
      %v502 = vpop.f32.mrb[0].mxu0
      %v503 = vadd.f32 %v231, %v502
      %v504 = vpop.f32.mrb[0].mxu0
      %505 = vdwg.mxu0
      %v506 = vmul.f32 %v444, 0.5
      %v507 = vmul.f32 %v447, 0.5
      %v508 = vmul.f32 %v452, 0.5
      %v509 = vmul.f32 %v455, 0.5
      %v510 = vmul.f32 %v460, 0.5
      %v511 = vmul.f32 %v463, 0.5
      %v512 = vmul.f32 %v468, 0.5
      %v513 = vmul.f32 %v471, 0.5
      %v514 = vmul.f32 %v476, 0.5
      %v515 = vmul.f32 %v479, 0.5
      %v516 = vmul.f32 %v484, 0.5
      %v517 = vmul.f32 %v487, 0.5
      %v518 = vmul.f32 %v492, 0.5
      %v519 = vmul.f32 %v495, 0.5
      %v520 = vmul.f32 %v500, 0.5
      %v521 = vmul.f32 %v503, 0.5
      %v522 = vmul.f32 %v444, 0.70710677
      %v523 = vmul.f32 %v447, 0.70710677
      %v524 = vmul.f32 %v452, 0.70710677
      %v525 = vmul.f32 %v455, 0.70710677
      %v526 = vmul.f32 %v460, 0.70710677
      %v527 = vmul.f32 %v463, 0.70710677
      %v528 = vmul.f32 %v468, 0.70710677
      %v529 = vmul.f32 %v471, 0.70710677
      %v530 = vmul.f32 %v476, 0.70710677
      %v531 = vmul.f32 %v479, 0.70710677
      %v532 = vmul.f32 %v484, 0.70710677
      %v533 = vmul.f32 %v487, 0.70710677
      %v534 = vmul.f32 %v492, 0.70710677
      %v535 = vmul.f32 %v495, 0.70710677
      %v536 = vmul.f32 %v500, 0.70710677
      %v537 = vmul.f32 %v503, 0.70710677
      %vm538 = vcmp.ge.f32.partialorder %v522, 0.0
      %vm539 = vcmp.ge.f32.partialorder %v523, 0.0
      %vm540 = vcmp.ge.f32.partialorder %v524, 0.0
      %vm541 = vcmp.ge.f32.partialorder %v525, 0.0
      %vm542 = vcmp.ge.f32.partialorder %v526, 0.0
      %vm543 = vcmp.ge.f32.partialorder %v527, 0.0
      %vm544 = vcmp.ge.f32.partialorder %v528, 0.0
      %vm545 = vcmp.ge.f32.partialorder %v529, 0.0
      %vm546 = vcmp.ge.f32.partialorder %v530, 0.0
      %vm547 = vcmp.ge.f32.partialorder %v531, 0.0
      %vm548 = vcmp.ge.f32.partialorder %v532, 0.0
      %vm549 = vcmp.ge.f32.partialorder %v533, 0.0
      %vm550 = vcmp.ge.f32.partialorder %v534, 0.0
      %vm551 = vcmp.ge.f32.partialorder %v535, 0.0
      %vm552 = vcmp.ge.f32.partialorder %v536, 0.0
      %vm553 = vcmp.ge.f32.partialorder %v537, 0.0
      %v554 = vsel %vm538, 1.0, -1.0
      %v555 = vsel %vm539, 1.0, -1.0
      %v556 = vsel %vm540, 1.0, -1.0
      %v557 = vsel %vm541, 1.0, -1.0
      %v558 = vsel %vm542, 1.0, -1.0
      %v559 = vsel %vm543, 1.0, -1.0
      %v560 = vsel %vm544, 1.0, -1.0
      %v561 = vsel %vm545, 1.0, -1.0
      %v562 = vsel %vm546, 1.0, -1.0
      %v563 = vsel %vm547, 1.0, -1.0
      %v564 = vsel %vm548, 1.0, -1.0
      %v565 = vsel %vm549, 1.0, -1.0
      %v566 = vsel %vm550, 1.0, -1.0
      %v567 = vsel %vm551, 1.0, -1.0
      %v568 = vsel %vm552, 1.0, -1.0
      %v569 = vsel %vm553, 1.0, -1.0
      %v570 = vand.u32 2147483647, %v522
      %v571 = vand.u32 2147483647, %v523
      %v572 = vand.u32 2147483647, %v524
      %v573 = vand.u32 2147483647, %v525
      %v574 = vand.u32 2147483647, %v526
      %v575 = vand.u32 2147483647, %v527
      %v576 = vand.u32 2147483647, %v528
      %v577 = vand.u32 2147483647, %v529
      %v578 = vand.u32 2147483647, %v530
      %v579 = vand.u32 2147483647, %v531
      %v580 = vand.u32 2147483647, %v532
      %v581 = vand.u32 2147483647, %v533
      %v582 = vand.u32 2147483647, %v534
      %v583 = vand.u32 2147483647, %v535
      %v584 = vand.u32 2147483647, %v536
      %v585 = vand.u32 2147483647, %v537
      %v586 = vmul.f32 %v570, 0.3275911
      %v587 = vmul.f32 %v571, 0.3275911
      %v588 = vmul.f32 %v572, 0.3275911
      %v589 = vmul.f32 %v573, 0.3275911
      %v590 = vmul.f32 %v574, 0.3275911
      %v591 = vmul.f32 %v575, 0.3275911
      %v592 = vmul.f32 %v576, 0.3275911
      %v593 = vmul.f32 %v577, 0.3275911
      %v594 = vmul.f32 %v578, 0.3275911
      %v595 = vmul.f32 %v579, 0.3275911
      %v596 = vmul.f32 %v580, 0.3275911
      %v597 = vmul.f32 %v581, 0.3275911
      %v598 = vmul.f32 %v582, 0.3275911
      %v599 = vmul.f32 %v583, 0.3275911
      %v600 = vmul.f32 %v584, 0.3275911
      %v601 = vmul.f32 %v585, 0.3275911
      %v602 = vadd.f32 %v586, 1.0
      %v603 = vadd.f32 %v587, 1.0
      %v604 = vadd.f32 %v588, 1.0
      %v605 = vadd.f32 %v589, 1.0
      %v606 = vadd.f32 %v590, 1.0
      %v607 = vadd.f32 %v591, 1.0
      %v608 = vadd.f32 %v592, 1.0
      %v609 = vadd.f32 %v593, 1.0
      %v610 = vadd.f32 %v594, 1.0
      %v611 = vadd.f32 %v595, 1.0
      %v612 = vadd.f32 %v596, 1.0
      %v613 = vadd.f32 %v597, 1.0
      %v614 = vadd.f32 %v598, 1.0
      %v615 = vadd.f32 %v599, 1.0
      %v616 = vadd.f32 %v600, 1.0
      %v617 = vadd.f32 %v601, 1.0
      %v618 = vrcp.pop %v602
      %v619 = vrcp.pop %v603
      %v620 = vrcp.pop %v604
      %v621 = vrcp.pop %v605
      %v622 = vrcp.pop %v606
      %v623 = vrcp.pop %v607
      %v624 = vrcp.pop %v608
      %v625 = vrcp.pop %v609
      %v626 = vrcp.pop %v610
      %v627 = vrcp.pop %v611
      %v628 = vrcp.pop %v612
      %v629 = vrcp.pop %v613
      %v630 = vrcp.pop %v614
      %v631 = vrcp.pop %v615
      %v632 = vrcp.pop %v616
      %v633 = vrcp.pop %v617
      %v634 = vmul.f32 %v618, 1.0614054
      %v635 = vmul.f32 %v619, 1.0614054
      %v636 = vmul.f32 %v620, 1.0614054
      %v637 = vmul.f32 %v621, 1.0614054
      %v638 = vmul.f32 %v622, 1.0614054
      %v639 = vmul.f32 %v623, 1.0614054
      %v640 = vmul.f32 %v624, 1.0614054
      %v641 = vmul.f32 %v625, 1.0614054
      %v642 = vmul.f32 %v626, 1.0614054
      %v643 = vmul.f32 %v627, 1.0614054
      %v644 = vmul.f32 %v628, 1.0614054
      %v645 = vmul.f32 %v629, 1.0614054
      %v646 = vmul.f32 %v630, 1.0614054
      %v647 = vmul.f32 %v631, 1.0614054
      %v648 = vmul.f32 %v632, 1.0614054
      %v649 = vmul.f32 %v633, 1.0614054
      %v650 = vadd.f32 %v634, -1.4531521
      %v651 = vadd.f32 %v635, -1.4531521
      %v652 = vadd.f32 %v636, -1.4531521
      %v653 = vadd.f32 %v637, -1.4531521
      %v654 = vadd.f32 %v638, -1.4531521
      %v655 = vadd.f32 %v639, -1.4531521
      %v656 = vadd.f32 %v640, -1.4531521
      %v657 = vadd.f32 %v641, -1.4531521
      %v658 = vadd.f32 %v642, -1.4531521
      %v659 = vadd.f32 %v643, -1.4531521
      %v660 = vadd.f32 %v644, -1.4531521
      %v661 = vadd.f32 %v645, -1.4531521
      %v662 = vadd.f32 %v646, -1.4531521
      %v663 = vadd.f32 %v647, -1.4531521
      %v664 = vadd.f32 %v648, -1.4531521
      %v665 = vadd.f32 %v649, -1.4531521
      %v666 = vmul.f32 %v650, %v618
      %v667 = vmul.f32 %v651, %v619
      %v668 = vmul.f32 %v652, %v620
      %v669 = vmul.f32 %v653, %v621
      %v670 = vmul.f32 %v654, %v622
      %v671 = vmul.f32 %v655, %v623
      %v672 = vmul.f32 %v656, %v624
      %v673 = vmul.f32 %v657, %v625
      %v674 = vmul.f32 %v658, %v626
      %v675 = vmul.f32 %v659, %v627
      %v676 = vmul.f32 %v660, %v628
      %v677 = vmul.f32 %v661, %v629
      %v678 = vmul.f32 %v662, %v630
      %v679 = vmul.f32 %v663, %v631
      %v680 = vmul.f32 %v664, %v632
      %v681 = vmul.f32 %v665, %v633
      %v682 = vadd.f32 %v666, 1.4214138
      %v683 = vadd.f32 %v667, 1.4214138
      %v684 = vadd.f32 %v668, 1.4214138
      %v685 = vadd.f32 %v669, 1.4214138
      %v686 = vadd.f32 %v670, 1.4214138
      %v687 = vadd.f32 %v671, 1.4214138
      %v688 = vadd.f32 %v672, 1.4214138
      %v689 = vadd.f32 %v673, 1.4214138
      %v690 = vadd.f32 %v674, 1.4214138
      %v691 = vadd.f32 %v675, 1.4214138
      %v692 = vadd.f32 %v676, 1.4214138
      %v693 = vadd.f32 %v677, 1.4214138
      %v694 = vadd.f32 %v678, 1.4214138
      %v695 = vadd.f32 %v679, 1.4214138
      %v696 = vadd.f32 %v680, 1.4214138
      %v697 = vadd.f32 %v681, 1.4214138
      %v698 = vmul.f32 %v682, %v618
      %v699 = vmul.f32 %v683, %v619
      %v700 = vmul.f32 %v684, %v620
      %v701 = vmul.f32 %v685, %v621
      %v702 = vmul.f32 %v686, %v622
      %v703 = vmul.f32 %v687, %v623
      %v704 = vmul.f32 %v688, %v624
      %v705 = vmul.f32 %v689, %v625
      %v706 = vmul.f32 %v690, %v626
      %v707 = vmul.f32 %v691, %v627
      %v708 = vmul.f32 %v692, %v628
      %v709 = vmul.f32 %v693, %v629
      %v710 = vmul.f32 %v694, %v630
      %v711 = vmul.f32 %v695, %v631
      %v712 = vmul.f32 %v696, %v632
      %v713 = vmul.f32 %v697, %v633
      %v714 = vadd.f32 %v698, -0.28449672
      %v715 = vadd.f32 %v699, -0.28449672
      %v716 = vadd.f32 %v700, -0.28449672
      %v717 = vadd.f32 %v701, -0.28449672
      %v718 = vadd.f32 %v702, -0.28449672
      %v719 = vadd.f32 %v703, -0.28449672
      %v720 = vadd.f32 %v704, -0.28449672
      %v721 = vadd.f32 %v705, -0.28449672
      %v722 = vadd.f32 %v706, -0.28449672
      %v723 = vadd.f32 %v707, -0.28449672
      %v724 = vadd.f32 %v708, -0.28449672
      %v725 = vadd.f32 %v709, -0.28449672
      %v726 = vadd.f32 %v710, -0.28449672
      %v727 = vadd.f32 %v711, -0.28449672
      %v728 = vadd.f32 %v712, -0.28449672
      %v729 = vadd.f32 %v713, -0.28449672
      %v730 = vmul.f32 %v714, %v618
      %v731 = vmul.f32 %v715, %v619
      %v732 = vmul.f32 %v716, %v620
      %v733 = vmul.f32 %v717, %v621
      %v734 = vmul.f32 %v718, %v622
      %v735 = vmul.f32 %v719, %v623
      %v736 = vmul.f32 %v720, %v624
      %v737 = vmul.f32 %v721, %v625
      %v738 = vmul.f32 %v722, %v626
      %v739 = vmul.f32 %v723, %v627
      %v740 = vmul.f32 %v724, %v628
      %v741 = vmul.f32 %v725, %v629
      %v742 = vmul.f32 %v726, %v630
      %v743 = vmul.f32 %v727, %v631
      %v744 = vmul.f32 %v728, %v632
      %v745 = vmul.f32 %v729, %v633
      %v746 = vadd.f32 %v730, 0.2548296
      %v747 = vadd.f32 %v731, 0.2548296
      %v748 = vadd.f32 %v732, 0.2548296
      %v749 = vadd.f32 %v733, 0.2548296
      %v750 = vadd.f32 %v734, 0.2548296
      %v751 = vadd.f32 %v735, 0.2548296
      %v752 = vadd.f32 %v736, 0.2548296
      %v753 = vadd.f32 %v737, 0.2548296
      %v754 = vadd.f32 %v738, 0.2548296
      %v755 = vadd.f32 %v739, 0.2548296
      %v756 = vadd.f32 %v740, 0.2548296
      %v757 = vadd.f32 %v741, 0.2548296
      %v758 = vadd.f32 %v742, 0.2548296
      %v759 = vadd.f32 %v743, 0.2548296
      %v760 = vadd.f32 %v744, 0.2548296
      %v761 = vadd.f32 %v745, 0.2548296
      %v762 = vmul.f32 %v746, %v618
      %v763 = vmul.f32 %v747, %v619
      %v764 = vmul.f32 %v748, %v620
      %v765 = vmul.f32 %v749, %v621
      %v766 = vmul.f32 %v750, %v622
      %v767 = vmul.f32 %v751, %v623
      %v768 = vmul.f32 %v752, %v624
      %v769 = vmul.f32 %v753, %v625
      %v770 = vmul.f32 %v754, %v626
      %v771 = vmul.f32 %v755, %v627
      %v772 = vmul.f32 %v756, %v628
      %v773 = vmul.f32 %v757, %v629
      %v774 = vmul.f32 %v758, %v630
      %v775 = vmul.f32 %v759, %v631
      %v776 = vmul.f32 %v760, %v632
      %v777 = vmul.f32 %v761, %v633
      %v778 = vsub.f32 0.0, %v570
      %v779 = vsub.f32 0.0, %v571
      %v780 = vsub.f32 0.0, %v572
      %v781 = vsub.f32 0.0, %v573
      %v782 = vsub.f32 0.0, %v574
      %v783 = vsub.f32 0.0, %v575
      %v784 = vsub.f32 0.0, %v576
      %v785 = vsub.f32 0.0, %v577
      %v786 = vsub.f32 0.0, %v578
      %v787 = vsub.f32 0.0, %v579
      %v788 = vsub.f32 0.0, %v580
      %v789 = vsub.f32 0.0, %v581
      %v790 = vsub.f32 0.0, %v582
      %v791 = vsub.f32 0.0, %v583
      %v792 = vsub.f32 0.0, %v584
      %v793 = vsub.f32 0.0, %v585
      %v794 = vmul.f32 %v778, %v570
      %v795 = vmul.f32 %v779, %v571
      %v796 = vmul.f32 %v780, %v572
      %v797 = vmul.f32 %v781, %v573
      %v798 = vmul.f32 %v782, %v574
      %v799 = vmul.f32 %v783, %v575
      %v800 = vmul.f32 %v784, %v576
      %v801 = vmul.f32 %v785, %v577
      %v802 = vmul.f32 %v786, %v578
      %v803 = vmul.f32 %v787, %v579
      %v804 = vmul.f32 %v788, %v580
      %v805 = vmul.f32 %v789, %v581
      %v806 = vmul.f32 %v790, %v582
      %v807 = vmul.f32 %v791, %v583
      %v808 = vmul.f32 %v792, %v584
      %v809 = vmul.f32 %v793, %v585
      %v810 = vmul.f32 %v794, 1.442695
      %v811 = vpow.pop %v810
      %v812 = vmul.f32 %v795, 1.442695
      %v813 = vpow.pop %v812
      %v814 = vmul.f32 %v796, 1.442695
      %v815 = vpow.pop %v814
      %v816 = vmul.f32 %v797, 1.442695
      %v817 = vpow.pop %v816
      %v818 = vmul.f32 %v798, 1.442695
      %v819 = vpow.pop %v818
      %v820 = vmul.f32 %v799, 1.442695
      %v821 = vpow.pop %v820
      %v822 = vmul.f32 %v800, 1.442695
      %v823 = vpow.pop %v822
      %v824 = vmul.f32 %v801, 1.442695
      %v825 = vpow.pop %v824
      %v826 = vmul.f32 %v802, 1.442695
      %v827 = vpow.pop %v826
      %v828 = vmul.f32 %v803, 1.442695
      %v829 = vpow.pop %v828
      %v830 = vmul.f32 %v804, 1.442695
      %v831 = vpow.pop %v830
      %v832 = vmul.f32 %v805, 1.442695
      %v833 = vpow.pop %v832
      %v834 = vmul.f32 %v806, 1.442695
      %v835 = vpow.pop %v834
      %v836 = vmul.f32 %v807, 1.442695
      %v837 = vpow.pop %v836
      %v838 = vmul.f32 %v808, 1.442695
      %v839 = vpow.pop %v838
      %v840 = vmul.f32 %v809, 1.442695
      %v841 = vpow.pop %v840
      %v842 = vmul.f32 %v762, %v811
      %v843 = vmul.f32 %v763, %v813
      %v844 = vmul.f32 %v764, %v815
      %v845 = vmul.f32 %v765, %v817
      %v846 = vmul.f32 %v766, %v819
      %v847 = vmul.f32 %v767, %v821
      %v848 = vmul.f32 %v768, %v823
      %v849 = vmul.f32 %v769, %v825
      %v850 = vmul.f32 %v770, %v827
      %v851 = vmul.f32 %v771, %v829
      %v852 = vmul.f32 %v772, %v831
      %v853 = vmul.f32 %v773, %v833
      %v854 = vmul.f32 %v774, %v835
      %v855 = vmul.f32 %v775, %v837
      %v856 = vmul.f32 %v776, %v839
      %v857 = vmul.f32 %v777, %v841
      %v858 = vsub.f32 1.0, %v842
      %v859 = vsub.f32 1.0, %v843
      %v860 = vsub.f32 1.0, %v844
      %v861 = vsub.f32 1.0, %v845
      %v862 = vsub.f32 1.0, %v846
      %v863 = vsub.f32 1.0, %v847
      %v864 = vsub.f32 1.0, %v848
      %v865 = vsub.f32 1.0, %v849
      %v866 = vsub.f32 1.0, %v850
      %v867 = vsub.f32 1.0, %v851
      %v868 = vsub.f32 1.0, %v852
      %v869 = vsub.f32 1.0, %v853
      %v870 = vsub.f32 1.0, %v854
      %v871 = vsub.f32 1.0, %v855
      %v872 = vsub.f32 1.0, %v856
      %v873 = vsub.f32 1.0, %v857
      %v874 = vmul.f32 %v554, %v858
      %v875 = vmul.f32 %v555, %v859
      %v876 = vmul.f32 %v556, %v860
      %v877 = vmul.f32 %v557, %v861
      %v878 = vmul.f32 %v558, %v862
      %v879 = vmul.f32 %v559, %v863
      %v880 = vmul.f32 %v560, %v864
      %v881 = vmul.f32 %v561, %v865
      %v882 = vmul.f32 %v562, %v866
      %v883 = vmul.f32 %v563, %v867
      %v884 = vmul.f32 %v564, %v868
      %v885 = vmul.f32 %v565, %v869
      %v886 = vmul.f32 %v566, %v870
      %v887 = vmul.f32 %v567, %v871
      %v888 = vmul.f32 %v568, %v872
      %v889 = vmul.f32 %v569, %v873
      %v890 = vadd.f32 %v874, 1.0
      %v891 = vadd.f32 %v875, 1.0
      %v892 = vadd.f32 %v876, 1.0
      %v893 = vadd.f32 %v877, 1.0
      %v894 = vadd.f32 %v878, 1.0
      %v895 = vadd.f32 %v879, 1.0
      %v896 = vadd.f32 %v880, 1.0
      %v897 = vadd.f32 %v881, 1.0
      %v898 = vadd.f32 %v882, 1.0
      %v899 = vadd.f32 %v883, 1.0
      %v900 = vadd.f32 %v884, 1.0
      %v901 = vadd.f32 %v885, 1.0
      %v902 = vadd.f32 %v886, 1.0
      %v903 = vadd.f32 %v887, 1.0
      %v904 = vadd.f32 %v888, 1.0
      %v905 = vadd.f32 %v889, 1.0
      %v906 = vmul.f32 %v506, %v890
      %v907 = vmul.f32 %v507, %v891
      %v908 = vmul.f32 %v508, %v892
      %v909 = vmul.f32 %v509, %v893
      %v910 = vmul.f32 %v510, %v894
      %v911 = vmul.f32 %v511, %v895
      %v912 = vmul.f32 %v512, %v896
      %v913 = vmul.f32 %v513, %v897
      %v914 = vmul.f32 %v514, %v898
      %v915 = vmul.f32 %v515, %v899
      %v916 = vmul.f32 %v516, %v900
      %v917 = vmul.f32 %v517, %v901
      %v918 = vmul.f32 %v518, %v902
      %v919 = vmul.f32 %v519, %v903
      %v920 = vmul.f32 %v520, %v904
      %v921 = vmul.f32 %v521, %v905
      %vm922 = vcmask 523264
      %923 = vst.msk [vmem:[%s175] sm:$0xff] %vm922, %v906
      %924 = vst.msk [vmem:[%s175 + $0x8] sm:$0xff] %vm922, %v907
      %925 = vst.msk [vmem:[%s175 + $0x10] sm:$0xff] %vm922, %v908
      %926 = vst.msk [vmem:[%s175 + $0x18] sm:$0xff] %vm922, %v909
      %927 = vst.msk [vmem:[%s175 + $0x20] sm:$0xff] %vm922, %v910
      %928 = vst.msk [vmem:[%s175 + $0x28] sm:$0xff] %vm922, %v911
      %929 = vst.msk [vmem:[%s175 + $0x30] sm:$0xff] %vm922, %v912
      %930 = vst.msk [vmem:[%s175 + $0x38] sm:$0xff] %vm922, %v913
      %931 = vst.msk [vmem:[%s175 + $0x40] sm:$0xff] %vm922, %v914
      %932 = vst.msk [vmem:[%s175 + $0x48] sm:$0xff] %vm922, %v915
      %933 = vst.msk [vmem:[%s175 + $0x50] sm:$0xff] %vm922, %v916
      %934 = vst.msk [vmem:[%s175 + $0x58] sm:$0xff] %vm922, %v917
      %935 = vst.msk [vmem:[%s175 + $0x60] sm:$0xff] %vm922, %v918
      %936 = vst.msk [vmem:[%s175 + $0x68] sm:$0xff] %vm922, %v919
      %937 = vst.msk [vmem:[%s175 + $0x70] sm:$0xff] %vm922, %v920
      %938 = vst.msk [vmem:[%s175 + $0x78] sm:$0xff] %vm922, %v921
      %s939 = smul.u32 16, %s14
      %p940 = scmp.lt.s32.totalorder %s939, 31
      %s941 = scalar_select %p940, %s939, 31
      %s942 = smul.addr %s941, 8
      %s943 = scalar_lea.vmem %s3, %s942
      // Predicated region
      $region33: #{_lambda_.4} parent=31 // pred_check
        %p944 = pneg %p100
      $region34: #{_lambda_.4} parent=31 // pred_check_branch
        %946 = sbr.rel (%p944) target = $region36
      $region35: #{_lambda_.4} parent=31 // pred_region
        %s947 = smul.u32 16, %s14
      $region36: #{_lambda_.4} parent=31 // pred_fallthru
        _
    $region32: #{_lambda_.4} parent=5 // pred_fallthru
      _
    %p948 = scmp.le.s32.totalorder 2, %s9
    // Predicated region
    $region37: #{_lambda_.4} parent=5 // pred_check
      %p949 = pneg %p948
    $region38: #{_lambda_.4} parent=5 // pred_check_branch
      %951 = sbr.rel (%p949) target = $region40
    $region39: #{_lambda_.4} parent=5 // pred_region
      %s952 = ssub.s32 %s9, 2
      // Predicated region
      $region41: #{_lambda_.4} parent=39 // pred_check
        %p953 = pneg %p106
      $region42: #{_lambda_.4} parent=39 // pred_check_branch
        %955 = sbr.rel (%p953) target = $region44
      $region43: #{_lambda_.4} parent=39 // pred_region
        %s956 = smul.u32 16, %s15
        %p957 = scmp.lt.s32.totalorder %s956, 31
        %s958 = scalar_select %p957, %s956, 31
        %s959 = smul.addr %s958, 8
        %s960 = scalar_lea.vmem %s3, %s959
      $region44: #{_lambda_.4} parent=39 // pred_fallthru
        _
    $region40: #{_lambda_.4} parent=5 // pred_fallthru
      _
  $region6: #{_lambda_.4} parent=0 // loop_footer
    %s13 = sadd.s32 1, %s9
  $region7: #{_lambda_.4} parent=0 // loop_footer_branch
    %8 = sbr.rel target = $region3
  $region8: #{_lambda_.4} parent=0 // loop_exit
    _

// kernel: _lambda_.5
$region0: #{_lambda_.5}
  #allocation0 [shape = 'u32[]', space=smem, size = 0x4, offset = 0x4, fixed_abs, tag = 'smem constant byte address 0x4 - core index']
  #allocation1 [shape = 'u32[144,128]{1,0:T(1,128)}', space=vmem, size = 0x12000, scoped, tag = 'internal scratch']
  %s0 = inlined_call_operand.vmem [shape: bf16[64,256], index: 0, kind: input, shape index: {}]
  %s1 = inlined_call_operand.vmem [shape: bf16[256,64], index: 1, kind: input, shape index: {}]
  %s2 = inlined_call_operand.vmem [shape: f32[1,64], index: 2, kind: input, shape index: {}]
  %s3 = inlined_call_operand.hbm [shape: f32[64,64], index: 3, kind: output, shape index: {}]
  %s4 = sld [smem:[#allocation0]]
  $region45: #{_lambda_.5} parent=0
    _
  %s6 = ssub.s32 1, %s4
  %s7 = scalar_select 0, %s6, %s4
  $region1: #{_lambda_.5} parent=0
    #allocation2 [shape = 'u8[32768]{0}', space=vmem, size = 0x8000, scoped, tag = 'output window, operand 0']
    #allocation3 [shape = 's32[2]{0}', space=sflag, size = 0x8, scoped, tag = 'scoped memory for _lambda_.5']
    %8 = vsyncpa [#allocation3], 0
    %s9 = scalar_lea.sflag [#allocation3], 1
    %10 = vsyncpa %s9, 0
    loop: start=0, step=1, limit=4
    $region2: #{_lambda_.5} parent=1 // loop_pre_header
      _
    $region3: #{_lambda_.5} parent=1 // loop_header
      %s12 = sphi 0, %s16
      %p13 = scmp.ge.s32.totalorder %s12, 4
      %s22 = sphi 0, %s24
      %s25 = sphi 0, %s22
      %s26 = sphi 0, %s25
      %s42 = sphi 0, %s26
      %s46 = sphi 0, %s46
      %s48 = sphi 0, %s46
      %s49 = sphi 0, %s48
      %s63 = sphi 0, %s49
      %s67 = sphi 0, %s67
      %s69 = sphi 0, %s67
      %s70 = sphi 0, %s69
      %s84 = sphi 0, %s70
      %s90 = sphi 0, %s92
      %s93 = sphi 0, %s90
      %s94 = sphi 0, %s93
      %s110 = sphi 0, %s94
    $region4: #{_lambda_.5} parent=1 // loop_header_branch
      %15 = sbr.rel (%p13) target = $region8
    $region5: #{_lambda_.5} parent=1 // loop_body
      %s17 = ssub.s32 %s12, 1
      %s18 = ssub.s32 %s12, 2
      %s19 = sadd.s32 %s12, 1
      %s20 = ssub.s32 %s12, %s19
      %p21 = scmp.eq.s32.totalorder %s20, 0
      %s23 = sadd.s32 %s22, 1
      %s24 = scalar_select %p21, %s22, %s23
      %p27 = pneg %p21
      %p28 = scmp.eq.s32.totalorder %s12, 1
      %p29 = por %p27, %p28
      %p30 = scmp.ne.s32.totalorder %s22, %s25
      %p31 = scmp.eq.s32.totalorder %s12, 0
      %p32 = por %p30, %p31
      %p33 = scmp.ne.s32.totalorder %s22, %s25
      %p34 = scmp.eq.s32.totalorder %s17, 1
      %p35 = por %p33, %p34
      %p36 = scmp.ne.s32.totalorder %s25, %s26
      %p37 = scmp.eq.s32.totalorder %s17, 0
      %p38 = por %p36, %p37
      %p39 = scmp.ne.s32.totalorder %s25, %s26
      %p40 = scmp.eq.s32.totalorder %s18, 1
      %p41 = por %p39, %p40
      %p43 = scmp.ne.s32.totalorder %s26, %s42
      %p44 = scmp.eq.s32.totalorder %s18, 0
      %p45 = por %p43, %p44
      %s47 = sadd.s32 %s46, 1
      %p50 = scmp.eq.s32.totalorder %s12, 1
      %p51 = scmp.ne.s32.totalorder %s46, %s48
      %p52 = scmp.eq.s32.totalorder %s12, 0
      %p53 = por %p51, %p52
      %p54 = scmp.ne.s32.totalorder %s46, %s48
      %p55 = scmp.eq.s32.totalorder %s17, 1
      %p56 = por %p54, %p55
      %p57 = scmp.ne.s32.totalorder %s48, %s49
      %p58 = scmp.eq.s32.totalorder %s17, 0
      %p59 = por %p57, %p58
      %p60 = scmp.ne.s32.totalorder %s48, %s49
      %p61 = scmp.eq.s32.totalorder %s18, 1
      %p62 = por %p60, %p61
      %p64 = scmp.ne.s32.totalorder %s49, %s63
      %p65 = scmp.eq.s32.totalorder %s18, 0
      %p66 = por %p64, %p65
      %s68 = sadd.s32 %s67, 1
      %p71 = scmp.eq.s32.totalorder %s12, 1
      %p72 = scmp.ne.s32.totalorder %s67, %s69
      %p73 = scmp.eq.s32.totalorder %s12, 0
      %p74 = por %p72, %p73
      %p75 = scmp.ne.s32.totalorder %s67, %s69
      %p76 = scmp.eq.s32.totalorder %s17, 1
      %p77 = por %p75, %p76
      %p78 = scmp.ne.s32.totalorder %s69, %s70
      %p79 = scmp.eq.s32.totalorder %s17, 0
      %p80 = por %p78, %p79
      %p81 = scmp.ne.s32.totalorder %s69, %s70
      %p82 = scmp.eq.s32.totalorder %s18, 1
      %p83 = por %p81, %p82
      %p85 = scmp.ne.s32.totalorder %s70, %s84
      %p86 = scmp.eq.s32.totalorder %s18, 0
      %p87 = por %p85, %p86
      %s88 = ssub.s32 %s12, %s19
      %p89 = scmp.eq.s32.totalorder %s88, 0
      %s91 = sadd.s32 %s90, 1
      %s92 = scalar_select %p89, %s90, %s91
      %p95 = pneg %p89
      %p96 = scmp.eq.s32.totalorder %s12, 1
      %p97 = por %p95, %p96
      %p98 = scmp.ne.s32.totalorder %s90, %s93
      %p99 = scmp.eq.s32.totalorder %s12, 0
      %p100 = por %p98, %p99
      %p101 = scmp.ne.s32.totalorder %s90, %s93
      %p102 = scmp.eq.s32.totalorder %s17, 1
      %p103 = por %p101, %p102
      %p104 = scmp.ne.s32.totalorder %s93, %s94
      %p105 = scmp.eq.s32.totalorder %s17, 0
      %p106 = por %p104, %p105
      %p107 = scmp.ne.s32.totalorder %s93, %s94
      %p108 = scmp.eq.s32.totalorder %s18, 1
      %p109 = por %p107, %p108
      %p111 = scmp.ne.s32.totalorder %s94, %s110
      %p112 = scmp.eq.s32.totalorder %s18, 0
      %p113 = por %p111, %p112
      %p114 = scmp.le.s32.totalorder 1, %s12
      %p115 = scmp.lt.s32.totalorder %s12, 3
      %p116 = pnand %p114, %p115
      %p117 = pneg %p116
      // Predicated region
      $region9: #{_lambda_.5} parent=5 // pred_check
        _
      $region10: #{_lambda_.5} parent=5 // pred_check_branch
        %119 = sbr.rel (%p116) target = $region12
      $region11: #{_lambda_.5} parent=5 // pred_region
        %s120 = ssub.s32 %s12, 1
        // Predicated region
        $region13: #{_lambda_.5} parent=11 // pred_check
          %p121 = pneg %p59
        $region14: #{_lambda_.5} parent=11 // pred_check_branch
          %123 = sbr.rel (%p121) target = $region16
        $region15: #{_lambda_.5} parent=11 // pred_region
          _
        $region16: #{_lambda_.5} parent=11 // pred_fallthru
          _
        // Predicated region
        $region17: #{_lambda_.5} parent=11 // pred_check
          %p124 = pneg %p80
        $region18: #{_lambda_.5} parent=11 // pred_check_branch
          %126 = sbr.rel (%p124) target = $region20
        $region19: #{_lambda_.5} parent=11 // pred_region
          _
        $region20: #{_lambda_.5} parent=11 // pred_fallthru
          _
      $region12: #{_lambda_.5} parent=5 // pred_fallthru
        _
      %p127 = scmp.lt.s32.totalorder %s12, 2
      // Predicated region
      $region21: #{_lambda_.5} parent=5 // pred_check
        %p128 = pneg %p127
      $region22: #{_lambda_.5} parent=5 // pred_check_branch
        %130 = sbr.rel (%p128) target = $region24
      $region23: #{_lambda_.5} parent=5 // pred_region
        // Predicated region
        $region25: #{_lambda_.5} parent=23 // pred_check
          %p131 = pneg %p32
        $region26: #{_lambda_.5} parent=23 // pred_check_branch
          %133 = sbr.rel (%p131) target = $region28
        $region27: #{_lambda_.5} parent=23 // pred_region
          %s134 = smul.u32 4, %s12
          %p135 = scmp.lt.s32.totalorder %s134, 7
          %s136 = scalar_select %p135, %s134, 7
          %s137 = smul.addr %s136, 2
          %s138 = smul.addr %s137, 4
          %s139 = scalar_lea.vmem %s0, %s138
          %s140 = smul.u32 4, %s12
        $region28: #{_lambda_.5} parent=23 // pred_fallthru
          _
      $region24: #{_lambda_.5} parent=5 // pred_fallthru
        _
      %p141 = scmp.le.s32.totalorder 1, %s12
      %p142 = scmp.lt.s32.totalorder %s12, 3
      %p143 = pnand %p141, %p142
      %p144 = pneg %p143
      // Predicated region
      $region29: #{_lambda_.5} parent=5 // pred_check
        _
      $region30: #{_lambda_.5} parent=5 // pred_check_branch
        %146 = sbr.rel (%p143) target = $region32
      $region31: #{_lambda_.5} parent=5 // pred_region
        %s147 = ssub.s32 %s12, 1
        %s148 = smul.u32 4, %s17
        %p149 = scmp.lt.s32.totalorder %s148, 7
        %s150 = scalar_select %p149, %s148, 7
        %s151 = smul.addr %s150, 2
        %s152 = smul.addr %s151, 4
        %s153 = scalar_lea.vmem %s0, %s152
        %p154 = pneg %p38
        %p155 = pneg %p35
        %p156 = pneg %p59
        %p157 = pneg %p56
        %p158 = pneg %p80
        %p159 = pneg %p77
        %p160 = pneg %p106
        %p161 = pneg %p103
        %s162 = sand.u32 %s93, 1
        %s163 = scalar_lea.sflag [#allocation3], %s162
        %s164 = sand.u32 %s93, 1
        %s165 = smul.addr %s164, 32
        %s166 = scalar_lea.vmem [#allocation2], %s165
        %s167 = smul.u32 4, %s17
        %p168 = scmp.lt.s32.totalorder %s167, 7
        %s169 = scalar_select %p168, %s167, 7
        %s170 = smul.addr %s169, 2
        %s171 = smul.addr %s170, 4
        %s172 = scalar_lea.vmem %s0, %s171
        %s173 = smul.u32 4, %s17
        %s174 = smul.u32 4, %s17
        %v176 = vld [vmem:[%s172] sm:$0xff]
        %v177 = vld [vmem:[%s172 + $0x8] sm:$0xff]
        %v178 = vld [vmem:[%s172 + $0x10] sm:$0xff]
        %v179 = vld [vmem:[%s172 + $0x18] sm:$0xff]
        %v180 = vld [vmem:[%s1] sm:$0xf]
        %v181 = vld [vmem:[%s1 + $0x4] sm:$0xf]
        %v182 = vld [vmem:[%s1 + $0x8] sm:$0xf]
        %v183 = vld [vmem:[%s1 + $0xc] sm:$0xf]
        %v184 = vld [vmem:[%s1 + $0x10] sm:$0xf]
        %v185 = vld [vmem:[%s1 + $0x14] sm:$0xf]
        %v186 = vld [vmem:[%s1 + $0x18] sm:$0xf]
        %v187 = vld [vmem:[%s1 + $0x1c] sm:$0xf]
        %v188 = vld [vmem:[%s1 + $0x20] sm:$0xf]
        %v189 = vld [vmem:[%s1 + $0x24] sm:$0xf]
        %v190 = vld [vmem:[%s1 + $0x28] sm:$0xf]
        %v191 = vld [vmem:[%s1 + $0x2c] sm:$0xf]
        %v192 = vld [vmem:[%s1 + $0x30] sm:$0xf]
        %v193 = vld [vmem:[%s1 + $0x34] sm:$0xf]
        %v194 = vld [vmem:[%s1 + $0x38] sm:$0xf]
        %v195 = vld [vmem:[%s1 + $0x3c] sm:$0xf]
        %v196 = vld [vmem:[%s1 + $0x40] sm:$0xf]
        %v197 = vld [vmem:[%s1 + $0x44] sm:$0xf]
        %v198 = vld [vmem:[%s1 + $0x48] sm:$0xf]
        %v199 = vld [vmem:[%s1 + $0x4c] sm:$0xf]
        %v200 = vld [vmem:[%s1 + $0x50] sm:$0xf]
        %v201 = vld [vmem:[%s1 + $0x54] sm:$0xf]
        %v202 = vld [vmem:[%s1 + $0x58] sm:$0xf]
        %v203 = vld [vmem:[%s1 + $0x5c] sm:$0xf]
        %v204 = vld [vmem:[%s1 + $0x60] sm:$0xf]
        %v205 = vld [vmem:[%s1 + $0x64] sm:$0xf]
        %v206 = vld [vmem:[%s1 + $0x68] sm:$0xf]
        %v207 = vld [vmem:[%s1 + $0x6c] sm:$0xf]
        %v208 = vld [vmem:[%s1 + $0x70] sm:$0xf]
        %v209 = vld [vmem:[%s1 + $0x74] sm:$0xf]
        %v210 = vld [vmem:[%s1 + $0x78] sm:$0xf]
        %v211 = vld [vmem:[%s1 + $0x7c] sm:$0xf]
        %v212 = vld [vmem:[%s2] sm:$0x1]
        %v214 = vlaneseq
        %v215 = vshrl.u32 %v214, 7
        %v216 = vsub.s32 0, %v215
        %v217 = vrot.slane %v212, %v216
        %v223 = vunpack.c.l.b16 %v176
        %v224 = vunpack.c.h.b16 %v176
        %v225 = vunpack.c.l.b16 %v177
        %v226 = vunpack.c.h.b16 %v177
        %v227 = vunpack.c.l.b16 %v178
        %v228 = vunpack.c.h.b16 %v178
        %v229 = vunpack.c.l.b16 %v179
        %v230 = vunpack.c.h.b16 %v179
        %v231 = vpack.c.b16 %v225, %v223
        %v232 = vpack.c.b16 %v226, %v224
        %v233 = vpack.c.b16 %v229, %v227
        %v234 = vpack.c.b16 %v230, %v228
        %v271 = vunpack.c.l.b16 %v180
        %v272 = vunpack.c.l.b16 %v181
        %v273 = vunpack.c.l.b16 %v182
        %v274 = vunpack.c.l.b16 %v183
        %v275 = vunpack.c.l.b16 %v184
        %v276 = vunpack.c.l.b16 %v185
        %v277 = vunpack.c.l.b16 %v186
        %v278 = vunpack.c.l.b16 %v187
        %v279 = vunpack.c.l.b16 %v188
        %v280 = vunpack.c.l.b16 %v189
        %v281 = vunpack.c.l.b16 %v190
        %v282 = vunpack.c.l.b16 %v191
        %v283 = vunpack.c.l.b16 %v192
        %v284 = vunpack.c.l.b16 %v193
        %v285 = vunpack.c.l.b16 %v194
        %v286 = vunpack.c.l.b16 %v195
        %v287 = vunpack.c.l.b16 %v196
        %v288 = vunpack.c.l.b16 %v197
        %v289 = vunpack.c.l.b16 %v198
        %v290 = vunpack.c.l.b16 %v199
        %v291 = vunpack.c.l.b16 %v200
        %v292 = vunpack.c.l.b16 %v201
        %v293 = vunpack.c.l.b16 %v202
        %v294 = vunpack.c.l.b16 %v203
        %v295 = vunpack.c.l.b16 %v204
        %v296 = vunpack.c.l.b16 %v205
        %v297 = vunpack.c.l.b16 %v206
        %v298 = vunpack.c.l.b16 %v207
        %v299 = vunpack.c.l.b16 %v208
        %v300 = vunpack.c.l.b16 %v209
        %v301 = vunpack.c.l.b16 %v210
        %v302 = vunpack.c.l.b16 %v211
        %v303 = vpack.c.b16 %v272, %v271
        %v304 = vpack.c.b16 %v274, %v273
        %v305 = vpack.c.b16 %v276, %v275
        %v306 = vpack.c.b16 %v278, %v277
        %v307 = vpack.c.b16 %v280, %v279
        %v308 = vpack.c.b16 %v282, %v281
        %v309 = vpack.c.b16 %v284, %v283
        %v310 = vpack.c.b16 %v286, %v285
        %v311 = vpack.c.b16 %v288, %v287
        %v312 = vpack.c.b16 %v290, %v289
        %v313 = vpack.c.b16 %v292, %v291
        %v314 = vpack.c.b16 %v294, %v293
        %v315 = vpack.c.b16 %v296, %v295
        %v316 = vpack.c.b16 %v298, %v297
        %v317 = vpack.c.b16 %v300, %v299
        %v318 = vpack.c.b16 %v302, %v301
        %335 = vmatprep.subr.bf16.mxu0 0
        %336 = vmatpush1.bf16.msra.mxu0 %v303
        %337 = vmatprep.subr.bf16.mxu0 0
        %338 = vmatpush1.bf16.msra.mxu0 %v304
        %339 = vmatprep.subr.bf16.mxu0 0
        %340 = vmatpush1.bf16.msra.mxu0 %v305
        %341 = vmatprep.subr.bf16.mxu0 0
        %342 = vmatpush1.bf16.msra.mxu0 %v306
        %343 = vmatprep.subr.bf16.mxu0 0
        %344 = vmatpush1.bf16.msra.mxu0 %v307
        %345 = vmatprep.subr.bf16.mxu0 0
        %346 = vmatpush1.bf16.msra.mxu0 %v308
        %347 = vmatprep.subr.bf16.mxu0 0
        %348 = vmatpush1.bf16.msra.mxu0 %v309
        %349 = vmatprep.subr.bf16.mxu0 0
        %350 = vmatpush1.bf16.msra.mxu0 %v310
        %351 = vmatprep.subr.bf16.mxu0 0
        %352 = vmatpush1.bf16.msra.mxu0 %v311
        %353 = vmatprep.subr.bf16.mxu0 0
        %354 = vmatpush1.bf16.msra.mxu0 %v312
        %355 = vmatprep.subr.bf16.mxu0 0
        %356 = vmatpush1.bf16.msra.mxu0 %v313
        %357 = vmatprep.subr.bf16.mxu0 0
        %358 = vmatpush1.bf16.msra.mxu0 %v314
        %359 = vmatprep.subr.bf16.mxu0 0
        %360 = vmatpush1.bf16.msra.mxu0 %v315
        %361 = vmatprep.subr.bf16.mxu0 0
        %362 = vmatpush1.bf16.msra.mxu0 %v316
        %363 = vmatprep.subr.bf16.mxu0 0
        %364 = vmatpush1.bf16.msra.mxu0 %v317
        %365 = vmatprep.subr.bf16.mxu0 0
        %366 = vmatpush1.bf16.msra.mxu0 %v318
        %367 = vmatprep.mubr.bf16.mxu0 %v232
        %368 = vmatmul.mubr.bf16.gmra.mrb[0].mxu0 %v231
        %v369 = vpop.f32.mrb[0].mxu0
        %v370 = vadd.f32 %v217, %v369
        %v371 = vpop.f32.mrb[0].mxu0
        %v372 = vpop.f32.mrb[0].mxu0
        %v373 = vadd.f32 %v217, %v372
        %v374 = vpop.f32.mrb[0].mxu0
        %375 = vmatprep.mubr.bf16.mxu0 %v234
        %376 = vmatmul.mubr.bf16.gmra.mrb[0].mxu0 %v233
        %v377 = vpop.f32.mrb[0].mxu0
        %v378 = vadd.f32 %v217, %v377
        %v379 = vpop.f32.mrb[0].mxu0
        %v380 = vpop.f32.mrb[0].mxu0
        %v381 = vadd.f32 %v217, %v380
        %v382 = vpop.f32.mrb[0].mxu0
        %383 = vdwg.mxu0
        %v384 = vmul.f32 %v370, 0.5
        %v385 = vmul.f32 %v373, 0.5
        %v386 = vmul.f32 %v378, 0.5
        %v387 = vmul.f32 %v381, 0.5
        %v388 = vmul.f32 %v370, 0.70710677
        %v389 = vmul.f32 %v373, 0.70710677
        %v390 = vmul.f32 %v378, 0.70710677
        %v391 = vmul.f32 %v381, 0.70710677
        %vm392 = vcmp.ge.f32.partialorder %v388, 0.0
        %vm393 = vcmp.ge.f32.partialorder %v389, 0.0
        %vm394 = vcmp.ge.f32.partialorder %v390, 0.0
        %vm395 = vcmp.ge.f32.partialorder %v391, 0.0
        %v396 = vsel %vm392, 1.0, -1.0
        %v397 = vsel %vm393, 1.0, -1.0
        %v398 = vsel %vm394, 1.0, -1.0
        %v399 = vsel %vm395, 1.0, -1.0
        %v400 = vand.u32 2147483647, %v388
        %v401 = vand.u32 2147483647, %v389
        %v402 = vand.u32 2147483647, %v390
        %v403 = vand.u32 2147483647, %v391
        %v404 = vmul.f32 %v400, 0.3275911
        %v405 = vmul.f32 %v401, 0.3275911
        %v406 = vmul.f32 %v402, 0.3275911
        %v407 = vmul.f32 %v403, 0.3275911
        %v408 = vadd.f32 %v404, 1.0
        %v409 = vadd.f32 %v405, 1.0
        %v410 = vadd.f32 %v406, 1.0
        %v411 = vadd.f32 %v407, 1.0
        %v412 = vrcp.pop %v408
        %v413 = vrcp.pop %v409
        %v414 = vrcp.pop %v410
        %v415 = vrcp.pop %v411
        %v416 = vmul.f32 %v412, 1.0614054
        %v417 = vmul.f32 %v413, 1.0614054
        %v418 = vmul.f32 %v414, 1.0614054
        %v419 = vmul.f32 %v415, 1.0614054
        %v420 = vadd.f32 %v416, -1.4531521
        %v421 = vadd.f32 %v417, -1.4531521
        %v422 = vadd.f32 %v418, -1.4531521
        %v423 = vadd.f32 %v419, -1.4531521
        %v424 = vmul.f32 %v420, %v412
        %v425 = vmul.f32 %v421, %v413
        %v426 = vmul.f32 %v422, %v414
        %v427 = vmul.f32 %v423, %v415
        %v428 = vadd.f32 %v424, 1.4214138
        %v429 = vadd.f32 %v425, 1.4214138
        %v430 = vadd.f32 %v426, 1.4214138
        %v431 = vadd.f32 %v427, 1.4214138
        %v432 = vmul.f32 %v428, %v412
        %v433 = vmul.f32 %v429, %v413
        %v434 = vmul.f32 %v430, %v414
        %v435 = vmul.f32 %v431, %v415
        %v436 = vadd.f32 %v432, -0.28449672
        %v437 = vadd.f32 %v433, -0.28449672
        %v438 = vadd.f32 %v434, -0.28449672
        %v439 = vadd.f32 %v435, -0.28449672
        %v440 = vmul.f32 %v436, %v412
        %v441 = vmul.f32 %v437, %v413
        %v442 = vmul.f32 %v438, %v414
        %v443 = vmul.f32 %v439, %v415
        %v444 = vadd.f32 %v440, 0.2548296
        %v445 = vadd.f32 %v441, 0.2548296
        %v446 = vadd.f32 %v442, 0.2548296
        %v447 = vadd.f32 %v443, 0.2548296
        %v448 = vmul.f32 %v444, %v412
        %v449 = vmul.f32 %v445, %v413
        %v450 = vmul.f32 %v446, %v414
        %v451 = vmul.f32 %v447, %v415
        %v452 = vsub.f32 0.0, %v400
        %v453 = vsub.f32 0.0, %v401
        %v454 = vsub.f32 0.0, %v402
        %v455 = vsub.f32 0.0, %v403
        %v456 = vmul.f32 %v452, %v400
        %v457 = vmul.f32 %v453, %v401
        %v458 = vmul.f32 %v454, %v402
        %v459 = vmul.f32 %v455, %v403
        %v460 = vmul.f32 %v456, 1.442695
        %v461 = vpow.pop %v460
        %v462 = vmul.f32 %v457, 1.442695
        %v463 = vpow.pop %v462
        %v464 = vmul.f32 %v458, 1.442695
        %v465 = vpow.pop %v464
        %v466 = vmul.f32 %v459, 1.442695
        %v467 = vpow.pop %v466
        %v468 = vmul.f32 %v448, %v461
        %v469 = vmul.f32 %v449, %v463
        %v470 = vmul.f32 %v450, %v465
        %v471 = vmul.f32 %v451, %v467
        %v472 = vsub.f32 1.0, %v468
        %v473 = vsub.f32 1.0, %v469
        %v474 = vsub.f32 1.0, %v470
        %v475 = vsub.f32 1.0, %v471
        %v476 = vmul.f32 %v396, %v472
        %v477 = vmul.f32 %v397, %v473
        %v478 = vmul.f32 %v398, %v474
        %v479 = vmul.f32 %v399, %v475
        %v480 = vadd.f32 %v476, 1.0
        %v481 = vadd.f32 %v477, 1.0
        %v482 = vadd.f32 %v478, 1.0
        %v483 = vadd.f32 %v479, 1.0
        %v484 = vmul.f32 %v384, %v480
        %v485 = vmul.f32 %v385, %v481
        %v486 = vmul.f32 %v386, %v482
        %v487 = vmul.f32 %v387, %v483
        %vm488 = vcmask 523264
        %489 = vst.msk [vmem:[%s166] sm:$0xff] %vm488, %v484
        %490 = vst.msk [vmem:[%s166 + $0x8] sm:$0xff] %vm488, %v485
        %491 = vst.msk [vmem:[%s166 + $0x10] sm:$0xff] %vm488, %v486
        %492 = vst.msk [vmem:[%s166 + $0x18] sm:$0xff] %vm488, %v487
        %s493 = sand.u32 %s93, 1
        %s494 = scalar_lea.sflag [#allocation3], %s493
        %s495 = sand.u32 %s93, 1
        %s496 = smul.addr %s495, 32
        %s497 = scalar_lea.vmem [#allocation2], %s496
        // Predicated region
        $region33: #{_lambda_.5} parent=31 // pred_check
          %p498 = pneg %p103
        $region34: #{_lambda_.5} parent=31 // pred_check_branch
          %500 = sbr.rel (%p498) target = $region36
        $region35: #{_lambda_.5} parent=31 // pred_region
          %s501 = smul.u32 4, %s17
          %s503 = ssub.s32 512, 512
          %504 = vsyncadd %s494, %s503
          %s505 = smul.addr %s501, 128
          %s506 = scalar_lea.hbm %s3, %s505
          %s507 = sshll.u32 %s497, 4
          %s508 = int_to_ptr.vmem [resolvable:$true] %s507
          %513 = dma.vmem_to_hbm [thread:$0]  %s508, 512, %s506, %s494, 128, 128, 8
        $region36: #{_lambda_.5} parent=31 // pred_fallthru
          _
      $region32: #{_lambda_.5} parent=5 // pred_fallthru
        _
      %p514 = scmp.le.s32.totalorder 2, %s12
      // Predicated region
      $region37: #{_lambda_.5} parent=5 // pred_check
        %p515 = pneg %p514
      $region38: #{_lambda_.5} parent=5 // pred_check_branch
        %517 = sbr.rel (%p515) target = $region40
      $region39: #{_lambda_.5} parent=5 // pred_region
        %s518 = ssub.s32 %s12, 2
        // Predicated region
        $region41: #{_lambda_.5} parent=39 // pred_check
          %p519 = pneg %p109
        $region42: #{_lambda_.5} parent=39 // pred_check_branch
          %521 = sbr.rel (%p519) target = $region44
        $region43: #{_lambda_.5} parent=39 // pred_region
          %s522 = sand.u32 %s94, 1
          %s523 = scalar_lea.sflag [#allocation3], %s522
          %s524 = sand.u32 %s94, 1
          %s525 = smul.addr %s524, 32
          %s526 = scalar_lea.vmem [#allocation2], %s525
          %527 = dma.done %s523, 512
        $region44: #{_lambda_.5} parent=39 // pred_fallthru
          _
      $region40: #{_lambda_.5} parent=5 // pred_fallthru
        _
    $region6: #{_lambda_.5} parent=1 // loop_footer
      %s16 = sadd.s32 1, %s12
    $region7: #{_lambda_.5} parent=1 // loop_footer_branch
      %11 = sbr.rel target = $region3
    $region8: #{_lambda_.5} parent=1 // loop_exit
      _
    %528 = vsyncpa [#allocation3], 1
    %s529 = scalar_lea.sflag [#allocation3], 1
    %530 = vsyncpa %s529, 1

</llo_original>
